<compile_context>
chip_gen: v7x
topology: tpu7x:2x2x1
jax: 0.10.0
libtpu: 0.0.40
codegen_flags: <defaults>
</compile_context>

<pallas_src>
import jax
import jax.numpy as jnp
from jax import lax
from jax.experimental import pallas as pl
from jax.experimental.pallas import tpu as pltpu

EPS = 1e-5
LANE = 128
VMEM_LIMIT = 32 * 1024 * 1024   # explicit scoped-VMEM budget (safe on v5e/v6e/v7x)


def _round_up(x, m):
    return ((x + m - 1) // m) * m


def _pick_row_tile(h, w):
    """Rows per grid step so the (rows*W, C) matmul tile is ~128 rows."""
    th = max(1, min(h, 128 // max(1, w)))
    while h % th:
        th -= 1
    return th


# --------------------------------------------------------------------------
# Kernel A: conv1 as a single im2col matmul (+ folded bias), ReLU, BN1 partials
# --------------------------------------------------------------------------
def _conv1_kernel(p_ref, w_ref, y_ref, s_ref, ss_ref):
    _, th, w, kp = p_ref.shape
    cp = w_ref.shape[1]
    m = th * w
    patches = p_ref[...].reshape(m, kp)                 # layout relabel (W % 16 == 0)
    acc = jnp.dot(patches, w_ref[...],
                  preferred_element_type=jnp.float32)   # MXU, f32 accumulate
    acc = jnp.maximum(acc, 0.0)                         # ReLU (bias folded in matmul)
    s_ref[...] = jnp.sum(acc, axis=0, keepdims=True).reshape(1, 1, 1, cp)
    ss_ref[...] = jnp.sum(acc * acc, axis=0, keepdims=True).reshape(1, 1, 1, cp)
    y_ref[...] = acc.reshape(1, th, w, cp).astype(y_ref.dtype)


# --------------------------------------------------------------------------
# Kernel B: BN1 affine (fused into input staging) -> conv2 -> ReLU -> BN2 partials
# --------------------------------------------------------------------------
def _conv2_kernel(y1_ref, sc1_ref, sh1_ref, w2_ref, b2_ref,
                  y2_ref, s_ref, ss_ref, xs_ref, acc_ref):
    j = pl.program_id(1)
    _, h, w, cp = y1_ref.shape
    th = y2_ref.shape[1]
    cout = y2_ref.shape[3]
    m = th * w

    # Build the dx-compacted, halo-padded, BN1-normalized conv2 input once per
    # image (j == 0):  xs[dx][r, c, :] == padded(BN1(y1))[r, c + dx, :].
    # Hoists the sublane-misaligned dx shift out of the 9-tap loop.
    @pl.when(j == 0)
    def _stage_input():
        yb = (y1_ref[...].astype(jnp.float32) * sc1_ref[...]
              + sh1_ref[...]).astype(xs_ref.dtype)           # (1, h, w, cp)
        xs_ref[...] = jnp.zeros(xs_ref.shape, xs_ref.dtype)  # halo + edge cols = 0
        xs_ref[0:1, 1:h + 1, 1:w, :] = yb[:, :, :w - 1, :]
        xs_ref[1:2, 1:h + 1, :, :] = yb
        xs_ref[2:3, 1:h + 1, :w - 1, :] = yb[:, :, 1:, :]

    # Bounded per-tile accumulator in an f32 VMEM scratch (bias-initialized);
    # += dot keeps the 9-tap chain MRB/MRF friendly.
    acc_ref[...] = jnp.broadcast_to(b2_ref[...], (m, cp))
    r0 = pl.multiple_of(j * th, th)
    for dy in range(3):
        for dx in range(3):
            patch = xs_ref[dx:dx + 1, pl.ds(r0 + dy, th), :, :].reshape(m, cp)
            acc_ref[...] += jnp.dot(patch, w2_ref[dy * 3 + dx],
                                    preferred_element_type=jnp.float32)

    acc = jnp.maximum(acc_ref[...], 0.0)                      # ReLU
    s_ref[...] = jnp.sum(acc, axis=0, keepdims=True).reshape(1, 1, 1, cp)
    ss_ref[...] = jnp.sum(acc * acc, axis=0, keepdims=True).reshape(1, 1, 1, cp)
    # Slim (Cout-lane) f32 pre-BN2 output: far less HBM writeback than padded f32.
    y2_ref[...] = acc.reshape(1, th, w, cp)[..., :cout]


# --------------------------------------------------------------------------
# Kernel C: BN2 normalize (pass 2), slim NHWC f32 output
# --------------------------------------------------------------------------
def _bn_apply_kernel(y_ref, sc_ref, sh_ref, o_ref):
    o_ref[...] = y_ref[...] * sc_ref[...] + sh_ref[...]


# --------------------------------------------------------------------------
# Wrapper
# --------------------------------------------------------------------------
def unet_conv_block(x_nchw, params):
    """Forward of UNetConvBlock(in, out, padding=True, batch_norm=True) (train mode).
    x_nchw: (N, Cin, H, W) f32 -> (N, Cout, H, W) f32."""
    w1, b1, g1, be1, w2, b2, g2, be2 = params
    n, cin, h, w = x_nchw.shape
    cout = w1.shape[0]
    cp = _round_up(cout, LANE)
    k1 = 9 * cin + 1                       # +1: constant-one lane carrying the bias
    k1p = _round_up(k1, LANE)
    th = _pick_row_tile(h, w)
    nj = h // th
    grid = (n, nj)
    cnt = n * h * w

    # ---- conv1 input: im2col patches (wrapper XLA on the small raw input) ----
    x = jnp.transpose(x_nchw, (0, 2, 3, 1)).astype(jnp.float32)        # NHWC
    xp = jnp.pad(x, ((0, 0), (1, 1), (1, 1), (0, 0)))
    taps = [xp[:, dy:dy + h, dx:dx + w, :] for dy in range(3) for dx in range(3)]
    taps.append(jnp.ones((n, h, w, 1), jnp.float32))                   # bias lane
    patches = jnp.concatenate(taps, axis=-1)                           # (n,h,w,k1)
    patches = jnp.pad(patches, ((0, 0), (0, 0), (0, 0), (0, k1p - k1))
                      ).astype(jnp.bfloat16)

    # conv1 weights: (Cout,Cin,3,3) -> (k1p, cp), bias folded as row k1-1.
    w1k = jnp.transpose(w1, (2, 3, 1, 0)).reshape(9 * cin, cout)
    w1k = jnp.concatenate([w1k, b1.reshape(1, cout)], axis=0)
    w1k = jnp.pad(w1k, ((0, k1p - k1), (0, cp - cout))).astype(jnp.bfloat16)

    # ---- pass 1a: conv1 + ReLU + BN1 partial sums ---------------------------
    y1, s1, ss1 = pl.pallas_call(
        _conv1_kernel,
        out_shape=(jax.ShapeDtypeStruct((n, h, w, cp), jnp.bfloat16),
                   jax.ShapeDtypeStruct((n, nj, 1, cp), jnp.float32),
                   jax.ShapeDtypeStruct((n, nj, 1, cp), jnp.float32)),
        grid_spec=pltpu.PrefetchScalarGridSpec(
            num_scalar_prefetch=0, grid=grid,
            in_specs=[pl.BlockSpec((1, th, w, k1p), lambda i, j: (i, j, 0, 0)),
                      pl.BlockSpec((k1p, cp), lambda i, j: (0, 0))],
            out_specs=[pl.BlockSpec((1, th, w, cp), lambda i, j: (i, j, 0, 0)),
                       pl.BlockSpec((1, 1, 1, cp), lambda i, j: (i, j, 0, 0)),
                       pl.BlockSpec((1, 1, 1, cp), lambda i, j: (i, j, 0, 0))]),
        compiler_params=pltpu.CompilerParams(
            dimension_semantics=("parallel", "parallel"),
            vmem_limit_bytes=VMEM_LIMIT),
    )(patches, w1k)

    # ---- BN1 statistics (tiny per-channel XLA reduction, f32) ---------------
    # NOTE: sum / sum-of-squares (var = E[x^2] - mean^2) per the review's pass-1
    # design; fine in f32 at these magnitudes (post-ReLU activations, O(1-10)).
    sum1 = jnp.sum(s1.reshape(-1, cp)[:, :cout], axis=0)
    sumsq1 = jnp.sum(ss1.reshape(-1, cp)[:, :cout], axis=0)
    mean1 = sum1 / cnt
    var1 = jnp.maximum(sumsq1 / cnt - mean1 * mean1, 0.0)
    scale1 = g1 * lax.rsqrt(var1 + EPS)
    shift1 = be1 - mean1 * scale1
    # Zero-padded lanes keep the padded channels of the staged activation at 0.
    sc1 = jnp.pad(scale1, (0, cp - cout)).reshape(1, cp)
    sh1 = jnp.pad(shift1, (0, cp - cout)).reshape(1, cp)

    # conv2 weights: (Cout,Cout,3,3) -> (9, cp, cp) bf16; bias (1, cp) f32.
    w2k = jnp.transpose(w2, (2, 3, 1, 0))
    w2k = jnp.pad(w2k, ((0, 0), (0, 0), (0, cp - cout), (0, cp - cout)))
    w2k = w2k.reshape(9, cp, cp).astype(jnp.bfloat16)
    b2p = jnp.pad(b2.astype(jnp.float32), (0, cp - cout)).reshape(1, cp)

    # ---- BN1 apply (fused) + conv2 + ReLU + BN2 partial sums ----------------
    y2, s2, ss2 = pl.pallas_call(
        _conv2_kernel,
        out_shape=(jax.ShapeDtypeStruct((n, h, w, cout), jnp.float32),
                   jax.ShapeDtypeStruct((n, nj, 1, cp), jnp.float32),
                   jax.ShapeDtypeStruct((n, nj, 1, cp), jnp.float32)),
        grid_spec=pltpu.PrefetchScalarGridSpec(
            num_scalar_prefetch=0, grid=grid,
            in_specs=[pl.BlockSpec((1, h, w, cp), lambda i, j: (i, 0, 0, 0)),
                      pl.BlockSpec((1, cp), lambda i, j: (0, 0)),
                      pl.BlockSpec((1, cp), lambda i, j: (0, 0)),
                      pl.BlockSpec((9, cp, cp), lambda i, j: (0, 0, 0)),
                      pl.BlockSpec((1, cp), lambda i, j: (0, 0))],
            out_specs=[pl.BlockSpec((1, th, w, cout), lambda i, j: (i, j, 0, 0)),
                       pl.BlockSpec((1, 1, 1, cp), lambda i, j: (i, j, 0, 0)),
                       pl.BlockSpec((1, 1, 1, cp), lambda i, j: (i, j, 0, 0))],
            scratch_shapes=[pltpu.VMEM((3, h + 2, w, cp), jnp.bfloat16),
                            pltpu.VMEM((th * w, cp), jnp.float32)]),
        compiler_params=pltpu.CompilerParams(
            # batch axis "parallel" (v7x 2-TC sharding); the row-tile axis must
            # stay "arbitrary": the per-image staging scratch is built at j==0.
            dimension_semantics=("parallel", "arbitrary"),
            vmem_limit_bytes=VMEM_LIMIT),
    )(y1, sc1, sh1, w2k, b2p)

    # ---- BN2 statistics ------------------------------------------------------
    sum2 = jnp.sum(s2.reshape(-1, cp)[:, :cout], axis=0)
    sumsq2 = jnp.sum(ss2.reshape(-1, cp)[:, :cout], axis=0)
    mean2 = sum2 / cnt
    var2 = jnp.maximum(sumsq2 / cnt - mean2 * mean2, 0.0)
    scale2_vec = g2 * lax.rsqrt(var2 + EPS)
    shift2_vec = be2 - mean2 * scale2_vec
    scale2 = scale2_vec.reshape(1, cout)
    shift2 = shift2_vec.reshape(1, cout)

    # ---- pass 2: BN2 normalize ----------------------------------------------
    out_nhwc = pl.pallas_call(
        _bn_apply_kernel,
        out_shape=jax.ShapeDtypeStruct((n, h, w, cout), jnp.float32),
        grid_spec=pltpu.PrefetchScalarGridSpec(
            num_scalar_prefetch=0, grid=grid,
            in_specs=[pl.BlockSpec((1, th, w, cout), lambda i, j: (i, j, 0, 0)),
                      pl.BlockSpec((1, cout), lambda i, j: (0, 0)),
                      pl.BlockSpec((1, cout), lambda i, j: (0, 0))],
            out_specs=pl.BlockSpec((1, th, w, cout), lambda i, j: (i, j, 0, 0))),
        compiler_params=pltpu.CompilerParams(
            dimension_semantics=("parallel", "parallel"),
            vmem_limit_bytes=VMEM_LIMIT),
    )(y2, scale2, shift2)

    # The module contract is NCHW; keep the (mandatory) layout transpose here.
    # In an NHWC network this transpose would be dropped / fused into the consumer.
    return jnp.transpose(out_nhwc, (0, 3, 1, 2))


# --------------------------------------------------------------------------
# Pure-JAX f32 reference matching the PyTorch forward (train-mode BN)
# --------------------------------------------------------------------------
def reference(x_nchw, params):
    w1, b1, g1, be1, w2, b2, g2, be2 = params

    def conv(x, w, b):
        y = lax.conv_general_dilated(
            x, w, window_strides=(1, 1), padding=((1, 1), (1, 1)),
            dimension_numbers=("NCHW", "OIHW", "NCHW"))
        return y + b[None, :, None, None]

    def bn(x, g, be):
        m = jnp.mean(x, axis=(0, 2, 3), keepdims=True)
        v = jnp.mean((x - m) ** 2, axis=(0, 2, 3), keepdims=True)
        return ((x - m) * lax.rsqrt(v + EPS) * g[None, :, None, None]
                + be[None, :, None, None])

    y = bn(jnp.maximum(conv(x_nchw, w1, b1), 0.0), g1, be1)
    y = bn(jnp.maximum(conv(y, w2, b2), 0.0), g2, be2)
    return y


def make_params(key, in_size, out_size):
    ks = jax.random.split(key, 4)
    w1 = 0.2 * jax.random.normal(ks[0], (out_size, in_size, 3, 3), jnp.float32)
    b1 = 0.1 * jax.random.normal(ks[1], (out_size,), jnp.float32)
    w2 = 0.2 * jax.random.normal(ks[2], (out_size, out_size, 3, 3), jnp.float32)
    b2 = 0.1 * jax.random.normal(ks[3], (out_size,), jnp.float32)
    g1 = jnp.ones((out_size,), jnp.float32)
    be1 = jnp.zeros((out_size,), jnp.float32)
    g2 = jnp.ones((out_size,), jnp.float32)
    be2 = jnp.zeros((out_size,), jnp.float32)
    return (w1, b1, g1, be1, w2, b2, g2, be2)


if __name__ == "__main__":
    key = jax.random.PRNGKey(0)
    k_x, k_p = jax.random.split(key)

    N, CIN, COUT, H, W = 2, 4, 8, 16, 16
    x = jax.random.normal(k_x, (N, CIN, H, W), jnp.float32)
    params = make_params(k_p, CIN, COUT)

    fwd = jax.jit(unet_conv_block)
    out = jax.block_until_ready(fwd(x, params))
    ref = jax.block_until_ready(reference(x, params))

    assert out.shape == (N, COUT, H, W)
    err = float(jnp.max(jnp.abs(out - ref)))
    # bf16 MXU operands + bf16 staging of both conv inputs vs a pure-f32
    # reference -> relaxed tolerance (intentional precision trade-off).
    assert err < 5e-2, f"max abs err vs f32 reference: {err}"
    print("KERNEL_OK")
</pallas_src>

<mosaic_0001>
module attributes {stable_mosaic.version = 11 : i64} {
  func.func @_conv1_kernel(%arg0: i32, %arg1: i32, %arg2: memref<1x8x16x128xbf16, #tpu.memory_space<vmem>>, %arg3: memref<128x128xbf16, #tpu.memory_space<vmem>>, %arg4: memref<1x8x16x128xbf16, #tpu.memory_space<vmem>>, %arg5: memref<1x1x1x128xf32, #tpu.memory_space<vmem>>, %arg6: memref<1x1x1x128xf32, #tpu.memory_space<vmem>>) attributes {dimension_semantics = [#tpu.dimension_semantics<parallel>, #tpu.dimension_semantics<parallel>], iteration_bounds = array<i64: 2, 2>, scalar_prefetch = 0 : i64, scratch_operands = 0 : i64, tpu.core_type = #tpu.core_type<tc>, window_params = [{transform_indices = @transform_0, window_bounds = array<i64: 1, 8, 16, 128>}, {pipeline_mode = #tpu.pipeline_mode<synchronous>, transform_indices = @transform_1, window_bounds = array<i64: 128, 128>}, {transform_indices = @transform_2, window_bounds = array<i64: 1, 8, 16, 128>}, {transform_indices = @transform_3, window_bounds = array<i64: 1, 1, 1, 128>}, {transform_indices = @transform_4, window_bounds = array<i64: 1, 1, 1, 128>}]} {
    %c0 = arith.constant 0 : index
    %c0_0 = arith.constant 0 : index
    %c0_1 = arith.constant 0 : index
    %c0_2 = arith.constant 0 : index
    %0 = vector.load %arg2[%c0, %c0_0, %c0_1, %c0_2] : memref<1x8x16x128xbf16, #tpu.memory_space<vmem>>, vector<1x8x16x128xbf16>
    %1 = vector.shape_cast %0 : vector<1x8x16x128xbf16> to vector<128x128xbf16>
    %c0_3 = arith.constant 0 : index
    %c0_4 = arith.constant 0 : index
    %2 = vector.load %arg3[%c0_3, %c0_4] : memref<128x128xbf16, #tpu.memory_space<vmem>>, vector<128x128xbf16>
    %cst = arith.constant dense<0.000000e+00> : vector<128x128xf32>
    %3 = tpu.matmul %1, %2, %cst {dimension_numbers = #tpu.dot_dimension_numbers<[1], [0], [0], [1], [0, 0, 1, 1], [], []>} : vector<128x128xbf16>, vector<128x128xbf16>, vector<128x128xf32> -> vector<128x128xf32>
    %cst_5 = arith.constant 0.000000e+00 : f32
    %4 = vector.broadcast %cst_5 : f32 to vector<128x128xf32>
    %5 = arith.maximumf %3, %4 : vector<128x128xf32>
    %cst_6 = arith.constant dense<0.000000e+00> : vector<128xf32>
    %6 = vector.multi_reduction <add>, %5, %cst_6 [0] : vector<128x128xf32> to vector<128xf32>
    %7 = vector.shape_cast %6 : vector<128xf32> to vector<1x128xf32>
    %8 = vector.shape_cast %7 : vector<1x128xf32> to vector<1x1x1x128xf32>
    %c0_7 = arith.constant 0 : index
    %c0_8 = arith.constant 0 : index
    %c0_9 = arith.constant 0 : index
    %c0_10 = arith.constant 0 : index
    %9 = vector.load %arg5[%c0_7, %c0_8, %c0_9, %c0_10] : memref<1x1x1x128xf32, #tpu.memory_space<vmem>>, vector<1x1x1x128xf32>
    tpu.vector_store %arg5[%c0_7, %c0_8, %c0_9, %c0_10], %8 {strides = array<i32>} : memref<1x1x1x128xf32, #tpu.memory_space<vmem>>, vector<1x1x1x128xf32>,
    %10 = arith.mulf %5, %5 : vector<128x128xf32>
    %cst_11 = arith.constant dense<0.000000e+00> : vector<128xf32>
    %11 = vector.multi_reduction <add>, %10, %cst_11 [0] : vector<128x128xf32> to vector<128xf32>
    %12 = vector.shape_cast %11 : vector<128xf32> to vector<1x128xf32>
    %13 = vector.shape_cast %12 : vector<1x128xf32> to vector<1x1x1x128xf32>
    %c0_12 = arith.constant 0 : index
    %c0_13 = arith.constant 0 : index
    %c0_14 = arith.constant 0 : index
    %c0_15 = arith.constant 0 : index
    %14 = vector.load %arg6[%c0_12, %c0_13, %c0_14, %c0_15] : memref<1x1x1x128xf32, #tpu.memory_space<vmem>>, vector<1x1x1x128xf32>
    tpu.vector_store %arg6[%c0_12, %c0_13, %c0_14, %c0_15], %13 {strides = array<i32>} : memref<1x1x1x128xf32, #tpu.memory_space<vmem>>, vector<1x1x1x128xf32>,
    %15 = vector.shape_cast %5 : vector<128x128xf32> to vector<1x8x16x128xf32>
    %16 = arith.truncf %15 : vector<1x8x16x128xf32> to vector<1x8x16x128xbf16>
    %c0_16 = arith.constant 0 : index
    %c0_17 = arith.constant 0 : index
    %c0_18 = arith.constant 0 : index
    %c0_19 = arith.constant 0 : index
    %17 = vector.load %arg4[%c0_16, %c0_17, %c0_18, %c0_19] : memref<1x8x16x128xbf16, #tpu.memory_space<vmem>>, vector<1x8x16x128xbf16>
    tpu.vector_store %arg4[%c0_16, %c0_17, %c0_18, %c0_19], %16 {strides = array<i32>} : memref<1x8x16x128xbf16, #tpu.memory_space<vmem>>, vector<1x8x16x128xbf16>,
    return
  }
  func.func @transform_0(%arg0: i32, %arg1: i32) -> (i32, i32, i32, i32) {
    %c0_i32 = arith.constant 0 : i32
    %c0_i32_0 = arith.constant 0 : i32
    %c0_i32_1 = arith.constant 0 : i32
    return %arg0, %arg1, %c0_i32, %c0_i32_0 : i32, i32, i32, i32
  }
  func.func @transform_1(%arg0: i32, %arg1: i32) -> (i32, i32) {
    %c0_i32 = arith.constant 0 : i32
    %c0_i32_0 = arith.constant 0 : i32
    %c0_i32_1 = arith.constant 0 : i32
    return %c0_i32, %c0_i32_0 : i32, i32
  }
  func.func @transform_2(%arg0: i32, %arg1: i32) -> (i32, i32, i32, i32) {
    %c0_i32 = arith.constant 0 : i32
    %c0_i32_0 = arith.constant 0 : i32
    %c0_i32_1 = arith.constant 0 : i32
    return %arg0, %arg1, %c0_i32, %c0_i32_0 : i32, i32, i32, i32
  }
  func.func @transform_3(%arg0: i32, %arg1: i32) -> (i32, i32, i32, i32) {
    %c0_i32 = arith.constant 0 : i32
    %c0_i32_0 = arith.constant 0 : i32
    %c0_i32_1 = arith.constant 0 : i32
    return %arg0, %arg1, %c0_i32, %c0_i32_0 : i32, i32, i32, i32
  }
  func.func @transform_4(%arg0: i32, %arg1: i32) -> (i32, i32, i32, i32) {
    %c0_i32 = arith.constant 0 : i32
    %c0_i32_0 = arith.constant 0 : i32
    %c0_i32_1 = arith.constant 0 : i32
    return %arg0, %arg1, %c0_i32, %c0_i32_0 : i32, i32, i32, i32
  }
}

module attributes {stable_mosaic.version = 11 : i64} {
  func.func @_bn_apply_kernel(%arg0: i32, %arg1: i32, %arg2: memref<1x8x16x8xf32, #tpu.memory_space<vmem>>, %arg3: memref<1x8xf32, #tpu.memory_space<vmem>>, %arg4: memref<1x8xf32, #tpu.memory_space<vmem>>, %arg5: memref<1x8x16x8xf32, #tpu.memory_space<vmem>>) attributes {dimension_semantics = [#tpu.dimension_semantics<parallel>, #tpu.dimension_semantics<parallel>], iteration_bounds = array<i64: 2, 2>, scalar_prefetch = 0 : i64, scratch_operands = 0 : i64, tpu.core_type = #tpu.core_type<tc>, window_params = [{transform_indices = @transform_0, window_bounds = array<i64: 1, 8, 16, 8>}, {pipeline_mode = #tpu.pipeline_mode<synchronous>, transform_indices = @transform_1, window_bounds = array<i64: 1, 8>}, {pipeline_mode = #tpu.pipeline_mode<synchronous>, transform_indices = @transform_2, window_bounds = array<i64: 1, 8>}, {transform_indices = @transform_3, window_bounds = array<i64: 1, 8, 16, 8>}]} {
    %c0 = arith.constant 0 : index
    %c0_0 = arith.constant 0 : index
    %c0_1 = arith.constant 0 : index
    %c0_2 = arith.constant 0 : index
    %0 = vector.load %arg2[%c0, %c0_0, %c0_1, %c0_2] : memref<1x8x16x8xf32, #tpu.memory_space<vmem>>, vector<1x8x16x8xf32>
    %c0_3 = arith.constant 0 : index
    %c0_4 = arith.constant 0 : index
    %1 = vector.load %arg3[%c0_3, %c0_4] : memref<1x8xf32, #tpu.memory_space<vmem>>, vector<1x8xf32>
    %2 = vector.shape_cast %1 : vector<1x8xf32> to vector<1x1x1x8xf32>
    %3 = vector.broadcast %2 : vector<1x1x1x8xf32> to vector<1x8x16x8xf32>
    %4 = arith.mulf %0, %3 : vector<1x8x16x8xf32>
    %c0_5 = arith.constant 0 : index
    %c0_6 = arith.constant 0 : index
    %5 = vector.load %arg4[%c0_5, %c0_6] : memref<1x8xf32, #tpu.memory_space<vmem>>, vector<1x8xf32>
    %6 = vector.shape_cast %5 : vector<1x8xf32> to vector<1x1x1x8xf32>
    %7 = vector.broadcast %6 : vector<1x1x1x8xf32> to vector<1x8x16x8xf32>
    %8 = arith.addf %4, %7 : vector<1x8x16x8xf32>
    %c0_7 = arith.constant 0 : index
    %c0_8 = arith.constant 0 : index
    %c0_9 = arith.constant 0 : index
    %c0_10 = arith.constant 0 : index
    %9 = vector.load %arg5[%c0_7, %c0_8, %c0_9, %c0_10] : memref<1x8x16x8xf32, #tpu.memory_space<vmem>>, vector<1x8x16x8xf32>
    tpu.vector_store %arg5[%c0_7, %c0_8, %c0_9, %c0_10], %8 {strides = array<i32>} : memref<1x8x16x8xf32, #tpu.memory_space<vmem>>, vector<1x8x16x8xf32>,
    return
  }
  func.func @transform_0(%arg0: i32, %arg1: i32) -> (i32, i32, i32, i32) {
    %c0_i32 = arith.constant 0 : i32
    %c0_i32_0 = arith.constant 0 : i32
    %c0_i32_1 = arith.constant 0 : i32
    return %arg0, %arg1, %c0_i32, %c0_i32_0 : i32, i32, i32, i32
  }
  func.func @transform_1(%arg0: i32, %arg1: i32) -> (i32, i32) {
    %c0_i32 = arith.constant 0 : i32
    %c0_i32_0 = arith.constant 0 : i32
    %c0_i32_1 = arith.constant 0 : i32
    return %c0_i32, %c0_i32_0 : i32, i32
  }
  func.func @transform_2(%arg0: i32, %arg1: i32) -> (i32, i32) {
    %c0_i32 = arith.constant 0 : i32
    %c0_i32_0 = arith.constant 0 : i32
    %c0_i32_1 = arith.constant 0 : i32
    return %c0_i32, %c0_i32_0 : i32, i32
  }
  func.func @transform_3(%arg0: i32, %arg1: i32) -> (i32, i32, i32, i32) {
    %c0_i32 = arith.constant 0 : i32
    %c0_i32_0 = arith.constant 0 : i32
    %c0_i32_1 = arith.constant 0 : i32
    return %arg0, %arg1, %c0_i32, %c0_i32_0 : i32, i32, i32, i32
  }
}

module attributes {stable_mosaic.version = 11 : i64} {
  func.func @_conv2_kernel(%arg0: i32, %arg1: i32, %arg2: memref<1x16x16x128xbf16, #tpu.memory_space<vmem>>, %arg3: memref<1x128xf32, #tpu.memory_space<vmem>>, %arg4: memref<1x128xf32, #tpu.memory_space<vmem>>, %arg5: memref<9x128x128xbf16, #tpu.memory_space<vmem>>, %arg6: memref<1x128xf32, #tpu.memory_space<vmem>>, %arg7: memref<1x8x16x8xf32, #tpu.memory_space<vmem>>, %arg8: memref<1x1x1x128xf32, #tpu.memory_space<vmem>>, %arg9: memref<1x1x1x128xf32, #tpu.memory_space<vmem>>, %arg10: memref<3x18x16x128xbf16, #tpu.memory_space<vmem>>, %arg11: memref<128x128xf32, #tpu.memory_space<vmem>>) attributes {dimension_semantics = [#tpu.dimension_semantics<parallel>, #tpu.dimension_semantics<arbitrary>], iteration_bounds = array<i64: 2, 2>, scalar_prefetch = 0 : i64, scratch_operands = 2 : i64, tpu.core_type = #tpu.core_type<tc>, window_params = [{transform_indices = @transform_0, window_bounds = array<i64: 1, 16, 16, 128>}, {pipeline_mode = #tpu.pipeline_mode<synchronous>, transform_indices = @transform_1, window_bounds = array<i64: 1, 128>}, {pipeline_mode = #tpu.pipeline_mode<synchronous>, transform_indices = @transform_2, window_bounds = array<i64: 1, 128>}, {pipeline_mode = #tpu.pipeline_mode<synchronous>, transform_indices = @transform_3, window_bounds = array<i64: 9, 128, 128>}, {pipeline_mode = #tpu.pipeline_mode<synchronous>, transform_indices = @transform_4, window_bounds = array<i64: 1, 128>}, {transform_indices = @transform_5, window_bounds = array<i64: 1, 8, 16, 8>}, {transform_indices = @transform_6, window_bounds = array<i64: 1, 1, 1, 128>}, {transform_indices = @transform_7, window_bounds = array<i64: 1, 1, 1, 128>}]} {
    %c0_i32 = arith.constant 0 : i32
    %0 = arith.cmpi eq, %arg1, %c0_i32 : i32
    %1 = arith.extui %0 : i1 to i32
    %c0_i32_0 = arith.constant 0 : i32
    %2 = arith.cmpi ne, %1, %c0_i32_0 : i32
    scf.if %2 {
      %c0_118 = arith.constant 0 : index
      %c0_119 = arith.constant 0 : index
      %c0_120 = arith.constant 0 : index
      %c0_121 = arith.constant 0 : index
      %114 = vector.load %arg2[%c0_118, %c0_119, %c0_120, %c0_121] : memref<1x16x16x128xbf16, #tpu.memory_space<vmem>>, vector<1x16x16x128xbf16>
      %115 = arith.extf %114 : vector<1x16x16x128xbf16> to vector<1x16x16x128xf32>
      %c0_122 = arith.constant 0 : index
      %c0_123 = arith.constant 0 : index
      %116 = vector.load %arg3[%c0_122, %c0_123] : memref<1x128xf32, #tpu.memory_space<vmem>>, vector<1x128xf32>
      %117 = vector.shape_cast %116 : vector<1x128xf32> to vector<1x1x1x128xf32>
      %118 = vector.broadcast %117 : vector<1x1x1x128xf32> to vector<1x16x16x128xf32>
      %119 = arith.mulf %115, %118 : vector<1x16x16x128xf32>
      %c0_124 = arith.constant 0 : index
      %c0_125 = arith.constant 0 : index
      %120 = vector.load %arg4[%c0_124, %c0_125] : memref<1x128xf32, #tpu.memory_space<vmem>>, vector<1x128xf32>
      %121 = vector.shape_cast %120 : vector<1x128xf32> to vector<1x1x1x128xf32>
      %122 = vector.broadcast %121 : vector<1x1x1x128xf32> to vector<1x16x16x128xf32>
      %123 = arith.addf %119, %122 : vector<1x16x16x128xf32>
      %124 = arith.truncf %123 : vector<1x16x16x128xf32> to vector<1x16x16x128xbf16>
      %cst_126 = arith.constant 0.000000e+00 : bf16
      %125 = vector.broadcast %cst_126 : bf16 to vector<3x18x16x128xbf16>
      %c0_127 = arith.constant 0 : index
      %c0_128 = arith.constant 0 : index
      %c0_129 = arith.constant 0 : index
      %c0_130 = arith.constant 0 : index
      %126 = vector.load %arg10[%c0_127, %c0_128, %c0_129, %c0_130] : memref<3x18x16x128xbf16, #tpu.memory_space<vmem>>, vector<3x18x16x128xbf16>
      tpu.vector_store %arg10[%c0_127, %c0_128, %c0_129, %c0_130], %125 {strides = array<i32>} : memref<3x18x16x128xbf16, #tpu.memory_space<vmem>>, vector<3x18x16x128xbf16>,
      %127 = vector.extract_strided_slice %124 {offsets = [0, 0, 0, 0], sizes = [1, 16, 15, 128], strides = [1, 1, 1, 1]} : vector<1x16x16x128xbf16> to vector<1x16x15x128xbf16>
      %c0_131 = arith.constant 0 : index
      %c1_132 = arith.constant 1 : index
      %c1_133 = arith.constant 1 : index
      %c0_134 = arith.constant 0 : index
      %128 = vector.load %arg10[%c0_131, %c1_132, %c1_133, %c0_134] : memref<3x18x16x128xbf16, #tpu.memory_space<vmem>>, vector<1x16x15x128xbf16>
      tpu.vector_store %arg10[%c0_131, %c1_132, %c1_133, %c0_134], %127 {strides = array<i32>} : memref<3x18x16x128xbf16, #tpu.memory_space<vmem>>, vector<1x16x15x128xbf16>,
      %c1_135 = arith.constant 1 : index
      %c1_136 = arith.constant 1 : index
      %c0_137 = arith.constant 0 : index
      %c0_138 = arith.constant 0 : index
      %129 = vector.load %arg10[%c1_135, %c1_136, %c0_137, %c0_138] : memref<3x18x16x128xbf16, #tpu.memory_space<vmem>>, vector<1x16x16x128xbf16>
      tpu.vector_store %arg10[%c1_135, %c1_136, %c0_137, %c0_138], %124 {strides = array<i32>} : memref<3x18x16x128xbf16, #tpu.memory_space<vmem>>, vector<1x16x16x128xbf16>,
      %130 = vector.extract_strided_slice %124 {offsets = [0, 0, 1, 0], sizes = [1, 16, 15, 128], strides = [1, 1, 1, 1]} : vector<1x16x16x128xbf16> to vector<1x16x15x128xbf16>
      %c2_139 = arith.constant 2 : index
      %c1_140 = arith.constant 1 : index
      %c0_141 = arith.constant 0 : index
      %c0_142 = arith.constant 0 : index
      %131 = vector.load %arg10[%c2_139, %c1_140, %c0_141, %c0_142] : memref<3x18x16x128xbf16, #tpu.memory_space<vmem>>, vector<1x16x15x128xbf16>
      tpu.vector_store %arg10[%c2_139, %c1_140, %c0_141, %c0_142], %130 {strides = array<i32>} : memref<3x18x16x128xbf16, #tpu.memory_space<vmem>>, vector<1x16x15x128xbf16>,
    } else {
    }
    %c0 = arith.constant 0 : index
    %c0_1 = arith.constant 0 : index
    %3 = vector.load %arg6[%c0, %c0_1] : memref<1x128xf32, #tpu.memory_space<vmem>>, vector<1x128xf32>
    %4 = vector.shape_cast %3 : vector<1x128xf32> to vector<1x128xf32>
    %5 = vector.broadcast %4 : vector<1x128xf32> to vector<128x128xf32>
    %c0_2 = arith.constant 0 : index
    %c0_3 = arith.constant 0 : index
    %6 = vector.load %arg11[%c0_2, %c0_3] : memref<128x128xf32, #tpu.memory_space<vmem>>, vector<128x128xf32>
    tpu.vector_store %arg11[%c0_2, %c0_3], %5 {strides = array<i32>} : memref<128x128xf32, #tpu.memory_space<vmem>>, vector<128x128xf32>,
    %c8_i32 = arith.constant 8 : i32
    %7 = arith.muli %arg1, %c8_i32 : i32
    %8 = tpu.assume_multiple %7, 8 : i32
    %c0_i32_4 = arith.constant 0 : i32
    %9 = arith.addi %8, %c0_i32_4 : i32
    %c0_5 = arith.constant 0 : index
    %10 = arith.index_cast %9 : i32 to index
    %c0_6 = arith.constant 0 : index
    %c0_7 = arith.constant 0 : index
    %11 = vector.load %arg10[%c0_5, %10, %c0_6, %c0_7] : memref<3x18x16x128xbf16, #tpu.memory_space<vmem>>, vector<1x8x16x128xbf16>
    %12 = vector.shape_cast %11 : vector<1x8x16x128xbf16> to vector<128x128xbf16>
    %c0_8 = arith.constant 0 : index
    %c0_9 = arith.constant 0 : index
    %13 = vector.load %arg11[%c0_8, %c0_9] : memref<128x128xf32, #tpu.memory_space<vmem>>, vector<128x128xf32>
    %c0_10 = arith.constant 0 : index
    %c0_11 = arith.constant 0 : index
    %c0_12 = arith.constant 0 : index
    %14 = vector.load %arg5[%c0_10, %c0_11, %c0_12] : memref<9x128x128xbf16, #tpu.memory_space<vmem>>, vector<1x128x128xbf16>
    %15 = vector.shape_cast %14 : vector<1x128x128xbf16> to vector<128x128xbf16>
    %cst = arith.constant dense<0.000000e+00> : vector<128x128xf32>
    %16 = tpu.matmul %12, %15, %cst {dimension_numbers = #tpu.dot_dimension_numbers<[1], [0], [0], [1], [0, 0, 1, 1], [], []>} : vector<128x128xbf16>, vector<128x128xbf16>, vector<128x128xf32> -> vector<128x128xf32>
    %17 = arith.addf %13, %16 : vector<128x128xf32>
    %c0_13 = arith.constant 0 : index
    %c0_14 = arith.constant 0 : index
    %18 = vector.load %arg11[%c0_13, %c0_14] : memref<128x128xf32, #tpu.memory_space<vmem>>, vector<128x128xf32>
    tpu.vector_store %arg11[%c0_13, %c0_14], %17 {strides = array<i32>} : memref<128x128xf32, #tpu.memory_space<vmem>>, vector<128x128xf32>,
    %c0_i32_15 = arith.constant 0 : i32
    %19 = arith.addi %8, %c0_i32_15 : i32
    %c1 = arith.constant 1 : index
    %20 = arith.index_cast %19 : i32 to index
    %c0_16 = arith.constant 0 : index
    %c0_17 = arith.constant 0 : index
    %21 = vector.load %arg10[%c1, %20, %c0_16, %c0_17] : memref<3x18x16x128xbf16, #tpu.memory_space<vmem>>, vector<1x8x16x128xbf16>
    %22 = vector.shape_cast %21 : vector<1x8x16x128xbf16> to vector<128x128xbf16>
    %c0_18 = arith.constant 0 : index
    %c0_19 = arith.constant 0 : index
    %23 = vector.load %arg11[%c0_18, %c0_19] : memref<128x128xf32, #tpu.memory_space<vmem>>, vector<128x128xf32>
    %c1_20 = arith.constant 1 : index
    %c0_21 = arith.constant 0 : index
    %c0_22 = arith.constant 0 : index
    %24 = vector.load %arg5[%c1_20, %c0_21, %c0_22] : memref<9x128x128xbf16, #tpu.memory_space<vmem>>, vector<1x128x128xbf16>
    %25 = vector.shape_cast %24 : vector<1x128x128xbf16> to vector<128x128xbf16>
    %cst_23 = arith.constant dense<0.000000e+00> : vector<128x128xf32>
    %26 = tpu.matmul %22, %25, %cst_23 {dimension_numbers = #tpu.dot_dimension_numbers<[1], [0], [0], [1], [0, 0, 1, 1], [], []>} : vector<128x128xbf16>, vector<128x128xbf16>, vector<128x128xf32> -> vector<128x128xf32>
    %27 = arith.addf %23, %26 : vector<128x128xf32>
    %c0_24 = arith.constant 0 : index
    %c0_25 = arith.constant 0 : index
    %28 = vector.load %arg11[%c0_24, %c0_25] : memref<128x128xf32, #tpu.memory_space<vmem>>, vector<128x128xf32>
    tpu.vector_store %arg11[%c0_24, %c0_25], %27 {strides = array<i32>} : memref<128x128xf32, #tpu.memory_space<vmem>>, vector<128x128xf32>,
    %c0_i32_26 = arith.constant 0 : i32
    %29 = arith.addi %8, %c0_i32_26 : i32
    %c2 = arith.constant 2 : index
    %30 = arith.index_cast %29 : i32 to index
    %c0_27 = arith.constant 0 : index
    %c0_28 = arith.constant 0 : index
    %31 = vector.load %arg10[%c2, %30, %c0_27, %c0_28] : memref<3x18x16x128xbf16, #tpu.memory_space<vmem>>, vector<1x8x16x128xbf16>
    %32 = vector.shape_cast %31 : vector<1x8x16x128xbf16> to vector<128x128xbf16>
    %c0_29 = arith.constant 0 : index
    %c0_30 = arith.constant 0 : index
    %33 = vector.load %arg11[%c0_29, %c0_30] : memref<128x128xf32, #tpu.memory_space<vmem>>, vector<128x128xf32>
    %c2_31 = arith.constant 2 : index
    %c0_32 = arith.constant 0 : index
    %c0_33 = arith.constant 0 : index
    %34 = vector.load %arg5[%c2_31, %c0_32, %c0_33] : memref<9x128x128xbf16, #tpu.memory_space<vmem>>, vector<1x128x128xbf16>
    %35 = vector.shape_cast %34 : vector<1x128x128xbf16> to vector<128x128xbf16>
    %cst_34 = arith.constant dense<0.000000e+00> : vector<128x128xf32>
    %36 = tpu.matmul %32, %35, %cst_34 {dimension_numbers = #tpu.dot_dimension_numbers<[1], [0], [0], [1], [0, 0, 1, 1], [], []>} : vector<128x128xbf16>, vector<128x128xbf16>, vector<128x128xf32> -> vector<128x128xf32>
    %37 = arith.addf %33, %36 : vector<128x128xf32>
    %c0_35 = arith.constant 0 : index
    %c0_36 = arith.constant 0 : index
    %38 = vector.load %arg11[%c0_35, %c0_36] : memref<128x128xf32, #tpu.memory_space<vmem>>, vector<128x128xf32>
    tpu.vector_store %arg11[%c0_35, %c0_36], %37 {strides = array<i32>} : memref<128x128xf32, #tpu.memory_space<vmem>>, vector<128x128xf32>,
    %c1_i32 = arith.constant 1 : i32
    %39 = arith.addi %8, %c1_i32 : i32
    %c0_37 = arith.constant 0 : index
    %40 = arith.index_cast %39 : i32 to index
    %c0_38 = arith.constant 0 : index
    %c0_39 = arith.constant 0 : index
    %41 = vector.load %arg10[%c0_37, %40, %c0_38, %c0_39] : memref<3x18x16x128xbf16, #tpu.memory_space<vmem>>, vector<1x8x16x128xbf16>
    %42 = vector.shape_cast %41 : vector<1x8x16x128xbf16> to vector<128x128xbf16>
    %c0_40 = arith.constant 0 : index
    %c0_41 = arith.constant 0 : index
    %43 = vector.load %arg11[%c0_40, %c0_41] : memref<128x128xf32, #tpu.memory_space<vmem>>, vector<128x128xf32>
    %c3 = arith.constant 3 : index
    %c0_42 = arith.constant 0 : index
    %c0_43 = arith.constant 0 : index
    %44 = vector.load %arg5[%c3, %c0_42, %c0_43] : memref<9x128x128xbf16, #tpu.memory_space<vmem>>, vector<1x128x128xbf16>
    %45 = vector.shape_cast %44 : vector<1x128x128xbf16> to vector<128x128xbf16>
    %cst_44 = arith.constant dense<0.000000e+00> : vector<128x128xf32>
    %46 = tpu.matmul %42, %45, %cst_44 {dimension_numbers = #tpu.dot_dimension_numbers<[1], [0], [0], [1], [0, 0, 1, 1], [], []>} : vector<128x128xbf16>, vector<128x128xbf16>, vector<128x128xf32> -> vector<128x128xf32>
    %47 = arith.addf %43, %46 : vector<128x128xf32>
    %c0_45 = arith.constant 0 : index
    %c0_46 = arith.constant 0 : index
    %48 = vector.load %arg11[%c0_45, %c0_46] : memref<128x128xf32, #tpu.memory_space<vmem>>, vector<128x128xf32>
    tpu.vector_store %arg11[%c0_45, %c0_46], %47 {strides = array<i32>} : memref<128x128xf32, #tpu.memory_space<vmem>>, vector<128x128xf32>,
    %c1_i32_47 = arith.constant 1 : i32
    %49 = arith.addi %8, %c1_i32_47 : i32
    %c1_48 = arith.constant 1 : index
    %50 = arith.index_cast %49 : i32 to index
    %c0_49 = arith.constant 0 : index
    %c0_50 = arith.constant 0 : index
    %51 = vector.load %arg10[%c1_48, %50, %c0_49, %c0_50] : memref<3x18x16x128xbf16, #tpu.memory_space<vmem>>, vector<1x8x16x128xbf16>
    %52 = vector.shape_cast %51 : vector<1x8x16x128xbf16> to vector<128x128xbf16>
    %c0_51 = arith.constant 0 : index
    %c0_52 = arith.constant 0 : index
    %53 = vector.load %arg11[%c0_51, %c0_52] : memref<128x128xf32, #tpu.memory_space<vmem>>, vector<128x128xf32>
    %c4 = arith.constant 4 : index
    %c0_53 = arith.constant 0 : index
    %c0_54 = arith.constant 0 : index
    %54 = vector.load %arg5[%c4, %c0_53, %c0_54] : memref<9x128x128xbf16, #tpu.memory_space<vmem>>, vector<1x128x128xbf16>
    %55 = vector.shape_cast %54 : vector<1x128x128xbf16> to vector<128x128xbf16>
    %cst_55 = arith.constant dense<0.000000e+00> : vector<128x128xf32>
    %56 = tpu.matmul %52, %55, %cst_55 {dimension_numbers = #tpu.dot_dimension_numbers<[1], [0], [0], [1], [0, 0, 1, 1], [], []>} : vector<128x128xbf16>, vector<128x128xbf16>, vector<128x128xf32> -> vector<128x128xf32>
    %57 = arith.addf %53, %56 : vector<128x128xf32>
    %c0_56 = arith.constant 0 : index
    %c0_57 = arith.constant 0 : index
    %58 = vector.load %arg11[%c0_56, %c0_57] : memref<128x128xf32, #tpu.memory_space<vmem>>, vector<128x128xf32>
    tpu.vector_store %arg11[%c0_56, %c0_57], %57 {strides = array<i32>} : memref<128x128xf32, #tpu.memory_space<vmem>>, vector<128x128xf32>,
    %c1_i32_58 = arith.constant 1 : i32
    %59 = arith.addi %8, %c1_i32_58 : i32
    %c2_59 = arith.constant 2 : index
    %60 = arith.index_cast %59 : i32 to index
    %c0_60 = arith.constant 0 : index
    %c0_61 = arith.constant 0 : index
    %61 = vector.load %arg10[%c2_59, %60, %c0_60, %c0_61] : memref<3x18x16x128xbf16, #tpu.memory_space<vmem>>, vector<1x8x16x128xbf16>
    %62 = vector.shape_cast %61 : vector<1x8x16x128xbf16> to vector<128x128xbf16>
    %c0_62 = arith.constant 0 : index
    %c0_63 = arith.constant 0 : index
    %63 = vector.load %arg11[%c0_62, %c0_63] : memref<128x128xf32, #tpu.memory_space<vmem>>, vector<128x128xf32>
    %c5 = arith.constant 5 : index
    %c0_64 = arith.constant 0 : index
    %c0_65 = arith.constant 0 : index
    %64 = vector.load %arg5[%c5, %c0_64, %c0_65] : memref<9x128x128xbf16, #tpu.memory_space<vmem>>, vector<1x128x128xbf16>
    %65 = vector.shape_cast %64 : vector<1x128x128xbf16> to vector<128x128xbf16>
    %cst_66 = arith.constant dense<0.000000e+00> : vector<128x128xf32>
    %66 = tpu.matmul %62, %65, %cst_66 {dimension_numbers = #tpu.dot_dimension_numbers<[1], [0], [0], [1], [0, 0, 1, 1], [], []>} : vector<128x128xbf16>, vector<128x128xbf16>, vector<128x128xf32> -> vector<128x128xf32>
    %67 = arith.addf %63, %66 : vector<128x128xf32>
    %c0_67 = arith.constant 0 : index
    %c0_68 = arith.constant 0 : index
    %68 = vector.load %arg11[%c0_67, %c0_68] : memref<128x128xf32, #tpu.memory_space<vmem>>, vector<128x128xf32>
    tpu.vector_store %arg11[%c0_67, %c0_68], %67 {strides = array<i32>} : memref<128x128xf32, #tpu.memory_space<vmem>>, vector<128x128xf32>,
    %c2_i32 = arith.constant 2 : i32
    %69 = arith.addi %8, %c2_i32 : i32
    %c0_69 = arith.constant 0 : index
    %70 = arith.index_cast %69 : i32 to index
    %c0_70 = arith.constant 0 : index
    %c0_71 = arith.constant 0 : index
    %71 = vector.load %arg10[%c0_69, %70, %c0_70, %c0_71] : memref<3x18x16x128xbf16, #tpu.memory_space<vmem>>, vector<1x8x16x128xbf16>
    %72 = vector.shape_cast %71 : vector<1x8x16x128xbf16> to vector<128x128xbf16>
    %c0_72 = arith.constant 0 : index
    %c0_73 = arith.constant 0 : index
    %73 = vector.load %arg11[%c0_72, %c0_73] : memref<128x128xf32, #tpu.memory_space<vmem>>, vector<128x128xf32>
    %c6 = arith.constant 6 : index
    %c0_74 = arith.constant 0 : index
    %c0_75 = arith.constant 0 : index
    %74 = vector.load %arg5[%c6, %c0_74, %c0_75] : memref<9x128x128xbf16, #tpu.memory_space<vmem>>, vector<1x128x128xbf16>
    %75 = vector.shape_cast %74 : vector<1x128x128xbf16> to vector<128x128xbf16>
    %cst_76 = arith.constant dense<0.000000e+00> : vector<128x128xf32>
    %76 = tpu.matmul %72, %75, %cst_76 {dimension_numbers = #tpu.dot_dimension_numbers<[1], [0], [0], [1], [0, 0, 1, 1], [], []>} : vector<128x128xbf16>, vector<128x128xbf16>, vector<128x128xf32> -> vector<128x128xf32>
    %77 = arith.addf %73, %76 : vector<128x128xf32>
    %c0_77 = arith.constant 0 : index
    %c0_78 = arith.constant 0 : index
    %78 = vector.load %arg11[%c0_77, %c0_78] : memref<128x128xf32, #tpu.memory_space<vmem>>, vector<128x128xf32>
    tpu.vector_store %arg11[%c0_77, %c0_78], %77 {strides = array<i32>} : memref<128x128xf32, #tpu.memory_space<vmem>>, vector<128x128xf32>,
    %c2_i32_79 = arith.constant 2 : i32
    %79 = arith.addi %8, %c2_i32_79 : i32
    %c1_80 = arith.constant 1 : index
    %80 = arith.index_cast %79 : i32 to index
    %c0_81 = arith.constant 0 : index
    %c0_82 = arith.constant 0 : index
    %81 = vector.load %arg10[%c1_80, %80, %c0_81, %c0_82] : memref<3x18x16x128xbf16, #tpu.memory_space<vmem>>, vector<1x8x16x128xbf16>
    %82 = vector.shape_cast %81 : vector<1x8x16x128xbf16> to vector<128x128xbf16>
    %c0_83 = arith.constant 0 : index
    %c0_84 = arith.constant 0 : index
    %83 = vector.load %arg11[%c0_83, %c0_84] : memref<128x128xf32, #tpu.memory_space<vmem>>, vector<128x128xf32>
    %c7 = arith.constant 7 : index
    %c0_85 = arith.constant 0 : index
    %c0_86 = arith.constant 0 : index
    %84 = vector.load %arg5[%c7, %c0_85, %c0_86] : memref<9x128x128xbf16, #tpu.memory_space<vmem>>, vector<1x128x128xbf16>
    %85 = vector.shape_cast %84 : vector<1x128x128xbf16> to vector<128x128xbf16>
    %cst_87 = arith.constant dense<0.000000e+00> : vector<128x128xf32>
    %86 = tpu.matmul %82, %85, %cst_87 {dimension_numbers = #tpu.dot_dimension_numbers<[1], [0], [0], [1], [0, 0, 1, 1], [], []>} : vector<128x128xbf16>, vector<128x128xbf16>, vector<128x128xf32> -> vector<128x128xf32>
    %87 = arith.addf %83, %86 : vector<128x128xf32>
    %c0_88 = arith.constant 0 : index
    %c0_89 = arith.constant 0 : index
    %88 = vector.load %arg11[%c0_88, %c0_89] : memref<128x128xf32, #tpu.memory_space<vmem>>, vector<128x128xf32>
    tpu.vector_store %arg11[%c0_88, %c0_89], %87 {strides = array<i32>} : memref<128x128xf32, #tpu.memory_space<vmem>>, vector<128x128xf32>,
    %c2_i32_90 = arith.constant 2 : i32
    %89 = arith.addi %8, %c2_i32_90 : i32
    %c2_91 = arith.constant 2 : index
    %90 = arith.index_cast %89 : i32 to index
    %c0_92 = arith.constant 0 : index
    %c0_93 = arith.constant 0 : index
    %91 = vector.load %arg10[%c2_91, %90, %c0_92, %c0_93] : memref<3x18x16x128xbf16, #tpu.memory_space<vmem>>, vector<1x8x16x128xbf16>
    %92 = vector.shape_cast %91 : vector<1x8x16x128xbf16> to vector<128x128xbf16>
    %c0_94 = arith.constant 0 : index
    %c0_95 = arith.constant 0 : index
    %93 = vector.load %arg11[%c0_94, %c0_95] : memref<128x128xf32, #tpu.memory_space<vmem>>, vector<128x128xf32>
    %c8 = arith.constant 8 : index
    %c0_96 = arith.constant 0 : index
    %c0_97 = arith.constant 0 : index
    %94 = vector.load %arg5[%c8, %c0_96, %c0_97] : memref<9x128x128xbf16, #tpu.memory_space<vmem>>, vector<1x128x128xbf16>
    %95 = vector.shape_cast %94 : vector<1x128x128xbf16> to vector<128x128xbf16>
    %cst_98 = arith.constant dense<0.000000e+00> : vector<128x128xf32>
    %96 = tpu.matmul %92, %95, %cst_98 {dimension_numbers = #tpu.dot_dimension_numbers<[1], [0], [0], [1], [0, 0, 1, 1], [], []>} : vector<128x128xbf16>, vector<128x128xbf16>, vector<128x128xf32> -> vector<128x128xf32>
    %97 = arith.addf %93, %96 : vector<128x128xf32>
    %c0_99 = arith.constant 0 : index
    %c0_100 = arith.constant 0 : index
    %98 = vector.load %arg11[%c0_99, %c0_100] : memref<128x128xf32, #tpu.memory_space<vmem>>, vector<128x128xf32>
    tpu.vector_store %arg11[%c0_99, %c0_100], %97 {strides = array<i32>} : memref<128x128xf32, #tpu.memory_space<vmem>>, vector<128x128xf32>,
    %c0_101 = arith.constant 0 : index
    %c0_102 = arith.constant 0 : index
    %99 = vector.load %arg11[%c0_101, %c0_102] : memref<128x128xf32, #tpu.memory_space<vmem>>, vector<128x128xf32>
    %cst_103 = arith.constant 0.000000e+00 : f32
    %100 = vector.broadcast %cst_103 : f32 to vector<128x128xf32>
    %101 = arith.maximumf %99, %100 : vector<128x128xf32>
    %cst_104 = arith.constant dense<0.000000e+00> : vector<128xf32>
    %102 = vector.multi_reduction <add>, %101, %cst_104 [0] : vector<128x128xf32> to vector<128xf32>
    %103 = vector.shape_cast %102 : vector<128xf32> to vector<1x128xf32>
    %104 = vector.shape_cast %103 : vector<1x128xf32> to vector<1x1x1x128xf32>
    %c0_105 = arith.constant 0 : index
    %c0_106 = arith.constant 0 : index
    %c0_107 = arith.constant 0 : index
    %c0_108 = arith.constant 0 : index
    %105 = vector.load %arg8[%c0_105, %c0_106, %c0_107, %c0_108] : memref<1x1x1x128xf32, #tpu.memory_space<vmem>>, vector<1x1x1x128xf32>
    tpu.vector_store %arg8[%c0_105, %c0_106, %c0_107, %c0_108], %104 {strides = array<i32>} : memref<1x1x1x128xf32, #tpu.memory_space<vmem>>, vector<1x1x1x128xf32>,
    %106 = arith.mulf %101, %101 : vector<128x128xf32>
    %cst_109 = arith.constant dense<0.000000e+00> : vector<128xf32>
    %107 = vector.multi_reduction <add>, %106, %cst_109 [0] : vector<128x128xf32> to vector<128xf32>
    %108 = vector.shape_cast %107 : vector<128xf32> to vector<1x128xf32>
    %109 = vector.shape_cast %108 : vector<1x128xf32> to vector<1x1x1x128xf32>
    %c0_110 = arith.constant 0 : index
    %c0_111 = arith.constant 0 : index
    %c0_112 = arith.constant 0 : index
    %c0_113 = arith.constant 0 : index
    %110 = vector.load %arg9[%c0_110, %c0_111, %c0_112, %c0_113] : memref<1x1x1x128xf32, #tpu.memory_space<vmem>>, vector<1x1x1x128xf32>
    tpu.vector_store %arg9[%c0_110, %c0_111, %c0_112, %c0_113], %109 {strides = array<i32>} : memref<1x1x1x128xf32, #tpu.memory_space<vmem>>, vector<1x1x1x128xf32>,
    %111 = vector.shape_cast %101 : vector<128x128xf32> to vector<1x8x16x128xf32>
    %112 = vector.extract_strided_slice %111 {offsets = [0, 0, 0, 0], sizes = [1, 8, 16, 8], strides = [1, 1, 1, 1]} : vector<1x8x16x128xf32> to vector<1x8x16x8xf32>
    %c0_114 = arith.constant 0 : index
    %c0_115 = arith.constant 0 : index
    %c0_116 = arith.constant 0 : index
    %c0_117 = arith.constant 0 : index
    %113 = vector.load %arg7[%c0_114, %c0_115, %c0_116, %c0_117] : memref<1x8x16x8xf32, #tpu.memory_space<vmem>>, vector<1x8x16x8xf32>
    tpu.vector_store %arg7[%c0_114, %c0_115, %c0_116, %c0_117], %112 {strides = array<i32>} : memref<1x8x16x8xf32, #tpu.memory_space<vmem>>, vector<1x8x16x8xf32>,
    return
  }
  func.func @transform_0(%arg0: i32, %arg1: i32) -> (i32, i32, i32, i32) {
    %c0_i32 = arith.constant 0 : i32
    %c0_i32_0 = arith.constant 0 : i32
    %c0_i32_1 = arith.constant 0 : i32
    %c0_i32_2 = arith.constant 0 : i32
    return %arg0, %c0_i32, %c0_i32_0, %c0_i32_1 : i32, i32, i32, i32
  }
  func.func @transform_1(%arg0: i32, %arg1: i32) -> (i32, i32) {
    %c0_i32 = arith.constant 0 : i32
    %c0_i32_0 = arith.constant 0 : i32
    %c0_i32_1 = arith.constant 0 : i32
    return %c0_i32, %c0_i32_0 : i32, i32
  }
  func.func @transform_2(%arg0: i32, %arg1: i32) -> (i32, i32) {
    %c0_i32 = arith.constant 0 : i32
    %c0_i32_0 = arith.constant 0 : i32
    %c0_i32_1 = arith.constant 0 : i32
    return %c0_i32, %c0_i32_0 : i32, i32
  }
  func.func @transform_3(%arg0: i32, %arg1: i32) -> (i32, i32, i32) {
    %c0_i32 = arith.constant 0 : i32
    %c0_i32_0 = arith.constant 0 : i32
    %c0_i32_1 = arith.constant 0 : i32
    %c0_i32_2 = arith.constant 0 : i32
    return %c0_i32, %c0_i32_0, %c0_i32_1 : i32, i32, i32
  }
  func.func @transform_4(%arg0: i32, %arg1: i32) -> (i32, i32) {
    %c0_i32 = arith.constant 0 : i32
    %c0_i32_0 = arith.constant 0 : i32
    %c0_i32_1 = arith.constant 0 : i32
    return %c0_i32, %c0_i32_0 : i32, i32
  }
  func.func @transform_5(%arg0: i32, %arg1: i32) -> (i32, i32, i32, i32) {
    %c0_i32 = arith.constant 0 : i32
    %c0_i32_0 = arith.constant 0 : i32
    %c0_i32_1 = arith.constant 0 : i32
    return %arg0, %arg1, %c0_i32, %c0_i32_0 : i32, i32, i32, i32
  }
  func.func @transform_6(%arg0: i32, %arg1: i32) -> (i32, i32, i32, i32) {
    %c0_i32 = arith.constant 0 : i32
    %c0_i32_0 = arith.constant 0 : i32
    %c0_i32_1 = arith.constant 0 : i32
    return %arg0, %arg1, %c0_i32, %c0_i32_0 : i32, i32, i32, i32
  }
  func.func @transform_7(%arg0: i32, %arg1: i32) -> (i32, i32, i32, i32) {
    %c0_i32 = arith.constant 0 : i32
    %c0_i32_0 = arith.constant 0 : i32
    %c0_i32_1 = arith.constant 0 : i32
    return %arg0, %arg1, %c0_i32, %c0_i32_0 : i32, i32, i32, i32
  }
}

</mosaic_0001>

<llo_original>
// kernel: unet_conv_block.5
$region0: #{unet_conv_block.5}
  #allocation0 [shape = 'u32[]', space=smem, size = 0x4, offset = 0x4, fixed_abs, tag = 'smem constant byte address 0x4 - core index']
  #allocation1 [shape = 'u32[144,128]{1,0:T(1,128)}', space=vmem, size = 0x12000, scoped, tag = 'internal scratch']
  %s0 = inlined_call_operand.vmem [shape: f32[2,16,16,8], index: 0, kind: input, shape index: {}]
  %s1 = inlined_call_operand.vmem [shape: f32[1,8], index: 1, kind: input, shape index: {}]
  %s2 = inlined_call_operand.vmem [shape: f32[1,8], index: 2, kind: input, shape index: {}]
  %s3 = inlined_call_operand.vmem [shape: f32[2,16,16,8], index: 3, kind: output, shape index: {}]
  %s4 = sld [smem:[#allocation0]]
  $region45: #{unet_conv_block.5} parent=0
    _
  %s6 = ssub.s32 1, %s4
  %s7 = scalar_select 0, %s6, %s4
  loop: start=0, step=1, limit=6
  $region2: #{unet_conv_block.5} parent=0 // loop_pre_header
    _
  $region3: #{unet_conv_block.5} parent=0 // loop_header
    %s9 = sphi 0, %s13
    %p10 = scmp.ge.s32.totalorder %s9, 6
    %s16 = sphi 0, %s28
    %s17 = sphi 0, %s24
    %s18 = sphi 0, %s16
    %s19 = sphi 0, %s17
    %s20 = sphi 0, %s18
    %s21 = sphi 0, %s19
    %s33 = sphi 0, %s35
    %s36 = sphi 0, %s33
    %s37 = sphi 0, %s36
    %s53 = sphi 0, %s37
    %s57 = sphi 0, %s57
    %s59 = sphi 0, %s57
    %s60 = sphi 0, %s59
    %s74 = sphi 0, %s60
    %s78 = sphi 0, %s78
    %s80 = sphi 0, %s78
    %s81 = sphi 0, %s80
    %s95 = sphi 0, %s81
    %s103 = sphi 0, %s105
    %s106 = sphi 0, %s103
    %s107 = sphi 0, %s106
    %s123 = sphi 0, %s107
  $region4: #{unet_conv_block.5} parent=0 // loop_header_branch
    %12 = sbr.rel (%p10) target = $region8
  $region5: #{unet_conv_block.5} parent=0 // loop_body
    %s14 = ssub.s32 %s9, 1
    %s15 = ssub.s32 %s9, 2
    %s22 = sadd.s32 1, %s17
    %p23 = scmp.ge.s32.totalorder %s22, 2
    %s24 = scalar_select %p23, 0, %s22
    %s25 = sadd.s32 1, %s16
    %s26 = scalar_select %p23, %s25, %s16
    %p27 = scmp.ge.s32.totalorder %s26, 2
    %s28 = scalar_select %p27, 0, %s26
    %s29 = ssub.s32 %s16, %s28
    %s30 = ssub.s32 %s17, %s24
    %s31 = sor.u32 %s29, %s30
    %p32 = scmp.eq.s32.totalorder %s31, 0
    %s34 = sadd.s32 %s33, 1
    %s35 = scalar_select %p32, %s33, %s34
    %p38 = pneg %p32
    %p39 = scmp.eq.s32.totalorder %s9, 3
    %p40 = por %p38, %p39
    %p41 = scmp.ne.s32.totalorder %s33, %s36
    %p42 = scmp.eq.s32.totalorder %s9, 0
    %p43 = por %p41, %p42
    %p44 = scmp.ne.s32.totalorder %s33, %s36
    %p45 = scmp.eq.s32.totalorder %s14, 3
    %p46 = por %p44, %p45
    %p47 = scmp.ne.s32.totalorder %s36, %s37
    %p48 = scmp.eq.s32.totalorder %s14, 0
    %p49 = por %p47, %p48
    %p50 = scmp.ne.s32.totalorder %s36, %s37
    %p51 = scmp.eq.s32.totalorder %s15, 3
    %p52 = por %p50, %p51
    %p54 = scmp.ne.s32.totalorder %s37, %s53
    %p55 = scmp.eq.s32.totalorder %s15, 0
    %p56 = por %p54, %p55
    %s58 = sadd.s32 %s57, 1
    %p61 = scmp.eq.s32.totalorder %s9, 3
    %p62 = scmp.ne.s32.totalorder %s57, %s59
    %p63 = scmp.eq.s32.totalorder %s9, 0
    %p64 = por %p62, %p63
    %p65 = scmp.ne.s32.totalorder %s57, %s59
    %p66 = scmp.eq.s32.totalorder %s14, 3
    %p67 = por %p65, %p66
    %p68 = scmp.ne.s32.totalorder %s59, %s60
    %p69 = scmp.eq.s32.totalorder %s14, 0
    %p70 = por %p68, %p69
    %p71 = scmp.ne.s32.totalorder %s59, %s60
    %p72 = scmp.eq.s32.totalorder %s15, 3
    %p73 = por %p71, %p72
    %p75 = scmp.ne.s32.totalorder %s60, %s74
    %p76 = scmp.eq.s32.totalorder %s15, 0
    %p77 = por %p75, %p76
    %s79 = sadd.s32 %s78, 1
    %p82 = scmp.eq.s32.totalorder %s9, 3
    %p83 = scmp.ne.s32.totalorder %s78, %s80
    %p84 = scmp.eq.s32.totalorder %s9, 0
    %p85 = por %p83, %p84
    %p86 = scmp.ne.s32.totalorder %s78, %s80
    %p87 = scmp.eq.s32.totalorder %s14, 3
    %p88 = por %p86, %p87
    %p89 = scmp.ne.s32.totalorder %s80, %s81
    %p90 = scmp.eq.s32.totalorder %s14, 0
    %p91 = por %p89, %p90
    %p92 = scmp.ne.s32.totalorder %s80, %s81
    %p93 = scmp.eq.s32.totalorder %s15, 3
    %p94 = por %p92, %p93
    %p96 = scmp.ne.s32.totalorder %s81, %s95
    %p97 = scmp.eq.s32.totalorder %s15, 0
    %p98 = por %p96, %p97
    %s99 = ssub.s32 %s16, %s28
    %s100 = ssub.s32 %s17, %s24
    %s101 = sor.u32 %s99, %s100
    %p102 = scmp.eq.s32.totalorder %s101, 0
    %s104 = sadd.s32 %s103, 1
    %s105 = scalar_select %p102, %s103, %s104
    %p108 = pneg %p102
    %p109 = scmp.eq.s32.totalorder %s9, 3
    %p110 = por %p108, %p109
    %p111 = scmp.ne.s32.totalorder %s103, %s106
    %p112 = scmp.eq.s32.totalorder %s9, 0
    %p113 = por %p111, %p112
    %p114 = scmp.ne.s32.totalorder %s103, %s106
    %p115 = scmp.eq.s32.totalorder %s14, 3
    %p116 = por %p114, %p115
    %p117 = scmp.ne.s32.totalorder %s106, %s107
    %p118 = scmp.eq.s32.totalorder %s14, 0
    %p119 = por %p117, %p118
    %p120 = scmp.ne.s32.totalorder %s106, %s107
    %p121 = scmp.eq.s32.totalorder %s15, 3
    %p122 = por %p120, %p121
    %p124 = scmp.ne.s32.totalorder %s107, %s123
    %p125 = scmp.eq.s32.totalorder %s15, 0
    %p126 = por %p124, %p125
    %p127 = scmp.le.s32.totalorder 1, %s9
    %p128 = scmp.lt.s32.totalorder %s9, 5
    %p129 = pnand %p127, %p128
    %p130 = pneg %p129
    // Predicated region
    $region9: #{unet_conv_block.5} parent=5 // pred_check
      _
    $region10: #{unet_conv_block.5} parent=5 // pred_check_branch
      %132 = sbr.rel (%p129) target = $region12
    $region11: #{unet_conv_block.5} parent=5 // pred_region
      %s133 = ssub.s32 %s9, 1
      // Predicated region
      $region13: #{unet_conv_block.5} parent=11 // pred_check
        %p134 = pneg %p70
      $region14: #{unet_conv_block.5} parent=11 // pred_check_branch
        %136 = sbr.rel (%p134) target = $region16
      $region15: #{unet_conv_block.5} parent=11 // pred_region
        _
      $region16: #{unet_conv_block.5} parent=11 // pred_fallthru
        _
      // Predicated region
      $region17: #{unet_conv_block.5} parent=11 // pred_check
        %p137 = pneg %p91
      $region18: #{unet_conv_block.5} parent=11 // pred_check_branch
        %139 = sbr.rel (%p137) target = $region20
      $region19: #{unet_conv_block.5} parent=11 // pred_region
        _
      $region20: #{unet_conv_block.5} parent=11 // pred_fallthru
        _
    $region12: #{unet_conv_block.5} parent=5 // pred_fallthru
      _
    %p140 = scmp.lt.s32.totalorder %s9, 4
    // Predicated region
    $region21: #{unet_conv_block.5} parent=5 // pred_check
      %p141 = pneg %p140
    $region22: #{unet_conv_block.5} parent=5 // pred_check_branch
      %143 = sbr.rel (%p141) target = $region24
    $region23: #{unet_conv_block.5} parent=5 // pred_region
      // Predicated region
      $region25: #{unet_conv_block.5} parent=23 // pred_check
        %p144 = pneg %p43
      $region26: #{unet_conv_block.5} parent=23 // pred_check_branch
        %146 = sbr.rel (%p144) target = $region28
      $region27: #{unet_conv_block.5} parent=23 // pred_region
        %s147 = smul.u32 8, %s17
        %p148 = scmp.lt.s32.totalorder %s16, 1
        %s149 = scalar_select %p148, %s16, 1
        %p150 = scmp.lt.s32.totalorder %s147, 15
        %s151 = scalar_select %p150, %s147, 15
        %s152 = smul.addr %s151, 2
        %s153 = smul.addr %s149, 32
        %s154 = sadd.s32 %s152, %s153
        %s155 = smul.addr %s154, 8
        %s156 = scalar_lea.vmem %s0, %s155
        %s157 = smul.u32 8, %s17
      $region28: #{unet_conv_block.5} parent=23 // pred_fallthru
        _
    $region24: #{unet_conv_block.5} parent=5 // pred_fallthru
      _
    %p158 = scmp.le.s32.totalorder 1, %s9
    %p159 = scmp.lt.s32.totalorder %s9, 5
    %p160 = pnand %p158, %p159
    %p161 = pneg %p160
    // Predicated region
    $region29: #{unet_conv_block.5} parent=5 // pred_check
      _
    $region30: #{unet_conv_block.5} parent=5 // pred_check_branch
      %163 = sbr.rel (%p160) target = $region32
    $region31: #{unet_conv_block.5} parent=5 // pred_region
      %s164 = ssub.s32 %s9, 1
      %s165 = smul.u32 8, %s19
      %p166 = scmp.lt.s32.totalorder %s18, 1
      %s167 = scalar_select %p166, %s18, 1
      %p168 = scmp.lt.s32.totalorder %s165, 15
      %s169 = scalar_select %p168, %s165, 15
      %s170 = smul.addr %s169, 2
      %s171 = smul.addr %s167, 32
      %s172 = sadd.s32 %s170, %s171
      %s173 = smul.addr %s172, 8
      %s174 = scalar_lea.vmem %s0, %s173
      %p175 = pneg %p49
      %p176 = pneg %p46
      %p177 = pneg %p70
      %p178 = pneg %p67
      %p179 = pneg %p91
      %p180 = pneg %p88
      %p181 = pneg %p119
      %p182 = pneg %p116
      %s183 = smul.u32 8, %s19
      %p184 = scmp.lt.s32.totalorder %s18, 1
      %s185 = scalar_select %p184, %s18, 1
      %p186 = scmp.lt.s32.totalorder %s183, 15
      %s187 = scalar_select %p186, %s183, 15
      %s188 = smul.addr %s187, 2
      %s189 = smul.addr %s185, 32
      %s190 = sadd.s32 %s188, %s189
      %s191 = smul.addr %s190, 8
      %s192 = scalar_lea.vmem %s3, %s191
      %s193 = smul.u32 8, %s19
      %p194 = scmp.lt.s32.totalorder %s18, 1
      %s195 = scalar_select %p194, %s18, 1
      %p196 = scmp.lt.s32.totalorder %s193, 15
      %s197 = scalar_select %p196, %s193, 15
      %s198 = smul.addr %s197, 2
      %s199 = smul.addr %s195, 32
      %s200 = sadd.s32 %s198, %s199
      %s201 = smul.addr %s200, 8
      %s202 = scalar_lea.vmem %s0, %s201
      %s203 = smul.u32 8, %s19
      %s204 = smul.u32 8, %s19
      %p205 = scmp.lt.s32.totalorder %s18, 1
      %s206 = scalar_select %p205, %s18, 1
      %p207 = scmp.lt.s32.totalorder %s204, 15
      %s208 = scalar_select %p207, %s204, 15
      %s209 = smul.addr %s208, 2
      %s210 = smul.addr %s206, 32
      %s211 = sadd.s32 %s209, %s210
      %s212 = smul.addr %s211, 8
      %s213 = scalar_lea.vmem %s3, %s212
      %s214 = smul.u32 8, %s19
      %v215 = vld [vmem:[%s202] sm:$0xff]
      %v216 = vld [vmem:[%s202 + $0x8] sm:$0xff]
      %v217 = vld [vmem:[%s202 + $0x10] sm:$0xff]
      %v218 = vld [vmem:[%s202 + $0x18] sm:$0xff]
      %v219 = vld [vmem:[%s202 + $0x20] sm:$0xff]
      %v220 = vld [vmem:[%s202 + $0x28] sm:$0xff]
      %v221 = vld [vmem:[%s202 + $0x30] sm:$0xff]
      %v222 = vld [vmem:[%s202 + $0x38] sm:$0xff]
      %v223 = vld [vmem:[%s202 + $0x40] sm:$0xff]
      %v224 = vld [vmem:[%s202 + $0x48] sm:$0xff]
      %v225 = vld [vmem:[%s202 + $0x50] sm:$0xff]
      %v226 = vld [vmem:[%s202 + $0x58] sm:$0xff]
      %v227 = vld [vmem:[%s202 + $0x60] sm:$0xff]
      %v228 = vld [vmem:[%s202 + $0x68] sm:$0xff]
      %v229 = vld [vmem:[%s202 + $0x70] sm:$0xff]
      %v230 = vld [vmem:[%s202 + $0x78] sm:$0xff]
      %v231 = vld [vmem:[%s1] sm:$0x1]
      %v233 = vlaneseq
      %v234 = vshrl.u32 %v233, 7
      %v235 = vsub.s32 0, %v234
      %v236 = vrot.slane %v231, %v235
      %v238 = vmul.f32 %v215, %v236
      %v239 = vmul.f32 %v216, %v236
      %v240 = vmul.f32 %v217, %v236
      %v241 = vmul.f32 %v218, %v236
      %v242 = vmul.f32 %v219, %v236
      %v243 = vmul.f32 %v220, %v236
      %v244 = vmul.f32 %v221, %v236
      %v245 = vmul.f32 %v222, %v236
      %v246 = vmul.f32 %v223, %v236
      %v247 = vmul.f32 %v224, %v236
      %v248 = vmul.f32 %v225, %v236
      %v249 = vmul.f32 %v226, %v236
      %v250 = vmul.f32 %v227, %v236
      %v251 = vmul.f32 %v228, %v236
      %v252 = vmul.f32 %v229, %v236
      %v253 = vmul.f32 %v230, %v236
      %v254 = vld [vmem:[%s2] sm:$0x1]
      %v256 = vlaneseq
      %v257 = vshrl.u32 %v256, 7
      %v258 = vsub.s32 0, %v257
      %v259 = vrot.slane %v254, %v258
      %v261 = vadd.f32 %v238, %v259
      %v262 = vadd.f32 %v239, %v259
      %v263 = vadd.f32 %v240, %v259
      %v264 = vadd.f32 %v241, %v259
      %v265 = vadd.f32 %v242, %v259
      %v266 = vadd.f32 %v243, %v259
      %v267 = vadd.f32 %v244, %v259
      %v268 = vadd.f32 %v245, %v259
      %v269 = vadd.f32 %v246, %v259
      %v270 = vadd.f32 %v247, %v259
      %v271 = vadd.f32 %v248, %v259
      %v272 = vadd.f32 %v249, %v259
      %v273 = vadd.f32 %v250, %v259
      %v274 = vadd.f32 %v251, %v259
      %v275 = vadd.f32 %v252, %v259
      %v276 = vadd.f32 %v253, %v259
      %vm277 = vcmask 64512
      %278 = vst.msk [vmem:[%s213] sm:$0xff] %vm277, %v261
      %279 = vst.msk [vmem:[%s213 + $0x8] sm:$0xff] %vm277, %v262
      %280 = vst.msk [vmem:[%s213 + $0x10] sm:$0xff] %vm277, %v263
      %281 = vst.msk [vmem:[%s213 + $0x18] sm:$0xff] %vm277, %v264
      %282 = vst.msk [vmem:[%s213 + $0x20] sm:$0xff] %vm277, %v265
      %283 = vst.msk [vmem:[%s213 + $0x28] sm:$0xff] %vm277, %v266
      %284 = vst.msk [vmem:[%s213 + $0x30] sm:$0xff] %vm277, %v267
      %285 = vst.msk [vmem:[%s213 + $0x38] sm:$0xff] %vm277, %v268
      %286 = vst.msk [vmem:[%s213 + $0x40] sm:$0xff] %vm277, %v269
      %287 = vst.msk [vmem:[%s213 + $0x48] sm:$0xff] %vm277, %v270
      %288 = vst.msk [vmem:[%s213 + $0x50] sm:$0xff] %vm277, %v271
      %289 = vst.msk [vmem:[%s213 + $0x58] sm:$0xff] %vm277, %v272
      %290 = vst.msk [vmem:[%s213 + $0x60] sm:$0xff] %vm277, %v273
      %291 = vst.msk [vmem:[%s213 + $0x68] sm:$0xff] %vm277, %v274
      %292 = vst.msk [vmem:[%s213 + $0x70] sm:$0xff] %vm277, %v275
      %293 = vst.msk [vmem:[%s213 + $0x78] sm:$0xff] %vm277, %v276
      %s294 = smul.u32 8, %s19
      %p295 = scmp.lt.s32.totalorder %s18, 1
      %s296 = scalar_select %p295, %s18, 1
      %p297 = scmp.lt.s32.totalorder %s294, 15
      %s298 = scalar_select %p297, %s294, 15
      %s299 = smul.addr %s298, 2
      %s300 = smul.addr %s296, 32
      %s301 = sadd.s32 %s299, %s300
      %s302 = smul.addr %s301, 8
      %s303 = scalar_lea.vmem %s3, %s302
      // Predicated region
      $region33: #{unet_conv_block.5} parent=31 // pred_check
        %p304 = pneg %p116
      $region34: #{unet_conv_block.5} parent=31 // pred_check_branch
        %306 = sbr.rel (%p304) target = $region36
      $region35: #{unet_conv_block.5} parent=31 // pred_region
        %s307 = smul.u32 8, %s19
      $region36: #{unet_conv_block.5} parent=31 // pred_fallthru
        _
    $region32: #{unet_conv_block.5} parent=5 // pred_fallthru
      _
    %p308 = scmp.le.s32.totalorder 2, %s9
    // Predicated region
    $region37: #{unet_conv_block.5} parent=5 // pred_check
      %p309 = pneg %p308
    $region38: #{unet_conv_block.5} parent=5 // pred_check_branch
      %311 = sbr.rel (%p309) target = $region40
    $region39: #{unet_conv_block.5} parent=5 // pred_region
      %s312 = ssub.s32 %s9, 2
      // Predicated region
      $region41: #{unet_conv_block.5} parent=39 // pred_check
        %p313 = pneg %p122
      $region42: #{unet_conv_block.5} parent=39 // pred_check_branch
        %315 = sbr.rel (%p313) target = $region44
      $region43: #{unet_conv_block.5} parent=39 // pred_region
        %s316 = smul.u32 8, %s21
        %p317 = scmp.lt.s32.totalorder %s20, 1
        %s318 = scalar_select %p317, %s20, 1
        %p319 = scmp.lt.s32.totalorder %s316, 15
        %s320 = scalar_select %p319, %s316, 15
        %s321 = smul.addr %s320, 2
        %s322 = smul.addr %s318, 32
        %s323 = sadd.s32 %s321, %s322
        %s324 = smul.addr %s323, 8
        %s325 = scalar_lea.vmem %s3, %s324
      $region44: #{unet_conv_block.5} parent=39 // pred_fallthru
        _
    $region40: #{unet_conv_block.5} parent=5 // pred_fallthru
      _
  $region6: #{unet_conv_block.5} parent=0 // loop_footer
    %s13 = sadd.s32 1, %s9
  $region7: #{unet_conv_block.5} parent=0 // loop_footer_branch
    %8 = sbr.rel target = $region3
  $region8: #{unet_conv_block.5} parent=0 // loop_exit
    _

// kernel: unet_conv_block.3
$region0: #{unet_conv_block.3}
  #allocation0 [shape = 'u32[]', space=smem, size = 0x4, offset = 0x4, fixed_abs, tag = 'smem constant byte address 0x4 - core index']
  #allocation1 [shape = 'u32[144,128]{1,0:T(1,128)}', space=vmem, size = 0x12000, scoped, tag = 'internal scratch']
  %s0 = inlined_call_operand.vmem [shape: bf16[2,16,16,128], index: 0, kind: input, shape index: {}]
  %s1 = inlined_call_operand.vmem [shape: bf16[128,128], index: 1, kind: input, shape index: {}]
  %s2 = inlined_call_operand.vmem [shape: bf16[2,16,16,128], index: 2, kind: output, shape index: {0}]
  %s3 = inlined_call_operand.vmem [shape: f32[2,2,1,128], index: 3, kind: output, shape index: {1}]
  %s4 = inlined_call_operand.vmem [shape: f32[2,2,1,128], index: 4, kind: output, shape index: {2}]
  %5 = xla_tuple %s2, %s3, %s4
  %s6 = sld [smem:[#allocation0]]
  $region57: #{unet_conv_block.3} parent=0
    _
  %s8 = ssub.s32 1, %s6
  %s9 = scalar_select 0, %s8, %s6
  loop: start=0, step=1, limit=6
  $region2: #{unet_conv_block.3} parent=0 // loop_pre_header
    _
  $region3: #{unet_conv_block.3} parent=0 // loop_header
    %s11 = sphi 0, %s15
    %p12 = scmp.ge.s32.totalorder %s11, 6
    %s18 = sphi 0, %s30
    %s19 = sphi 0, %s26
    %s20 = sphi 0, %s18
    %s21 = sphi 0, %s19
    %s22 = sphi 0, %s20
    %s23 = sphi 0, %s21
    %s35 = sphi 0, %s37
    %s38 = sphi 0, %s35
    %s39 = sphi 0, %s38
    %s55 = sphi 0, %s39
    %s59 = sphi 0, %s59
    %s61 = sphi 0, %s59
    %s62 = sphi 0, %s61
    %s76 = sphi 0, %s62
    %s84 = sphi 0, %s86
    %s87 = sphi 0, %s84
    %s88 = sphi 0, %s87
    %s104 = sphi 0, %s88
    %s112 = sphi 0, %s114
    %s115 = sphi 0, %s112
    %s116 = sphi 0, %s115
    %s132 = sphi 0, %s116
    %s140 = sphi 0, %s142
    %s143 = sphi 0, %s140
    %s144 = sphi 0, %s143
    %s160 = sphi 0, %s144
  $region4: #{unet_conv_block.3} parent=0 // loop_header_branch
    %14 = sbr.rel (%p12) target = $region8
  $region5: #{unet_conv_block.3} parent=0 // loop_body
    %s16 = ssub.s32 %s11, 1
    %s17 = ssub.s32 %s11, 2
    %s24 = sadd.s32 1, %s19
    %p25 = scmp.ge.s32.totalorder %s24, 2
    %s26 = scalar_select %p25, 0, %s24
    %s27 = sadd.s32 1, %s18
    %s28 = scalar_select %p25, %s27, %s18
    %p29 = scmp.ge.s32.totalorder %s28, 2
    %s30 = scalar_select %p29, 0, %s28
    %s31 = ssub.s32 %s18, %s30
    %s32 = ssub.s32 %s19, %s26
    %s33 = sor.u32 %s31, %s32
    %p34 = scmp.eq.s32.totalorder %s33, 0
    %s36 = sadd.s32 %s35, 1
    %s37 = scalar_select %p34, %s35, %s36
    %p40 = pneg %p34
    %p41 = scmp.eq.s32.totalorder %s11, 3
    %p42 = por %p40, %p41
    %p43 = scmp.ne.s32.totalorder %s35, %s38
    %p44 = scmp.eq.s32.totalorder %s11, 0
    %p45 = por %p43, %p44
    %p46 = scmp.ne.s32.totalorder %s35, %s38
    %p47 = scmp.eq.s32.totalorder %s16, 3
    %p48 = por %p46, %p47
    %p49 = scmp.ne.s32.totalorder %s38, %s39
    %p50 = scmp.eq.s32.totalorder %s16, 0
    %p51 = por %p49, %p50
    %p52 = scmp.ne.s32.totalorder %s38, %s39
    %p53 = scmp.eq.s32.totalorder %s17, 3
    %p54 = por %p52, %p53
    %p56 = scmp.ne.s32.totalorder %s39, %s55
    %p57 = scmp.eq.s32.totalorder %s17, 0
    %p58 = por %p56, %p57
    %s60 = sadd.s32 %s59, 1
    %p63 = scmp.eq.s32.totalorder %s11, 3
    %p64 = scmp.ne.s32.totalorder %s59, %s61
    %p65 = scmp.eq.s32.totalorder %s11, 0
    %p66 = por %p64, %p65
    %p67 = scmp.ne.s32.totalorder %s59, %s61
    %p68 = scmp.eq.s32.totalorder %s16, 3
    %p69 = por %p67, %p68
    %p70 = scmp.ne.s32.totalorder %s61, %s62
    %p71 = scmp.eq.s32.totalorder %s16, 0
    %p72 = por %p70, %p71
    %p73 = scmp.ne.s32.totalorder %s61, %s62
    %p74 = scmp.eq.s32.totalorder %s17, 3
    %p75 = por %p73, %p74
    %p77 = scmp.ne.s32.totalorder %s62, %s76
    %p78 = scmp.eq.s32.totalorder %s17, 0
    %p79 = por %p77, %p78
    %s80 = ssub.s32 %s18, %s30
    %s81 = ssub.s32 %s19, %s26
    %s82 = sor.u32 %s80, %s81
    %p83 = scmp.eq.s32.totalorder %s82, 0
    %s85 = sadd.s32 %s84, 1
    %s86 = scalar_select %p83, %s84, %s85
    %p89 = pneg %p83
    %p90 = scmp.eq.s32.totalorder %s11, 3
    %p91 = por %p89, %p90
    %p92 = scmp.ne.s32.totalorder %s84, %s87
    %p93 = scmp.eq.s32.totalorder %s11, 0
    %p94 = por %p92, %p93
    %p95 = scmp.ne.s32.totalorder %s84, %s87
    %p96 = scmp.eq.s32.totalorder %s16, 3
    %p97 = por %p95, %p96
    %p98 = scmp.ne.s32.totalorder %s87, %s88
    %p99 = scmp.eq.s32.totalorder %s16, 0
    %p100 = por %p98, %p99
    %p101 = scmp.ne.s32.totalorder %s87, %s88
    %p102 = scmp.eq.s32.totalorder %s17, 3
    %p103 = por %p101, %p102
    %p105 = scmp.ne.s32.totalorder %s88, %s104
    %p106 = scmp.eq.s32.totalorder %s17, 0
    %p107 = por %p105, %p106
    %s108 = ssub.s32 %s18, %s30
    %s109 = ssub.s32 %s19, %s26
    %s110 = sor.u32 %s108, %s109
    %p111 = scmp.eq.s32.totalorder %s110, 0
    %s113 = sadd.s32 %s112, 1
    %s114 = scalar_select %p111, %s112, %s113
    %p117 = pneg %p111
    %p118 = scmp.eq.s32.totalorder %s11, 3
    %p119 = por %p117, %p118
    %p120 = scmp.ne.s32.totalorder %s112, %s115
    %p121 = scmp.eq.s32.totalorder %s11, 0
    %p122 = por %p120, %p121
    %p123 = scmp.ne.s32.totalorder %s112, %s115
    %p124 = scmp.eq.s32.totalorder %s16, 3
    %p125 = por %p123, %p124
    %p126 = scmp.ne.s32.totalorder %s115, %s116
    %p127 = scmp.eq.s32.totalorder %s16, 0
    %p128 = por %p126, %p127
    %p129 = scmp.ne.s32.totalorder %s115, %s116
    %p130 = scmp.eq.s32.totalorder %s17, 3
    %p131 = por %p129, %p130
    %p133 = scmp.ne.s32.totalorder %s116, %s132
    %p134 = scmp.eq.s32.totalorder %s17, 0
    %p135 = por %p133, %p134
    %s136 = ssub.s32 %s18, %s30
    %s137 = ssub.s32 %s19, %s26
    %s138 = sor.u32 %s136, %s137
    %p139 = scmp.eq.s32.totalorder %s138, 0
    %s141 = sadd.s32 %s140, 1
    %s142 = scalar_select %p139, %s140, %s141
    %p145 = pneg %p139
    %p146 = scmp.eq.s32.totalorder %s11, 3
    %p147 = por %p145, %p146
    %p148 = scmp.ne.s32.totalorder %s140, %s143
    %p149 = scmp.eq.s32.totalorder %s11, 0
    %p150 = por %p148, %p149
    %p151 = scmp.ne.s32.totalorder %s140, %s143
    %p152 = scmp.eq.s32.totalorder %s16, 3
    %p153 = por %p151, %p152
    %p154 = scmp.ne.s32.totalorder %s143, %s144
    %p155 = scmp.eq.s32.totalorder %s16, 0
    %p156 = por %p154, %p155
    %p157 = scmp.ne.s32.totalorder %s143, %s144
    %p158 = scmp.eq.s32.totalorder %s17, 3
    %p159 = por %p157, %p158
    %p161 = scmp.ne.s32.totalorder %s144, %s160
    %p162 = scmp.eq.s32.totalorder %s17, 0
    %p163 = por %p161, %p162
    %p164 = scmp.le.s32.totalorder 1, %s11
    %p165 = scmp.lt.s32.totalorder %s11, 5
    %p166 = pnand %p164, %p165
    %p167 = pneg %p166
    // Predicated region
    $region9: #{unet_conv_block.3} parent=5 // pred_check
      _
    $region10: #{unet_conv_block.3} parent=5 // pred_check_branch
      %169 = sbr.rel (%p166) target = $region12
    $region11: #{unet_conv_block.3} parent=5 // pred_region
      %s170 = ssub.s32 %s11, 1
      // Predicated region
      $region13: #{unet_conv_block.3} parent=11 // pred_check
        %p171 = pneg %p72
      $region14: #{unet_conv_block.3} parent=11 // pred_check_branch
        %173 = sbr.rel (%p171) target = $region16
      $region15: #{unet_conv_block.3} parent=11 // pred_region
        _
      $region16: #{unet_conv_block.3} parent=11 // pred_fallthru
        _
    $region12: #{unet_conv_block.3} parent=5 // pred_fallthru
      _
    %p174 = scmp.lt.s32.totalorder %s11, 4
    // Predicated region
    $region17: #{unet_conv_block.3} parent=5 // pred_check
      %p175 = pneg %p174
    $region18: #{unet_conv_block.3} parent=5 // pred_check_branch
      %177 = sbr.rel (%p175) target = $region20
    $region19: #{unet_conv_block.3} parent=5 // pred_region
      // Predicated region
      $region21: #{unet_conv_block.3} parent=19 // pred_check
        %p178 = pneg %p45
      $region22: #{unet_conv_block.3} parent=19 // pred_check_branch
        %180 = sbr.rel (%p178) target = $region24
      $region23: #{unet_conv_block.3} parent=19 // pred_region
        %s181 = smul.u32 8, %s19
        %p182 = scmp.lt.s32.totalorder %s18, 1
        %s183 = scalar_select %p182, %s18, 1
        %p184 = scmp.lt.s32.totalorder %s181, 15
        %s185 = scalar_select %p184, %s181, 15
        %s186 = smul.addr %s185, 2
        %s187 = smul.addr %s183, 32
        %s188 = sadd.s32 %s186, %s187
        %s189 = smul.addr %s188, 4
        %s190 = scalar_lea.vmem %s0, %s189
        %s191 = smul.u32 8, %s19
      $region24: #{unet_conv_block.3} parent=19 // pred_fallthru
        _
    $region20: #{unet_conv_block.3} parent=5 // pred_fallthru
      _
    %p192 = scmp.le.s32.totalorder 1, %s11
    %p193 = scmp.lt.s32.totalorder %s11, 5
    %p194 = pnand %p192, %p193
    %p195 = pneg %p194
    // Predicated region
    $region25: #{unet_conv_block.3} parent=5 // pred_check
      _
    $region26: #{unet_conv_block.3} parent=5 // pred_check_branch
      %197 = sbr.rel (%p194) target = $region28
    $region27: #{unet_conv_block.3} parent=5 // pred_region
      %s198 = ssub.s32 %s11, 1
      %s199 = smul.u32 8, %s21
      %p200 = scmp.lt.s32.totalorder %s20, 1
      %s201 = scalar_select %p200, %s20, 1
      %p202 = scmp.lt.s32.totalorder %s199, 15
      %s203 = scalar_select %p202, %s199, 15
      %s204 = smul.addr %s203, 2
      %s205 = smul.addr %s201, 32
      %s206 = sadd.s32 %s204, %s205
      %s207 = smul.addr %s206, 4
      %s208 = scalar_lea.vmem %s0, %s207
      %p209 = pneg %p51
      %p210 = pneg %p48
      %p211 = pneg %p72
      %p212 = pneg %p69
      %p213 = pneg %p100
      %p214 = pneg %p97
      %s215 = smul.u32 8, %s21
      %p216 = scmp.lt.s32.totalorder %s20, 1
      %s217 = scalar_select %p216, %s20, 1
      %p218 = scmp.lt.s32.totalorder %s215, 15
      %s219 = scalar_select %p218, %s215, 15
      %s220 = smul.addr %s219, 2
      %s221 = smul.addr %s217, 32
      %s222 = sadd.s32 %s220, %s221
      %s223 = smul.addr %s222, 4
      %s224 = scalar_lea.vmem %s2, %s223
      %p225 = pneg %p128
      %p226 = pneg %p125
      %p227 = scmp.lt.s32.totalorder %s20, 1
      %s228 = scalar_select %p227, %s20, 1
      %p229 = scmp.lt.s32.totalorder %s21, 1
      %s230 = scalar_select %p229, %s21, 1
      %s231 = smul.addr %s228, 2
      %s232 = sadd.s32 %s230, %s231
      %s233 = scalar_lea.vmem %s3, %s232
      %p234 = pneg %p156
      %p235 = pneg %p153
      %p236 = scmp.lt.s32.totalorder %s20, 1
      %s237 = scalar_select %p236, %s20, 1
      %p238 = scmp.lt.s32.totalorder %s21, 1
      %s239 = scalar_select %p238, %s21, 1
      %s240 = smul.addr %s237, 2
      %s241 = sadd.s32 %s239, %s240
      %s242 = scalar_lea.vmem %s4, %s241
      %s243 = smul.u32 8, %s21
      %p244 = scmp.lt.s32.totalorder %s20, 1
      %s245 = scalar_select %p244, %s20, 1
      %p246 = scmp.lt.s32.totalorder %s243, 15
      %s247 = scalar_select %p246, %s243, 15
      %s248 = smul.addr %s247, 2
      %s249 = smul.addr %s245, 32
      %s250 = sadd.s32 %s248, %s249
      %s251 = smul.addr %s250, 4
      %s252 = scalar_lea.vmem %s0, %s251
      %s253 = smul.u32 8, %s21
      %s254 = smul.u32 8, %s21
      %p255 = scmp.lt.s32.totalorder %s20, 1
      %s256 = scalar_select %p255, %s20, 1
      %p257 = scmp.lt.s32.totalorder %s254, 15
      %s258 = scalar_select %p257, %s254, 15
      %s259 = smul.addr %s258, 2
      %s260 = smul.addr %s256, 32
      %s261 = sadd.s32 %s259, %s260
      %s262 = smul.addr %s261, 4
      %s263 = scalar_lea.vmem %s2, %s262
      %s264 = smul.u32 8, %s21
      %p265 = scmp.lt.s32.totalorder %s20, 1
      %s266 = scalar_select %p265, %s20, 1
      %p267 = scmp.lt.s32.totalorder %s21, 1
      %s268 = scalar_select %p267, %s21, 1
      %s269 = smul.addr %s266, 2
      %s270 = sadd.s32 %s268, %s269
      %s271 = scalar_lea.vmem %s3, %s270
      %p272 = scmp.lt.s32.totalorder %s20, 1
      %s273 = scalar_select %p272, %s20, 1
      %p274 = scmp.lt.s32.totalorder %s21, 1
      %s275 = scalar_select %p274, %s21, 1
      %s276 = smul.addr %s273, 2
      %s277 = sadd.s32 %s275, %s276
      %s278 = scalar_lea.vmem %s4, %s277
      %v280 = vld [vmem:[%s252] sm:$0xf]
      %v281 = vld [vmem:[%s252 + $0x4] sm:$0xf]
      %v282 = vld [vmem:[%s252 + $0x8] sm:$0xf]
      %v283 = vld [vmem:[%s252 + $0xc] sm:$0xf]
      %v284 = vld [vmem:[%s252 + $0x10] sm:$0xf]
      %v285 = vld [vmem:[%s252 + $0x14] sm:$0xf]
      %v286 = vld [vmem:[%s252 + $0x18] sm:$0xf]
      %v287 = vld [vmem:[%s252 + $0x1c] sm:$0xf]
      %v288 = vld [vmem:[%s252 + $0x20] sm:$0xf]
      %v289 = vld [vmem:[%s252 + $0x24] sm:$0xf]
      %v290 = vld [vmem:[%s252 + $0x28] sm:$0xf]
      %v291 = vld [vmem:[%s252 + $0x2c] sm:$0xf]
      %v292 = vld [vmem:[%s252 + $0x30] sm:$0xf]
      %v293 = vld [vmem:[%s252 + $0x34] sm:$0xf]
      %v294 = vld [vmem:[%s252 + $0x38] sm:$0xf]
      %v295 = vld [vmem:[%s252 + $0x3c] sm:$0xf]
      %v296 = vld [vmem:[%s1] sm:$0xf]
      %v297 = vld [vmem:[%s1 + $0x4] sm:$0xf]
      %v298 = vld [vmem:[%s1 + $0x8] sm:$0xf]
      %v299 = vld [vmem:[%s1 + $0xc] sm:$0xf]
      %v300 = vld [vmem:[%s1 + $0x10] sm:$0xf]
      %v301 = vld [vmem:[%s1 + $0x14] sm:$0xf]
      %v302 = vld [vmem:[%s1 + $0x18] sm:$0xf]
      %v303 = vld [vmem:[%s1 + $0x1c] sm:$0xf]
      %v304 = vld [vmem:[%s1 + $0x20] sm:$0xf]
      %v305 = vld [vmem:[%s1 + $0x24] sm:$0xf]
      %v306 = vld [vmem:[%s1 + $0x28] sm:$0xf]
      %v307 = vld [vmem:[%s1 + $0x2c] sm:$0xf]
      %v308 = vld [vmem:[%s1 + $0x30] sm:$0xf]
      %v309 = vld [vmem:[%s1 + $0x34] sm:$0xf]
      %v310 = vld [vmem:[%s1 + $0x38] sm:$0xf]
      %v311 = vld [vmem:[%s1 + $0x3c] sm:$0xf]
      %v328 = vunpack.c.l.b16 %v280
      %v329 = vunpack.c.l.b16 %v281
      %v330 = vunpack.c.l.b16 %v282
      %v331 = vunpack.c.l.b16 %v283
      %v332 = vunpack.c.l.b16 %v284
      %v333 = vunpack.c.l.b16 %v285
      %v334 = vunpack.c.l.b16 %v286
      %v335 = vunpack.c.l.b16 %v287
      %v336 = vunpack.c.l.b16 %v288
      %v337 = vunpack.c.l.b16 %v289
      %v338 = vunpack.c.l.b16 %v290
      %v339 = vunpack.c.l.b16 %v291
      %v340 = vunpack.c.l.b16 %v292
      %v341 = vunpack.c.l.b16 %v293
      %v342 = vunpack.c.l.b16 %v294
      %v343 = vunpack.c.l.b16 %v295
      %v344 = vpack.c.b16 %v329, %v328
      %v345 = vpack.c.b16 %v331, %v330
      %v346 = vpack.c.b16 %v333, %v332
      %v347 = vpack.c.b16 %v335, %v334
      %v348 = vpack.c.b16 %v337, %v336
      %v349 = vpack.c.b16 %v339, %v338
      %v350 = vpack.c.b16 %v341, %v340
      %v351 = vpack.c.b16 %v343, %v342
      %v376 = vunpack.c.l.b16 %v296
      %v377 = vunpack.c.l.b16 %v297
      %v378 = vunpack.c.l.b16 %v298
      %v379 = vunpack.c.l.b16 %v299
      %v380 = vunpack.c.l.b16 %v300
      %v381 = vunpack.c.l.b16 %v301
      %v382 = vunpack.c.l.b16 %v302
      %v383 = vunpack.c.l.b16 %v303
      %v384 = vunpack.c.l.b16 %v304
      %v385 = vunpack.c.l.b16 %v305
      %v386 = vunpack.c.l.b16 %v306
      %v387 = vunpack.c.l.b16 %v307
      %v388 = vunpack.c.l.b16 %v308
      %v389 = vunpack.c.l.b16 %v309
      %v390 = vunpack.c.l.b16 %v310
      %v391 = vunpack.c.l.b16 %v311
      %v392 = vpack.c.b16 %v377, %v376
      %v393 = vpack.c.b16 %v379, %v378
      %v394 = vpack.c.b16 %v381, %v380
      %v395 = vpack.c.b16 %v383, %v382
      %v396 = vpack.c.b16 %v385, %v384
      %v397 = vpack.c.b16 %v387, %v386
      %v398 = vpack.c.b16 %v389, %v388
      %v399 = vpack.c.b16 %v391, %v390
      %408 = vmatprep.subr.bf16.mxu0 0
      %409 = vmatpush1.bf16.msra.mxu0 %v392
      %410 = vmatprep.subr.bf16.mxu0 0
      %411 = vmatpush1.bf16.msra.mxu0 %v393
      %412 = vmatprep.subr.bf16.mxu0 0
      %413 = vmatpush1.bf16.msra.mxu0 %v394
      %414 = vmatprep.subr.bf16.mxu0 0
      %415 = vmatpush1.bf16.msra.mxu0 %v395
      %416 = vmatprep.subr.bf16.mxu0 0
      %417 = vmatpush1.bf16.msra.mxu0 %v396
      %418 = vmatprep.subr.bf16.mxu0 0
      %419 = vmatpush1.bf16.msra.mxu0 %v397
      %420 = vmatprep.subr.bf16.mxu0 0
      %421 = vmatpush1.bf16.msra.mxu0 %v398
      %422 = vmatprep.subr.bf16.mxu0 0
      %423 = vmatpush1.bf16.msra.mxu0 %v399
      %424 = vmatprep.subr.bf16.mxu0 0
      %425 = vmatpush1.bf16.msra.mxu0 0
      %426 = vmatprep.subr.bf16.mxu0 0
      %427 = vmatpush1.bf16.msra.mxu0 0
      %428 = vmatprep.subr.bf16.mxu0 0
      %429 = vmatpush1.bf16.msra.mxu0 0
      %430 = vmatprep.subr.bf16.mxu0 0
      %431 = vmatpush1.bf16.msra.mxu0 0
      %432 = vmatprep.subr.bf16.mxu0 0
      %433 = vmatpush1.bf16.msra.mxu0 0
      %434 = vmatprep.subr.bf16.mxu0 0
      %435 = vmatpush1.bf16.msra.mxu0 0
      %436 = vmatprep.subr.bf16.mxu0 0
      %437 = vmatpush1.bf16.msra.mxu0 0
      %438 = vmatprep.subr.bf16.mxu0 0
      %439 = vmatpush1.bf16.msra.mxu0 0
      %440 = vmatprep.mubr.bf16.mxu0 0
      %441 = vmatmul.mubr.bf16.gmra.mrb[0].mxu0 %v344
      %v442 = vpop.f32.mrb[0].mxu0
      %v443 = vadd.f32 0.0, %v442
      %v444 = vpop.f32.mrb[0].mxu0
      %v445 = vpop.f32.mrb[0].mxu0
      %v446 = vadd.f32 0.0, %v445
      %v447 = vpop.f32.mrb[0].mxu0
      %448 = vmatprep.mubr.bf16.mxu0 0
      %449 = vmatmul.mubr.bf16.gmra.mrb[0].mxu0 %v345
      %v450 = vpop.f32.mrb[0].mxu0
      %v451 = vadd.f32 0.0, %v450
      %v452 = vpop.f32.mrb[0].mxu0
      %v453 = vpop.f32.mrb[0].mxu0
      %v454 = vadd.f32 0.0, %v453
      %v455 = vpop.f32.mrb[0].mxu0
      %456 = vmatprep.mubr.bf16.mxu0 0
      %457 = vmatmul.mubr.bf16.gmra.mrb[0].mxu0 %v346
      %v458 = vpop.f32.mrb[0].mxu0
      %v459 = vadd.f32 0.0, %v458
      %v460 = vpop.f32.mrb[0].mxu0
      %v461 = vpop.f32.mrb[0].mxu0
      %v462 = vadd.f32 0.0, %v461
      %v463 = vpop.f32.mrb[0].mxu0
      %464 = vmatprep.mubr.bf16.mxu0 0
      %465 = vmatmul.mubr.bf16.gmra.mrb[0].mxu0 %v347
      %v466 = vpop.f32.mrb[0].mxu0
      %v467 = vadd.f32 0.0, %v466
      %v468 = vpop.f32.mrb[0].mxu0
      %v469 = vpop.f32.mrb[0].mxu0
      %v470 = vadd.f32 0.0, %v469
      %v471 = vpop.f32.mrb[0].mxu0
      %472 = vmatprep.mubr.bf16.mxu0 0
      %473 = vmatmul.mubr.bf16.gmra.mrb[0].mxu0 %v348
      %v474 = vpop.f32.mrb[0].mxu0
      %v475 = vadd.f32 0.0, %v474
      %v476 = vpop.f32.mrb[0].mxu0
      %v477 = vpop.f32.mrb[0].mxu0
      %v478 = vadd.f32 0.0, %v477
      %v479 = vpop.f32.mrb[0].mxu0
      %480 = vmatprep.mubr.bf16.mxu0 0
      %481 = vmatmul.mubr.bf16.gmra.mrb[0].mxu0 %v349
      %v482 = vpop.f32.mrb[0].mxu0
      %v483 = vadd.f32 0.0, %v482
      %v484 = vpop.f32.mrb[0].mxu0
      %v485 = vpop.f32.mrb[0].mxu0
      %v486 = vadd.f32 0.0, %v485
      %v487 = vpop.f32.mrb[0].mxu0
      %488 = vmatprep.mubr.bf16.mxu0 0
      %489 = vmatmul.mubr.bf16.gmra.mrb[0].mxu0 %v350
      %v490 = vpop.f32.mrb[0].mxu0
      %v491 = vadd.f32 0.0, %v490
      %v492 = vpop.f32.mrb[0].mxu0
      %v493 = vpop.f32.mrb[0].mxu0
      %v494 = vadd.f32 0.0, %v493
      %v495 = vpop.f32.mrb[0].mxu0
      %496 = vmatprep.mubr.bf16.mxu0 0
      %497 = vmatmul.mubr.bf16.gmra.mrb[0].mxu0 %v351
      %v498 = vpop.f32.mrb[0].mxu0
      %v499 = vadd.f32 0.0, %v498
      %v500 = vpop.f32.mrb[0].mxu0
      %v501 = vpop.f32.mrb[0].mxu0
      %v502 = vadd.f32 0.0, %v501
      %v503 = vpop.f32.mrb[0].mxu0
      %504 = vdwg.mxu0
      %v505 = vmax.f32 %v443, 0.0
      %v506 = vmax.f32 %v446, 0.0
      %v507 = vmax.f32 %v451, 0.0
      %v508 = vmax.f32 %v454, 0.0
      %v509 = vmax.f32 %v459, 0.0
      %v510 = vmax.f32 %v462, 0.0
      %v511 = vmax.f32 %v467, 0.0
      %v512 = vmax.f32 %v470, 0.0
      %v513 = vmax.f32 %v475, 0.0
      %v514 = vmax.f32 %v478, 0.0
      %v515 = vmax.f32 %v483, 0.0
      %v516 = vmax.f32 %v486, 0.0
      %v517 = vmax.f32 %v491, 0.0
      %v518 = vmax.f32 %v494, 0.0
      %v519 = vmax.f32 %v499, 0.0
      %v520 = vmax.f32 %v502, 0.0
      %v521 = vadd.f32 %v505, %v506
      %v522 = vadd.f32 %v521, %v507
      %v523 = vadd.f32 %v522, %v508
      %v524 = vadd.f32 %v523, %v509
      %v525 = vadd.f32 %v524, %v510
      %v526 = vadd.f32 %v525, %v511
      %v527 = vadd.f32 %v526, %v512
      %v528 = vadd.f32 %v527, %v513
      %v529 = vadd.f32 %v528, %v514
      %v530 = vadd.f32 %v529, %v515
      %v531 = vadd.f32 %v530, %v516
      %v532 = vadd.f32 %v531, %v517
      %v533 = vadd.f32 %v532, %v518
      %v534 = vadd.f32 %v533, %v519
      %v535 = vadd.f32 %v534, %v520
      %v536 = vrot.slane %v535, 4
      %v537 = vadd.f32 %v535, %v536
      %v538 = vrot.slane %v537, 2
      %v539 = vadd.f32 %v537, %v538
      %v540 = vrot.slane %v539, 1
      %v541 = vadd.f32 %v539, %v540
      %542 = vst [vmem:[%s271] sm:$0x1] %v541
      %v543 = vmul.f32 %v505, %v505
      %v544 = vmul.f32 %v506, %v506
      %v545 = vmul.f32 %v507, %v507
      %v546 = vmul.f32 %v508, %v508
      %v547 = vmul.f32 %v509, %v509
      %v548 = vmul.f32 %v510, %v510
      %v549 = vmul.f32 %v511, %v511
      %v550 = vmul.f32 %v512, %v512
      %v551 = vmul.f32 %v513, %v513
      %v552 = vmul.f32 %v514, %v514
      %v553 = vmul.f32 %v515, %v515
      %v554 = vmul.f32 %v516, %v516
      %v555 = vmul.f32 %v517, %v517
      %v556 = vmul.f32 %v518, %v518
      %v557 = vmul.f32 %v519, %v519
      %v558 = vmul.f32 %v520, %v520
      %v559 = vadd.f32 %v543, %v544
      %v560 = vadd.f32 %v559, %v545
      %v561 = vadd.f32 %v560, %v546
      %v562 = vadd.f32 %v561, %v547
      %v563 = vadd.f32 %v562, %v548
      %v564 = vadd.f32 %v563, %v549
      %v565 = vadd.f32 %v564, %v550
      %v566 = vadd.f32 %v565, %v551
      %v567 = vadd.f32 %v566, %v552
      %v568 = vadd.f32 %v567, %v553
      %v569 = vadd.f32 %v568, %v554
      %v570 = vadd.f32 %v569, %v555
      %v571 = vadd.f32 %v570, %v556
      %v572 = vadd.f32 %v571, %v557
      %v573 = vadd.f32 %v572, %v558
      %v574 = vrot.slane %v573, 4
      %v575 = vadd.f32 %v573, %v574
      %v576 = vrot.slane %v575, 2
      %v577 = vadd.f32 %v575, %v576
      %v578 = vrot.slane %v577, 1
      %v579 = vadd.f32 %v577, %v578
      %580 = vst [vmem:[%s278] sm:$0x1] %v579
      %v581 = vpack.c.bf16 %v506, %v505
      %v582 = vpack.c.bf16 %v508, %v507
      %v583 = vpack.c.bf16 %v510, %v509
      %v584 = vpack.c.bf16 %v512, %v511
      %v585 = vpack.c.bf16 %v514, %v513
      %v586 = vpack.c.bf16 %v516, %v515
      %v587 = vpack.c.bf16 %v518, %v517
      %v588 = vpack.c.bf16 %v520, %v519
      %v597 = vunpack.c.l.b16 %v581
      %v598 = vunpack.c.h.b16 %v581
      %v599 = vunpack.c.l.b16 %v582
      %v600 = vunpack.c.h.b16 %v582
      %v601 = vunpack.c.l.b16 %v583
      %v602 = vunpack.c.h.b16 %v583
      %v603 = vunpack.c.l.b16 %v584
      %v604 = vunpack.c.h.b16 %v584
      %v605 = vunpack.c.l.b16 %v585
      %v606 = vunpack.c.h.b16 %v585
      %v607 = vunpack.c.l.b16 %v586
      %v608 = vunpack.c.h.b16 %v586
      %v609 = vunpack.c.l.b16 %v587
      %v610 = vunpack.c.h.b16 %v587
      %v611 = vunpack.c.l.b16 %v588
      %v612 = vunpack.c.h.b16 %v588
      %v613 = vpack.c.b16 %v597, %v597
      %v614 = vpack.c.b16 %v598, %v598
      %v615 = vpack.c.b16 %v599, %v599
      %v616 = vpack.c.b16 %v600, %v600
      %v617 = vpack.c.b16 %v601, %v601
      %v618 = vpack.c.b16 %v602, %v602
      %v619 = vpack.c.b16 %v603, %v603
      %v620 = vpack.c.b16 %v604, %v604
      %v621 = vpack.c.b16 %v605, %v605
      %v622 = vpack.c.b16 %v606, %v606
      %v623 = vpack.c.b16 %v607, %v607
      %v624 = vpack.c.b16 %v608, %v608
      %v625 = vpack.c.b16 %v609, %v609
      %v626 = vpack.c.b16 %v610, %v610
      %v627 = vpack.c.b16 %v611, %v611
      %v628 = vpack.c.b16 %v612, %v612
      %645 = vst [vmem:[%s263] sm:$0xf] %v613
      %646 = vst [vmem:[%s263 + $0x4] sm:$0xf] %v614
      %647 = vst [vmem:[%s263 + $0x8] sm:$0xf] %v615
      %648 = vst [vmem:[%s263 + $0xc] sm:$0xf] %v616
      %649 = vst [vmem:[%s263 + $0x10] sm:$0xf] %v617
      %650 = vst [vmem:[%s263 + $0x14] sm:$0xf] %v618
      %651 = vst [vmem:[%s263 + $0x18] sm:$0xf] %v619
      %652 = vst [vmem:[%s263 + $0x1c] sm:$0xf] %v620
      %653 = vst [vmem:[%s263 + $0x20] sm:$0xf] %v621
      %654 = vst [vmem:[%s263 + $0x24] sm:$0xf] %v622
      %655 = vst [vmem:[%s263 + $0x28] sm:$0xf] %v623
      %656 = vst [vmem:[%s263 + $0x2c] sm:$0xf] %v624
      %657 = vst [vmem:[%s263 + $0x30] sm:$0xf] %v625
      %658 = vst [vmem:[%s263 + $0x34] sm:$0xf] %v626
      %659 = vst [vmem:[%s263 + $0x38] sm:$0xf] %v627
      %660 = vst [vmem:[%s263 + $0x3c] sm:$0xf] %v628
      %s661 = smul.u32 8, %s21
      %p662 = scmp.lt.s32.totalorder %s20, 1
      %s663 = scalar_select %p662, %s20, 1
      %p664 = scmp.lt.s32.totalorder %s661, 15
      %s665 = scalar_select %p664, %s661, 15
      %s666 = smul.addr %s665, 2
      %s667 = smul.addr %s663, 32
      %s668 = sadd.s32 %s666, %s667
      %s669 = smul.addr %s668, 4
      %s670 = scalar_lea.vmem %s2, %s669
      %p671 = scmp.lt.s32.totalorder %s20, 1
      %s672 = scalar_select %p671, %s20, 1
      %p673 = scmp.lt.s32.totalorder %s21, 1
      %s674 = scalar_select %p673, %s21, 1
      %s675 = smul.addr %s672, 2
      %s676 = sadd.s32 %s674, %s675
      %s677 = scalar_lea.vmem %s3, %s676
      %p678 = scmp.lt.s32.totalorder %s20, 1
      %s679 = scalar_select %p678, %s20, 1
      %p680 = scmp.lt.s32.totalorder %s21, 1
      %s681 = scalar_select %p680, %s21, 1
      %s682 = smul.addr %s679, 2
      %s683 = sadd.s32 %s681, %s682
      %s684 = scalar_lea.vmem %s4, %s683
      // Predicated region
      $region29: #{unet_conv_block.3} parent=27 // pred_check
        %p685 = pneg %p97
      $region30: #{unet_conv_block.3} parent=27 // pred_check_branch
        %687 = sbr.rel (%p685) target = $region32
      $region31: #{unet_conv_block.3} parent=27 // pred_region
        %s688 = smul.u32 8, %s21
      $region32: #{unet_conv_block.3} parent=27 // pred_fallthru
        _
      // Predicated region
      $region33: #{unet_conv_block.3} parent=27 // pred_check
        %p689 = pneg %p125
      $region34: #{unet_conv_block.3} parent=27 // pred_check_branch
        %691 = sbr.rel (%p689) target = $region36
      $region35: #{unet_conv_block.3} parent=27 // pred_region
        _
      $region36: #{unet_conv_block.3} parent=27 // pred_fallthru
        _
      // Predicated region
      $region37: #{unet_conv_block.3} parent=27 // pred_check
        %p692 = pneg %p153
      $region38: #{unet_conv_block.3} parent=27 // pred_check_branch
        %694 = sbr.rel (%p692) target = $region40
      $region39: #{unet_conv_block.3} parent=27 // pred_region
        _
      $region40: #{unet_conv_block.3} parent=27 // pred_fallthru
        _
    $region28: #{unet_conv_block.3} parent=5 // pred_fallthru
      _
    %p695 = scmp.le.s32.totalorder 2, %s11
    // Predicated region
    $region41: #{unet_conv_block.3} parent=5 // pred_check
      %p696 = pneg %p695
    $region42: #{unet_conv_block.3} parent=5 // pred_check_branch
      %698 = sbr.rel (%p696) target = $region44
    $region43: #{unet_conv_block.3} parent=5 // pred_region
      %s699 = ssub.s32 %s11, 2
      // Predicated region
      $region45: #{unet_conv_block.3} parent=43 // pred_check
        %p700 = pneg %p103
      $region46: #{unet_conv_block.3} parent=43 // pred_check_branch
        %702 = sbr.rel (%p700) target = $region48
      $region47: #{unet_conv_block.3} parent=43 // pred_region
        %s703 = smul.u32 8, %s23
        %p704 = scmp.lt.s32.totalorder %s22, 1
        %s705 = scalar_select %p704, %s22, 1
        %p706 = scmp.lt.s32.totalorder %s703, 15
        %s707 = scalar_select %p706, %s703, 15
        %s708 = smul.addr %s707, 2
        %s709 = smul.addr %s705, 32
        %s710 = sadd.s32 %s708, %s709
        %s711 = smul.addr %s710, 4
        %s712 = scalar_lea.vmem %s2, %s711
      $region48: #{unet_conv_block.3} parent=43 // pred_fallthru
        _
      // Predicated region
      $region49: #{unet_conv_block.3} parent=43 // pred_check
        %p713 = pneg %p131
      $region50: #{unet_conv_block.3} parent=43 // pred_check_branch
        %715 = sbr.rel (%p713) target = $region52
      $region51: #{unet_conv_block.3} parent=43 // pred_region
        %p716 = scmp.lt.s32.totalorder %s22, 1
        %s717 = scalar_select %p716, %s22, 1
        %p718 = scmp.lt.s32.totalorder %s23, 1
        %s719 = scalar_select %p718, %s23, 1
        %s720 = smul.addr %s717, 2
        %s721 = sadd.s32 %s719, %s720
        %s722 = scalar_lea.vmem %s3, %s721
      $region52: #{unet_conv_block.3} parent=43 // pred_fallthru
        _
      // Predicated region
      $region53: #{unet_conv_block.3} parent=43 // pred_check
        %p723 = pneg %p159
      $region54: #{unet_conv_block.3} parent=43 // pred_check_branch
        %725 = sbr.rel (%p723) target = $region56
      $region55: #{unet_conv_block.3} parent=43 // pred_region
        %p726 = scmp.lt.s32.totalorder %s22, 1
        %s727 = scalar_select %p726, %s22, 1
        %p728 = scmp.lt.s32.totalorder %s23, 1
        %s729 = scalar_select %p728, %s23, 1
        %s730 = smul.addr %s727, 2
        %s731 = sadd.s32 %s729, %s730
        %s732 = scalar_lea.vmem %s4, %s731
      $region56: #{unet_conv_block.3} parent=43 // pred_fallthru
        _
    $region44: #{unet_conv_block.3} parent=5 // pred_fallthru
      _
  $region6: #{unet_conv_block.3} parent=0 // loop_footer
    %s15 = sadd.s32 1, %s11
  $region7: #{unet_conv_block.3} parent=0 // loop_footer_branch
    %10 = sbr.rel target = $region3
  $region8: #{unet_conv_block.3} parent=0 // loop_exit
    _

// kernel: unet_conv_block.4
$region0: #{unet_conv_block.4}
  #allocation0 [shape = 'u32[]', space=smem, size = 0x4, offset = 0x4, fixed_abs, tag = 'smem constant byte address 0x4 - core index']
  #allocation1 [shape = 'u32[144,128]{1,0:T(1,128)}', space=vmem, size = 0x12000, scoped, tag = 'internal scratch']
  #allocation2 [shape = 'bf16[3,18,16,128]{3,2,1,0:T(16,128)(2,1)}', space=vmem, size = 0x36000, scoped, tag = 'scratch operand']
  #allocation3 [shape = 'f32[128,128]{1,0:T(8,128)}', space=vmem, size = 0x10000, scoped, tag = 'scratch operand']
  %s0 = inlined_call_operand.vmem [shape: bf16[2,16,16,128], index: 0, kind: input, shape index: {}]
  %s1 = inlined_call_operand.vmem [shape: f32[1,128], index: 1, kind: input, shape index: {}]
  %s2 = inlined_call_operand.vmem [shape: f32[1,128], index: 2, kind: input, shape index: {}]
  %s3 = inlined_call_operand.vmem [shape: bf16[9,128,128], index: 3, kind: input, shape index: {}]
  %s4 = inlined_call_operand.vmem [shape: f32[1,128], index: 4, kind: input, shape index: {}]
  %s5 = inlined_call_operand.vmem [shape: f32[2,16,16,8], index: 5, kind: output, shape index: {0}]
  %s6 = inlined_call_operand.vmem [shape: f32[2,2,1,128], index: 6, kind: output, shape index: {1}]
  %s7 = inlined_call_operand.vmem [shape: f32[2,2,1,128], index: 7, kind: output, shape index: {2}]
  %8 = xla_tuple %s5, %s6, %s7
  %s9 = sld [smem:[#allocation0]]
  $region73: #{unet_conv_block.4} parent=0
    _
  %s11 = ssub.s32 1, %s9
  %s12 = scalar_select 0, %s11, %s9
  loop: start=0, step=1, limit=6
  $region2: #{unet_conv_block.4} parent=0 // loop_pre_header
    _
  $region3: #{unet_conv_block.4} parent=0 // loop_header
    %s14 = sphi 0, %s18
    %p15 = scmp.ge.s32.totalorder %s14, 6
    %s21 = sphi 0, %s33
    %s22 = sphi 0, %s29
    %s23 = sphi 0, %s21
    %s24 = sphi 0, %s22
    %s25 = sphi 0, %s23
    %s26 = sphi 0, %s24
    %s36 = sphi 0, %s38
    %s39 = sphi 0, %s36
    %s40 = sphi 0, %s39
    %s56 = sphi 0, %s40
    %s60 = sphi 0, %s60
    %s62 = sphi 0, %s60
    %s63 = sphi 0, %s62
    %s77 = sphi 0, %s63
    %s81 = sphi 0, %s81
    %s83 = sphi 0, %s81
    %s84 = sphi 0, %s83
    %s98 = sphi 0, %s84
    %s102 = sphi 0, %s102
    %s104 = sphi 0, %s102
    %s105 = sphi 0, %s104
    %s119 = sphi 0, %s105
    %s123 = sphi 0, %s123
    %s125 = sphi 0, %s123
    %s126 = sphi 0, %s125
    %s140 = sphi 0, %s126
    %s148 = sphi 0, %s150
    %s151 = sphi 0, %s148
    %s152 = sphi 0, %s151
    %s168 = sphi 0, %s152
    %s176 = sphi 0, %s178
    %s179 = sphi 0, %s176
    %s180 = sphi 0, %s179
    %s196 = sphi 0, %s180
    %s204 = sphi 0, %s206
    %s207 = sphi 0, %s204
    %s208 = sphi 0, %s207
    %s224 = sphi 0, %s208
  $region4: #{unet_conv_block.4} parent=0 // loop_header_branch
    %17 = sbr.rel (%p15) target = $region8
  $region5: #{unet_conv_block.4} parent=0 // loop_body
    %s19 = ssub.s32 %s14, 1
    %s20 = ssub.s32 %s14, 2
    %s27 = sadd.s32 1, %s22
    %p28 = scmp.ge.s32.totalorder %s27, 2
    %s29 = scalar_select %p28, 0, %s27
    %s30 = sadd.s32 1, %s21
    %s31 = scalar_select %p28, %s30, %s21
    %p32 = scmp.ge.s32.totalorder %s31, 2
    %s33 = scalar_select %p32, 0, %s31
    %s34 = ssub.s32 %s21, %s33
    %p35 = scmp.eq.s32.totalorder %s34, 0
    %s37 = sadd.s32 %s36, 1
    %s38 = scalar_select %p35, %s36, %s37
    %p41 = pneg %p35
    %p42 = scmp.eq.s32.totalorder %s14, 3
    %p43 = por %p41, %p42
    %p44 = scmp.ne.s32.totalorder %s36, %s39
    %p45 = scmp.eq.s32.totalorder %s14, 0
    %p46 = por %p44, %p45
    %p47 = scmp.ne.s32.totalorder %s36, %s39
    %p48 = scmp.eq.s32.totalorder %s19, 3
    %p49 = por %p47, %p48
    %p50 = scmp.ne.s32.totalorder %s39, %s40
    %p51 = scmp.eq.s32.totalorder %s19, 0
    %p52 = por %p50, %p51
    %p53 = scmp.ne.s32.totalorder %s39, %s40
    %p54 = scmp.eq.s32.totalorder %s20, 3
    %p55 = por %p53, %p54
    %p57 = scmp.ne.s32.totalorder %s40, %s56
    %p58 = scmp.eq.s32.totalorder %s20, 0
    %p59 = por %p57, %p58
    %s61 = sadd.s32 %s60, 1
    %p64 = scmp.eq.s32.totalorder %s14, 3
    %p65 = scmp.ne.s32.totalorder %s60, %s62
    %p66 = scmp.eq.s32.totalorder %s14, 0
    %p67 = por %p65, %p66
    %p68 = scmp.ne.s32.totalorder %s60, %s62
    %p69 = scmp.eq.s32.totalorder %s19, 3
    %p70 = por %p68, %p69
    %p71 = scmp.ne.s32.totalorder %s62, %s63
    %p72 = scmp.eq.s32.totalorder %s19, 0
    %p73 = por %p71, %p72
    %p74 = scmp.ne.s32.totalorder %s62, %s63
    %p75 = scmp.eq.s32.totalorder %s20, 3
    %p76 = por %p74, %p75
    %p78 = scmp.ne.s32.totalorder %s63, %s77
    %p79 = scmp.eq.s32.totalorder %s20, 0
    %p80 = por %p78, %p79
    %s82 = sadd.s32 %s81, 1
    %p85 = scmp.eq.s32.totalorder %s14, 3
    %p86 = scmp.ne.s32.totalorder %s81, %s83
    %p87 = scmp.eq.s32.totalorder %s14, 0
    %p88 = por %p86, %p87
    %p89 = scmp.ne.s32.totalorder %s81, %s83
    %p90 = scmp.eq.s32.totalorder %s19, 3
    %p91 = por %p89, %p90
    %p92 = scmp.ne.s32.totalorder %s83, %s84
    %p93 = scmp.eq.s32.totalorder %s19, 0
    %p94 = por %p92, %p93
    %p95 = scmp.ne.s32.totalorder %s83, %s84
    %p96 = scmp.eq.s32.totalorder %s20, 3
    %p97 = por %p95, %p96
    %p99 = scmp.ne.s32.totalorder %s84, %s98
    %p100 = scmp.eq.s32.totalorder %s20, 0
    %p101 = por %p99, %p100
    %s103 = sadd.s32 %s102, 1
    %p106 = scmp.eq.s32.totalorder %s14, 3
    %p107 = scmp.ne.s32.totalorder %s102, %s104
    %p108 = scmp.eq.s32.totalorder %s14, 0
    %p109 = por %p107, %p108
    %p110 = scmp.ne.s32.totalorder %s102, %s104
    %p111 = scmp.eq.s32.totalorder %s19, 3
    %p112 = por %p110, %p111
    %p113 = scmp.ne.s32.totalorder %s104, %s105
    %p114 = scmp.eq.s32.totalorder %s19, 0
    %p115 = por %p113, %p114
    %p116 = scmp.ne.s32.totalorder %s104, %s105
    %p117 = scmp.eq.s32.totalorder %s20, 3
    %p118 = por %p116, %p117
    %p120 = scmp.ne.s32.totalorder %s105, %s119
    %p121 = scmp.eq.s32.totalorder %s20, 0
    %p122 = por %p120, %p121
    %s124 = sadd.s32 %s123, 1
    %p127 = scmp.eq.s32.totalorder %s14, 3
    %p128 = scmp.ne.s32.totalorder %s123, %s125
    %p129 = scmp.eq.s32.totalorder %s14, 0
    %p130 = por %p128, %p129
    %p131 = scmp.ne.s32.totalorder %s123, %s125
    %p132 = scmp.eq.s32.totalorder %s19, 3
    %p133 = por %p131, %p132
    %p134 = scmp.ne.s32.totalorder %s125, %s126
    %p135 = scmp.eq.s32.totalorder %s19, 0
    %p136 = por %p134, %p135
    %p137 = scmp.ne.s32.totalorder %s125, %s126
    %p138 = scmp.eq.s32.totalorder %s20, 3
    %p139 = por %p137, %p138
    %p141 = scmp.ne.s32.totalorder %s126, %s140
    %p142 = scmp.eq.s32.totalorder %s20, 0
    %p143 = por %p141, %p142
    %s144 = ssub.s32 %s21, %s33
    %s145 = ssub.s32 %s22, %s29
    %s146 = sor.u32 %s144, %s145
    %p147 = scmp.eq.s32.totalorder %s146, 0
    %s149 = sadd.s32 %s148, 1
    %s150 = scalar_select %p147, %s148, %s149
    %p153 = pneg %p147
    %p154 = scmp.eq.s32.totalorder %s14, 3
    %p155 = por %p153, %p154
    %p156 = scmp.ne.s32.totalorder %s148, %s151
    %p157 = scmp.eq.s32.totalorder %s14, 0
    %p158 = por %p156, %p157
    %p159 = scmp.ne.s32.totalorder %s148, %s151
    %p160 = scmp.eq.s32.totalorder %s19, 3
    %p161 = por %p159, %p160
    %p162 = scmp.ne.s32.totalorder %s151, %s152
    %p163 = scmp.eq.s32.totalorder %s19, 0
    %p164 = por %p162, %p163
    %p165 = scmp.ne.s32.totalorder %s151, %s152
    %p166 = scmp.eq.s32.totalorder %s20, 3
    %p167 = por %p165, %p166
    %p169 = scmp.ne.s32.totalorder %s152, %s168
    %p170 = scmp.eq.s32.totalorder %s20, 0
    %p171 = por %p169, %p170
    %s172 = ssub.s32 %s21, %s33
    %s173 = ssub.s32 %s22, %s29
    %s174 = sor.u32 %s172, %s173
    %p175 = scmp.eq.s32.totalorder %s174, 0
    %s177 = sadd.s32 %s176, 1
    %s178 = scalar_select %p175, %s176, %s177
    %p181 = pneg %p175
    %p182 = scmp.eq.s32.totalorder %s14, 3
    %p183 = por %p181, %p182
    %p184 = scmp.ne.s32.totalorder %s176, %s179
    %p185 = scmp.eq.s32.totalorder %s14, 0
    %p186 = por %p184, %p185
    %p187 = scmp.ne.s32.totalorder %s176, %s179
    %p188 = scmp.eq.s32.totalorder %s19, 3
    %p189 = por %p187, %p188
    %p190 = scmp.ne.s32.totalorder %s179, %s180
    %p191 = scmp.eq.s32.totalorder %s19, 0
    %p192 = por %p190, %p191
    %p193 = scmp.ne.s32.totalorder %s179, %s180
    %p194 = scmp.eq.s32.totalorder %s20, 3
    %p195 = por %p193, %p194
    %p197 = scmp.ne.s32.totalorder %s180, %s196
    %p198 = scmp.eq.s32.totalorder %s20, 0
    %p199 = por %p197, %p198
    %s200 = ssub.s32 %s21, %s33
    %s201 = ssub.s32 %s22, %s29
    %s202 = sor.u32 %s200, %s201
    %p203 = scmp.eq.s32.totalorder %s202, 0
    %s205 = sadd.s32 %s204, 1
    %s206 = scalar_select %p203, %s204, %s205
    %p209 = pneg %p203
    %p210 = scmp.eq.s32.totalorder %s14, 3
    %p211 = por %p209, %p210
    %p212 = scmp.ne.s32.totalorder %s204, %s207
    %p213 = scmp.eq.s32.totalorder %s14, 0
    %p214 = por %p212, %p213
    %p215 = scmp.ne.s32.totalorder %s204, %s207
    %p216 = scmp.eq.s32.totalorder %s19, 3
    %p217 = por %p215, %p216
    %p218 = scmp.ne.s32.totalorder %s207, %s208
    %p219 = scmp.eq.s32.totalorder %s19, 0
    %p220 = por %p218, %p219
    %p221 = scmp.ne.s32.totalorder %s207, %s208
    %p222 = scmp.eq.s32.totalorder %s20, 3
    %p223 = por %p221, %p222
    %p225 = scmp.ne.s32.totalorder %s208, %s224
    %p226 = scmp.eq.s32.totalorder %s20, 0
    %p227 = por %p225, %p226
    %p228 = scmp.le.s32.totalorder 1, %s14
    %p229 = scmp.lt.s32.totalorder %s14, 5
    %p230 = pnand %p228, %p229
    %p231 = pneg %p230
    // Predicated region
    $region9: #{unet_conv_block.4} parent=5 // pred_check
      _
    $region10: #{unet_conv_block.4} parent=5 // pred_check_branch
      %233 = sbr.rel (%p230) target = $region12
    $region11: #{unet_conv_block.4} parent=5 // pred_region
      %s234 = ssub.s32 %s14, 1
      // Predicated region
      $region13: #{unet_conv_block.4} parent=11 // pred_check
        %p235 = pneg %p73
      $region14: #{unet_conv_block.4} parent=11 // pred_check_branch
        %237 = sbr.rel (%p235) target = $region16
      $region15: #{unet_conv_block.4} parent=11 // pred_region
        _
      $region16: #{unet_conv_block.4} parent=11 // pred_fallthru
        _
      // Predicated region
      $region17: #{unet_conv_block.4} parent=11 // pred_check
        %p238 = pneg %p94
      $region18: #{unet_conv_block.4} parent=11 // pred_check_branch
        %240 = sbr.rel (%p238) target = $region20
      $region19: #{unet_conv_block.4} parent=11 // pred_region
        _
      $region20: #{unet_conv_block.4} parent=11 // pred_fallthru
        _
      // Predicated region
      $region21: #{unet_conv_block.4} parent=11 // pred_check
        %p241 = pneg %p115
      $region22: #{unet_conv_block.4} parent=11 // pred_check_branch
        %243 = sbr.rel (%p241) target = $region24
      $region23: #{unet_conv_block.4} parent=11 // pred_region
        _
      $region24: #{unet_conv_block.4} parent=11 // pred_fallthru
        _
      // Predicated region
      $region25: #{unet_conv_block.4} parent=11 // pred_check
        %p244 = pneg %p136
      $region26: #{unet_conv_block.4} parent=11 // pred_check_branch
        %246 = sbr.rel (%p244) target = $region28
      $region27: #{unet_conv_block.4} parent=11 // pred_region
        _
      $region28: #{unet_conv_block.4} parent=11 // pred_fallthru
        _
    $region12: #{unet_conv_block.4} parent=5 // pred_fallthru
      _
    %p247 = scmp.lt.s32.totalorder %s14, 4
    // Predicated region
    $region29: #{unet_conv_block.4} parent=5 // pred_check
      %p248 = pneg %p247
    $region30: #{unet_conv_block.4} parent=5 // pred_check_branch
      %250 = sbr.rel (%p248) target = $region32
    $region31: #{unet_conv_block.4} parent=5 // pred_region
      // Predicated region
      $region33: #{unet_conv_block.4} parent=31 // pred_check
        %p251 = pneg %p46
      $region34: #{unet_conv_block.4} parent=31 // pred_check_branch
        %253 = sbr.rel (%p251) target = $region36
      $region35: #{unet_conv_block.4} parent=31 // pred_region
        %p254 = scmp.lt.s32.totalorder %s21, 1
        %s255 = scalar_select %p254, %s21, 1
        %s256 = smul.addr %s255, 32
        %s257 = smul.addr %s256, 4
        %s258 = scalar_lea.vmem %s0, %s257
      $region36: #{unet_conv_block.4} parent=31 // pred_fallthru
        _
    $region32: #{unet_conv_block.4} parent=5 // pred_fallthru
      _
    %p259 = scmp.le.s32.totalorder 1, %s14
    %p260 = scmp.lt.s32.totalorder %s14, 5
    %p261 = pnand %p259, %p260
    %p262 = pneg %p261
    // Predicated region
    $region37: #{unet_conv_block.4} parent=5 // pred_check
      _
    $region38: #{unet_conv_block.4} parent=5 // pred_check_branch
      %264 = sbr.rel (%p261) target = $region40
    $region39: #{unet_conv_block.4} parent=5 // pred_region
      %s265 = ssub.s32 %s14, 1
      %p266 = scmp.lt.s32.totalorder %s23, 1
      %s267 = scalar_select %p266, %s23, 1
      %s268 = smul.addr %s267, 32
      %s269 = smul.addr %s268, 4
      %s270 = scalar_lea.vmem %s0, %s269
      %p271 = pneg %p52
      %p272 = pneg %p49
      %p273 = pneg %p73
      %p274 = pneg %p70
      %p275 = pneg %p94
      %p276 = pneg %p91
      %p277 = pneg %p115
      %p278 = pneg %p112
      %p279 = pneg %p136
      %p280 = pneg %p133
      %p281 = pneg %p164
      %p282 = pneg %p161
      %s283 = smul.u32 8, %s24
      %p284 = scmp.lt.s32.totalorder %s23, 1
      %s285 = scalar_select %p284, %s23, 1
      %p286 = scmp.lt.s32.totalorder %s283, 15
      %s287 = scalar_select %p286, %s283, 15
      %s288 = smul.addr %s287, 2
      %s289 = smul.addr %s285, 32
      %s290 = sadd.s32 %s288, %s289
      %s291 = smul.addr %s290, 8
      %s292 = scalar_lea.vmem %s5, %s291
      %p293 = pneg %p192
      %p294 = pneg %p189
      %p295 = scmp.lt.s32.totalorder %s23, 1
      %s296 = scalar_select %p295, %s23, 1
      %p297 = scmp.lt.s32.totalorder %s24, 1
      %s298 = scalar_select %p297, %s24, 1
      %s299 = smul.addr %s296, 2
      %s300 = sadd.s32 %s298, %s299
      %s301 = scalar_lea.vmem %s6, %s300
      %p302 = pneg %p220
      %p303 = pneg %p217
      %p304 = scmp.lt.s32.totalorder %s23, 1
      %s305 = scalar_select %p304, %s23, 1
      %p306 = scmp.lt.s32.totalorder %s24, 1
      %s307 = scalar_select %p306, %s24, 1
      %s308 = smul.addr %s305, 2
      %s309 = sadd.s32 %s307, %s308
      %s310 = scalar_lea.vmem %s7, %s309
      %p311 = scmp.lt.s32.totalorder %s23, 1
      %s312 = scalar_select %p311, %s23, 1
      %s313 = smul.addr %s312, 32
      %s314 = smul.addr %s313, 4
      %s315 = scalar_lea.vmem %s0, %s314
      %s316 = smul.u32 8, %s24
      %p317 = scmp.lt.s32.totalorder %s23, 1
      %s318 = scalar_select %p317, %s23, 1
      %p319 = scmp.lt.s32.totalorder %s316, 15
      %s320 = scalar_select %p319, %s316, 15
      %s321 = smul.addr %s320, 2
      %s322 = smul.addr %s318, 32
      %s323 = sadd.s32 %s321, %s322
      %s324 = smul.addr %s323, 8
      %s325 = scalar_lea.vmem %s5, %s324
      %s326 = smul.u32 8, %s24
      %p327 = scmp.lt.s32.totalorder %s23, 1
      %s328 = scalar_select %p327, %s23, 1
      %p329 = scmp.lt.s32.totalorder %s24, 1
      %s330 = scalar_select %p329, %s24, 1
      %s331 = smul.addr %s328, 2
      %s332 = sadd.s32 %s330, %s331
      %s333 = scalar_lea.vmem %s6, %s332
      %p334 = scmp.lt.s32.totalorder %s23, 1
      %s335 = scalar_select %p334, %s23, 1
      %p336 = scmp.lt.s32.totalorder %s24, 1
      %s337 = scalar_select %p336, %s24, 1
      %s338 = smul.addr %s335, 2
      %s339 = sadd.s32 %s337, %s338
      %s340 = scalar_lea.vmem %s7, %s339
      %p342 = scmp.eq.s32.totalorder %s24, 0
      // Predicated region
      $region41: #{unet_conv_block.4} parent=39 // pred_check
        %p343 = pneg %p342
      $region42: #{unet_conv_block.4} parent=39 // pred_check_branch
        %345 = sbr.rel (%p343) target = $region44
      $region43: #{unet_conv_block.4} parent=39 // pred_region
        %v346 = vld [vmem:[%s315] sm:$0xf]
        %v347 = vld [vmem:[%s315 + $0x4] sm:$0xf]
        %v348 = vld [vmem:[%s315 + $0x8] sm:$0xf]
        %v349 = vld [vmem:[%s315 + $0xc] sm:$0xf]
        %v350 = vld [vmem:[%s315 + $0x10] sm:$0xf]
        %v351 = vld [vmem:[%s315 + $0x14] sm:$0xf]
        %v352 = vld [vmem:[%s315 + $0x18] sm:$0xf]
        %v353 = vld [vmem:[%s315 + $0x1c] sm:$0xf]
        %v354 = vld [vmem:[%s315 + $0x20] sm:$0xf]
        %v355 = vld [vmem:[%s315 + $0x24] sm:$0xf]
        %v356 = vld [vmem:[%s315 + $0x28] sm:$0xf]
        %v357 = vld [vmem:[%s315 + $0x2c] sm:$0xf]
        %v358 = vld [vmem:[%s315 + $0x30] sm:$0xf]
        %v359 = vld [vmem:[%s315 + $0x34] sm:$0xf]
        %v360 = vld [vmem:[%s315 + $0x38] sm:$0xf]
        %v361 = vld [vmem:[%s315 + $0x3c] sm:$0xf]
        %v362 = vld [vmem:[%s315 + $0x40] sm:$0xf]
        %v363 = vld [vmem:[%s315 + $0x44] sm:$0xf]
        %v364 = vld [vmem:[%s315 + $0x48] sm:$0xf]
        %v365 = vld [vmem:[%s315 + $0x4c] sm:$0xf]
        %v366 = vld [vmem:[%s315 + $0x50] sm:$0xf]
        %v367 = vld [vmem:[%s315 + $0x54] sm:$0xf]
        %v368 = vld [vmem:[%s315 + $0x58] sm:$0xf]
        %v369 = vld [vmem:[%s315 + $0x5c] sm:$0xf]
        %v370 = vld [vmem:[%s315 + $0x60] sm:$0xf]
        %v371 = vld [vmem:[%s315 + $0x64] sm:$0xf]
        %v372 = vld [vmem:[%s315 + $0x68] sm:$0xf]
        %v373 = vld [vmem:[%s315 + $0x6c] sm:$0xf]
        %v374 = vld [vmem:[%s315 + $0x70] sm:$0xf]
        %v375 = vld [vmem:[%s315 + $0x74] sm:$0xf]
        %v376 = vld [vmem:[%s315 + $0x78] sm:$0xf]
        %v377 = vld [vmem:[%s315 + $0x7c] sm:$0xf]
        %v378 = vunpack.c.l.bf16 %v346
        %v379 = vunpack.c.l.bf16 %v347
        %v380 = vunpack.c.l.bf16 %v348
        %v381 = vunpack.c.l.bf16 %v349
        %v382 = vunpack.c.l.bf16 %v350
        %v383 = vunpack.c.l.bf16 %v351
        %v384 = vunpack.c.l.bf16 %v352
        %v385 = vunpack.c.l.bf16 %v353
        %v386 = vunpack.c.l.bf16 %v354
        %v387 = vunpack.c.l.bf16 %v355
        %v388 = vunpack.c.l.bf16 %v356
        %v389 = vunpack.c.l.bf16 %v357
        %v390 = vunpack.c.l.bf16 %v358
        %v391 = vunpack.c.l.bf16 %v359
        %v392 = vunpack.c.l.bf16 %v360
        %v393 = vunpack.c.l.bf16 %v361
        %v394 = vunpack.c.l.bf16 %v362
        %v395 = vunpack.c.l.bf16 %v363
        %v396 = vunpack.c.l.bf16 %v364
        %v397 = vunpack.c.l.bf16 %v365
        %v398 = vunpack.c.l.bf16 %v366
        %v399 = vunpack.c.l.bf16 %v367
        %v400 = vunpack.c.l.bf16 %v368
        %v401 = vunpack.c.l.bf16 %v369
        %v402 = vunpack.c.l.bf16 %v370
        %v403 = vunpack.c.l.bf16 %v371
        %v404 = vunpack.c.l.bf16 %v372
        %v405 = vunpack.c.l.bf16 %v373
        %v406 = vunpack.c.l.bf16 %v374
        %v407 = vunpack.c.l.bf16 %v375
        %v408 = vunpack.c.l.bf16 %v376
        %v409 = vunpack.c.l.bf16 %v377
        %v410 = vld [vmem:[%s1] sm:$0x1]
        %v412 = vlaneseq
        %v413 = vshrl.u32 %v412, 7
        %v414 = vsub.s32 0, %v413
        %v415 = vrot.slane %v410, %v414
        %v417 = vmul.f32 %v378, %v415
        %v418 = vmul.f32 %v379, %v415
        %v419 = vmul.f32 %v380, %v415
        %v420 = vmul.f32 %v381, %v415
        %v421 = vmul.f32 %v382, %v415
        %v422 = vmul.f32 %v383, %v415
        %v423 = vmul.f32 %v384, %v415
        %v424 = vmul.f32 %v385, %v415
        %v425 = vmul.f32 %v386, %v415
        %v426 = vmul.f32 %v387, %v415
        %v427 = vmul.f32 %v388, %v415
        %v428 = vmul.f32 %v389, %v415
        %v429 = vmul.f32 %v390, %v415
        %v430 = vmul.f32 %v391, %v415
        %v431 = vmul.f32 %v392, %v415
        %v432 = vmul.f32 %v393, %v415
        %v433 = vmul.f32 %v394, %v415
        %v434 = vmul.f32 %v395, %v415
        %v435 = vmul.f32 %v396, %v415
        %v436 = vmul.f32 %v397, %v415
        %v437 = vmul.f32 %v398, %v415
        %v438 = vmul.f32 %v399, %v415
        %v439 = vmul.f32 %v400, %v415
        %v440 = vmul.f32 %v401, %v415
        %v441 = vmul.f32 %v402, %v415
        %v442 = vmul.f32 %v403, %v415
        %v443 = vmul.f32 %v404, %v415
        %v444 = vmul.f32 %v405, %v415
        %v445 = vmul.f32 %v406, %v415
        %v446 = vmul.f32 %v407, %v415
        %v447 = vmul.f32 %v408, %v415
        %v448 = vmul.f32 %v409, %v415
        %v449 = vld [vmem:[%s2] sm:$0x1]
        %v451 = vlaneseq
        %v452 = vshrl.u32 %v451, 7
        %v453 = vsub.s32 0, %v452
        %v454 = vrot.slane %v449, %v453
        %v456 = vadd.f32 %v417, %v454
        %v457 = vadd.f32 %v418, %v454
        %v458 = vadd.f32 %v419, %v454
        %v459 = vadd.f32 %v420, %v454
        %v460 = vadd.f32 %v421, %v454
        %v461 = vadd.f32 %v422, %v454
        %v462 = vadd.f32 %v423, %v454
        %v463 = vadd.f32 %v424, %v454
        %v464 = vadd.f32 %v425, %v454
        %v465 = vadd.f32 %v426, %v454
        %v466 = vadd.f32 %v427, %v454
        %v467 = vadd.f32 %v428, %v454
        %v468 = vadd.f32 %v429, %v454
        %v469 = vadd.f32 %v430, %v454
        %v470 = vadd.f32 %v431, %v454
        %v471 = vadd.f32 %v432, %v454
        %v472 = vadd.f32 %v433, %v454
        %v473 = vadd.f32 %v434, %v454
        %v474 = vadd.f32 %v435, %v454
        %v475 = vadd.f32 %v436, %v454
        %v476 = vadd.f32 %v437, %v454
        %v477 = vadd.f32 %v438, %v454
        %v478 = vadd.f32 %v439, %v454
        %v479 = vadd.f32 %v440, %v454
        %v480 = vadd.f32 %v441, %v454
        %v481 = vadd.f32 %v442, %v454
        %v482 = vadd.f32 %v443, %v454
        %v483 = vadd.f32 %v444, %v454
        %v484 = vadd.f32 %v445, %v454
        %v485 = vadd.f32 %v446, %v454
        %v486 = vadd.f32 %v447, %v454
        %v487 = vadd.f32 %v448, %v454
        %v488 = vpack.c.bf16 %v457, %v456
        %v489 = vpack.c.bf16 %v459, %v458
        %v490 = vpack.c.bf16 %v461, %v460
        %v491 = vpack.c.bf16 %v463, %v462
        %v492 = vpack.c.bf16 %v465, %v464
        %v493 = vpack.c.bf16 %v467, %v466
        %v494 = vpack.c.bf16 %v469, %v468
        %v495 = vpack.c.bf16 %v471, %v470
        %v496 = vpack.c.bf16 %v473, %v472
        %v497 = vpack.c.bf16 %v475, %v474
        %v498 = vpack.c.bf16 %v477, %v476
        %v499 = vpack.c.bf16 %v479, %v478
        %v500 = vpack.c.bf16 %v481, %v480
        %v501 = vpack.c.bf16 %v483, %v482
        %v502 = vpack.c.bf16 %v485, %v484
        %v503 = vpack.c.bf16 %v487, %v486
        %504 = vst [vmem:[#allocation2] sm:$0xff] 0
        %505 = vst [vmem:[#allocation2 + $0x8] sm:$0xff] 0
        %506 = vst [vmem:[#allocation2 + $0x10] sm:$0xff] 0
        %507 = vst [vmem:[#allocation2 + $0x18] sm:$0xff] 0
        %508 = vst [vmem:[#allocation2 + $0x20] sm:$0xff] 0
        %509 = vst [vmem:[#allocation2 + $0x28] sm:$0xff] 0
        %510 = vst [vmem:[#allocation2 + $0x30] sm:$0xff] 0
        %511 = vst [vmem:[#allocation2 + $0x38] sm:$0xff] 0
        %512 = vst [vmem:[#allocation2 + $0x40] sm:$0xff] 0
        %513 = vst [vmem:[#allocation2 + $0x48] sm:$0xff] 0
        %514 = vst [vmem:[#allocation2 + $0x50] sm:$0xff] 0
        %515 = vst [vmem:[#allocation2 + $0x58] sm:$0xff] 0
        %516 = vst [vmem:[#allocation2 + $0x60] sm:$0xff] 0
        %517 = vst [vmem:[#allocation2 + $0x68] sm:$0xff] 0
        %518 = vst [vmem:[#allocation2 + $0x70] sm:$0xff] 0
        %519 = vst [vmem:[#allocation2 + $0x78] sm:$0xff] 0
        %520 = vst [vmem:[#allocation2 + $0x80] sm:$0xff] 0
        %521 = vst [vmem:[#allocation2 + $0x88] sm:$0xff] 0
        %522 = vst [vmem:[#allocation2 + $0x90] sm:$0xff] 0
        %523 = vst [vmem:[#allocation2 + $0x98] sm:$0xff] 0
        %524 = vst [vmem:[#allocation2 + $0xa0] sm:$0xff] 0
        %525 = vst [vmem:[#allocation2 + $0xa8] sm:$0xff] 0
        %526 = vst [vmem:[#allocation2 + $0xb0] sm:$0xff] 0
        %527 = vst [vmem:[#allocation2 + $0xb8] sm:$0xff] 0
        %528 = vst [vmem:[#allocation2 + $0xc0] sm:$0xff] 0
        %529 = vst [vmem:[#allocation2 + $0xc8] sm:$0xff] 0
        %530 = vst [vmem:[#allocation2 + $0xd0] sm:$0xff] 0
        %531 = vst [vmem:[#allocation2 + $0xd8] sm:$0xff] 0
        %532 = vst [vmem:[#allocation2 + $0xe0] sm:$0xff] 0
        %533 = vst [vmem:[#allocation2 + $0xe8] sm:$0xff] 0
        %534 = vst [vmem:[#allocation2 + $0xf0] sm:$0xff] 0
        %535 = vst [vmem:[#allocation2 + $0xf8] sm:$0xff] 0
        %536 = vst [vmem:[#allocation2 + $0x100] sm:$0xff] 0
        %537 = vst [vmem:[#allocation2 + $0x108] sm:$0xff] 0
        %538 = vst [vmem:[#allocation2 + $0x110] sm:$0xff] 0
        %539 = vst [vmem:[#allocation2 + $0x118] sm:$0xff] 0
        %540 = vst [vmem:[#allocation2 + $0x120] sm:$0xff] 0
        %541 = vst [vmem:[#allocation2 + $0x128] sm:$0xff] 0
        %542 = vst [vmem:[#allocation2 + $0x130] sm:$0xff] 0
        %543 = vst [vmem:[#allocation2 + $0x138] sm:$0xff] 0
        %544 = vst [vmem:[#allocation2 + $0x140] sm:$0xff] 0
        %545 = vst [vmem:[#allocation2 + $0x148] sm:$0xff] 0
        %546 = vst [vmem:[#allocation2 + $0x150] sm:$0xff] 0
        %547 = vst [vmem:[#allocation2 + $0x158] sm:$0xff] 0
        %548 = vst [vmem:[#allocation2 + $0x160] sm:$0xff] 0
        %549 = vst [vmem:[#allocation2 + $0x168] sm:$0xff] 0
        %550 = vst [vmem:[#allocation2 + $0x170] sm:$0xff] 0
        %551 = vst [vmem:[#allocation2 + $0x178] sm:$0xff] 0
        %552 = vst [vmem:[#allocation2 + $0x180] sm:$0xff] 0
        %553 = vst [vmem:[#allocation2 + $0x188] sm:$0xff] 0
        %554 = vst [vmem:[#allocation2 + $0x190] sm:$0xff] 0
        %555 = vst [vmem:[#allocation2 + $0x198] sm:$0xff] 0
        %556 = vst [vmem:[#allocation2 + $0x1a0] sm:$0xff] 0
        %557 = vst [vmem:[#allocation2 + $0x1a8] sm:$0xff] 0
        %v559 = vshrl.u32 %v488, 16
        %v561 = vrot.slane %v559, 7
        %v562 = vshll.u32 %v488, 16
        %v564 = vor.u32 %v561, %v562
        %v566 = vshrl.u32 %v489, 16
        %v568 = vrot.slane %v566, 7
        %v569 = vshll.u32 %v489, 16
        %v571 = vor.u32 %v568, %v569
        %v573 = vshrl.u32 %v490, 16
        %v575 = vrot.slane %v573, 7
        %v576 = vshll.u32 %v490, 16
        %v578 = vor.u32 %v575, %v576
        %v580 = vshrl.u32 %v491, 16
        %v582 = vrot.slane %v580, 7
        %v583 = vshll.u32 %v491, 16
        %v585 = vor.u32 %v582, %v583
        %v587 = vshrl.u32 %v492, 16
        %v589 = vrot.slane %v587, 7
        %v590 = vshll.u32 %v492, 16
        %v592 = vor.u32 %v589, %v590
        %v594 = vshrl.u32 %v493, 16
        %v596 = vrot.slane %v594, 7
        %v597 = vshll.u32 %v493, 16
        %v599 = vor.u32 %v596, %v597
        %v601 = vshrl.u32 %v494, 16
        %v603 = vrot.slane %v601, 7
        %v604 = vshll.u32 %v494, 16
        %v606 = vor.u32 %v603, %v604
        %v608 = vshrl.u32 %v495, 16
        %v610 = vrot.slane %v608, 7
        %v611 = vshll.u32 %v495, 16
        %v613 = vor.u32 %v610, %v611
        %v615 = vshrl.u32 %v496, 16
        %v617 = vrot.slane %v615, 7
        %v618 = vshll.u32 %v496, 16
        %v620 = vor.u32 %v617, %v618
        %v622 = vshrl.u32 %v497, 16
        %v624 = vrot.slane %v622, 7
        %v625 = vshll.u32 %v497, 16
        %v627 = vor.u32 %v624, %v625
        %v629 = vshrl.u32 %v498, 16
        %v631 = vrot.slane %v629, 7
        %v632 = vshll.u32 %v498, 16
        %v634 = vor.u32 %v631, %v632
        %v636 = vshrl.u32 %v499, 16
        %v638 = vrot.slane %v636, 7
        %v639 = vshll.u32 %v499, 16
        %v641 = vor.u32 %v638, %v639
        %v643 = vshrl.u32 %v500, 16
        %v645 = vrot.slane %v643, 7
        %v646 = vshll.u32 %v500, 16
        %v648 = vor.u32 %v645, %v646
        %v650 = vshrl.u32 %v501, 16
        %v652 = vrot.slane %v650, 7
        %v653 = vshll.u32 %v501, 16
        %v655 = vor.u32 %v652, %v653
        %v657 = vshrl.u32 %v502, 16
        %v659 = vrot.slane %v657, 7
        %v660 = vshll.u32 %v502, 16
        %v662 = vor.u32 %v659, %v660
        %v664 = vshrl.u32 %v503, 16
        %v666 = vrot.slane %v664, 7
        %v667 = vshll.u32 %v503, 16
        %v669 = vor.u32 %v666, %v667
        %s686 = scalar_lea.vmem [#allocation2], 8
        %vm687 = vcmask 1047552
        %vm688 = vsmask.f32 7938
        %vm689 = vmand %vm687, %vm688
        %v690 = vld [vmem:[%s686] sm:$0xff]
        %v691 = vsel %vm689, %v564, %v690
        %692 = vst [vmem:[%s686] sm:$0xff] %v691
        %v693 = vld [vmem:[%s686 + $0x8] sm:$0xff]
        %v694 = vsel %vm689, %v571, %v693
        %695 = vst [vmem:[%s686 + $0x8] sm:$0xff] %v694
        %v696 = vld [vmem:[%s686 + $0x10] sm:$0xff]
        %v697 = vsel %vm689, %v578, %v696
        %698 = vst [vmem:[%s686 + $0x10] sm:$0xff] %v697
        %v699 = vld [vmem:[%s686 + $0x18] sm:$0xff]
        %v700 = vsel %vm689, %v585, %v699
        %701 = vst [vmem:[%s686 + $0x18] sm:$0xff] %v700
        %v702 = vld [vmem:[%s686 + $0x20] sm:$0xff]
        %v703 = vsel %vm689, %v592, %v702
        %704 = vst [vmem:[%s686 + $0x20] sm:$0xff] %v703
        %v705 = vld [vmem:[%s686 + $0x28] sm:$0xff]
        %v706 = vsel %vm689, %v599, %v705
        %707 = vst [vmem:[%s686 + $0x28] sm:$0xff] %v706
        %v708 = vld [vmem:[%s686 + $0x30] sm:$0xff]
        %v709 = vsel %vm689, %v606, %v708
        %710 = vst [vmem:[%s686 + $0x30] sm:$0xff] %v709
        %v711 = vld [vmem:[%s686 + $0x38] sm:$0xff]
        %v712 = vsel %vm689, %v613, %v711
        %713 = vst [vmem:[%s686 + $0x38] sm:$0xff] %v712
        %v714 = vld [vmem:[%s686 + $0x40] sm:$0xff]
        %v715 = vsel %vm689, %v620, %v714
        %716 = vst [vmem:[%s686 + $0x40] sm:$0xff] %v715
        %v717 = vld [vmem:[%s686 + $0x48] sm:$0xff]
        %v718 = vsel %vm689, %v627, %v717
        %719 = vst [vmem:[%s686 + $0x48] sm:$0xff] %v718
        %v720 = vld [vmem:[%s686 + $0x50] sm:$0xff]
        %v721 = vsel %vm689, %v634, %v720
        %722 = vst [vmem:[%s686 + $0x50] sm:$0xff] %v721
        %v723 = vld [vmem:[%s686 + $0x58] sm:$0xff]
        %v724 = vsel %vm689, %v641, %v723
        %725 = vst [vmem:[%s686 + $0x58] sm:$0xff] %v724
        %v726 = vld [vmem:[%s686 + $0x60] sm:$0xff]
        %v727 = vsel %vm689, %v648, %v726
        %728 = vst [vmem:[%s686 + $0x60] sm:$0xff] %v727
        %v729 = vld [vmem:[%s686 + $0x68] sm:$0xff]
        %v730 = vsel %vm689, %v655, %v729
        %731 = vst [vmem:[%s686 + $0x68] sm:$0xff] %v730
        %v732 = vld [vmem:[%s686 + $0x70] sm:$0xff]
        %v733 = vsel %vm689, %v662, %v732
        %734 = vst [vmem:[%s686 + $0x70] sm:$0xff] %v733
        %v735 = vld [vmem:[%s686 + $0x78] sm:$0xff]
        %v736 = vsel %vm689, %v669, %v735
        %737 = vst [vmem:[%s686 + $0x78] sm:$0xff] %v736
        %s738 = scalar_lea.vmem [#allocation2], 152
        %739 = vst [vmem:[%s738] sm:$0xff] %v488
        %740 = vst [vmem:[%s738 + $0x8] sm:$0xff] %v489
        %741 = vst [vmem:[%s738 + $0x10] sm:$0xff] %v490
        %742 = vst [vmem:[%s738 + $0x18] sm:$0xff] %v491
        %743 = vst [vmem:[%s738 + $0x20] sm:$0xff] %v492
        %744 = vst [vmem:[%s738 + $0x28] sm:$0xff] %v493
        %745 = vst [vmem:[%s738 + $0x30] sm:$0xff] %v494
        %746 = vst [vmem:[%s738 + $0x38] sm:$0xff] %v495
        %747 = vst [vmem:[%s738 + $0x40] sm:$0xff] %v496
        %748 = vst [vmem:[%s738 + $0x48] sm:$0xff] %v497
        %749 = vst [vmem:[%s738 + $0x50] sm:$0xff] %v498
        %750 = vst [vmem:[%s738 + $0x58] sm:$0xff] %v499
        %751 = vst [vmem:[%s738 + $0x60] sm:$0xff] %v500
        %752 = vst [vmem:[%s738 + $0x68] sm:$0xff] %v501
        %753 = vst [vmem:[%s738 + $0x70] sm:$0xff] %v502
        %754 = vst [vmem:[%s738 + $0x78] sm:$0xff] %v503
        %v755 = vrot.slane %v562, 1
        %v756 = vor.u32 %v559, %v755
        %v757 = vrot.slane %v569, 1
        %v758 = vor.u32 %v566, %v757
        %v759 = vrot.slane %v576, 1
        %v760 = vor.u32 %v573, %v759
        %v761 = vrot.slane %v583, 1
        %v762 = vor.u32 %v580, %v761
        %v763 = vrot.slane %v590, 1
        %v764 = vor.u32 %v587, %v763
        %v765 = vrot.slane %v597, 1
        %v766 = vor.u32 %v594, %v765
        %v767 = vrot.slane %v604, 1
        %v768 = vor.u32 %v601, %v767
        %v769 = vrot.slane %v611, 1
        %v770 = vor.u32 %v608, %v769
        %v771 = vrot.slane %v618, 1
        %v772 = vor.u32 %v615, %v771
        %v773 = vrot.slane %v625, 1
        %v774 = vor.u32 %v622, %v773
        %v775 = vrot.slane %v632, 1
        %v776 = vor.u32 %v629, %v775
        %v777 = vrot.slane %v639, 1
        %v778 = vor.u32 %v636, %v777
        %v779 = vrot.slane %v646, 1
        %v780 = vor.u32 %v643, %v779
        %v781 = vrot.slane %v653, 1
        %v782 = vor.u32 %v650, %v781
        %v783 = vrot.slane %v660, 1
        %v784 = vor.u32 %v657, %v783
        %v785 = vrot.slane %v667, 1
        %v786 = vor.u32 %v664, %v785
        %s803 = scalar_lea.vmem [#allocation2], 296
        %vm804 = vsmask.f32 7424
        %vm805 = vmand %vm687, %vm804
        %v806 = vld [vmem:[%s803] sm:$0xff]
        %v807 = vsel %vm805, %v756, %v806
        %808 = vst [vmem:[%s803] sm:$0xff] %v807
        %v809 = vld [vmem:[%s803 + $0x8] sm:$0xff]
        %v810 = vsel %vm805, %v758, %v809
        %811 = vst [vmem:[%s803 + $0x8] sm:$0xff] %v810
        %v812 = vld [vmem:[%s803 + $0x10] sm:$0xff]
        %v813 = vsel %vm805, %v760, %v812
        %814 = vst [vmem:[%s803 + $0x10] sm:$0xff] %v813
        %v815 = vld [vmem:[%s803 + $0x18] sm:$0xff]
        %v816 = vsel %vm805, %v762, %v815
        %817 = vst [vmem:[%s803 + $0x18] sm:$0xff] %v816
        %v818 = vld [vmem:[%s803 + $0x20] sm:$0xff]
        %v819 = vsel %vm805, %v764, %v818
        %820 = vst [vmem:[%s803 + $0x20] sm:$0xff] %v819
        %v821 = vld [vmem:[%s803 + $0x28] sm:$0xff]
        %v822 = vsel %vm805, %v766, %v821
        %823 = vst [vmem:[%s803 + $0x28] sm:$0xff] %v822
        %v824 = vld [vmem:[%s803 + $0x30] sm:$0xff]
        %v825 = vsel %vm805, %v768, %v824
        %826 = vst [vmem:[%s803 + $0x30] sm:$0xff] %v825
        %v827 = vld [vmem:[%s803 + $0x38] sm:$0xff]
        %v828 = vsel %vm805, %v770, %v827
        %829 = vst [vmem:[%s803 + $0x38] sm:$0xff] %v828
        %v830 = vld [vmem:[%s803 + $0x40] sm:$0xff]
        %v831 = vsel %vm805, %v772, %v830
        %832 = vst [vmem:[%s803 + $0x40] sm:$0xff] %v831
        %v833 = vld [vmem:[%s803 + $0x48] sm:$0xff]
        %v834 = vsel %vm805, %v774, %v833
        %835 = vst [vmem:[%s803 + $0x48] sm:$0xff] %v834
        %v836 = vld [vmem:[%s803 + $0x50] sm:$0xff]
        %v837 = vsel %vm805, %v776, %v836
        %838 = vst [vmem:[%s803 + $0x50] sm:$0xff] %v837
        %v839 = vld [vmem:[%s803 + $0x58] sm:$0xff]
        %v840 = vsel %vm805, %v778, %v839
        %841 = vst [vmem:[%s803 + $0x58] sm:$0xff] %v840
        %v842 = vld [vmem:[%s803 + $0x60] sm:$0xff]
        %v843 = vsel %vm805, %v780, %v842
        %844 = vst [vmem:[%s803 + $0x60] sm:$0xff] %v843
        %v845 = vld [vmem:[%s803 + $0x68] sm:$0xff]
        %v846 = vsel %vm805, %v782, %v845
        %847 = vst [vmem:[%s803 + $0x68] sm:$0xff] %v846
        %v848 = vld [vmem:[%s803 + $0x70] sm:$0xff]
        %v849 = vsel %vm805, %v784, %v848
        %850 = vst [vmem:[%s803 + $0x70] sm:$0xff] %v849
        %v851 = vld [vmem:[%s803 + $0x78] sm:$0xff]
        %v852 = vsel %vm805, %v786, %v851
        %853 = vst [vmem:[%s803 + $0x78] sm:$0xff] %v852
      $region44: #{unet_conv_block.4} parent=39 // pred_fallthru
        _
      %v854 = vld [vmem:[%s4] sm:$0x1]
      %v856 = vlaneseq
      %v857 = vshrl.u32 %v856, 7
      %v858 = vsub.s32 0, %v857
      %v859 = vrot.slane %v854, %v858
      %861 = vst [vmem:[#allocation3] sm:$0xff] %v859
      %862 = vst [vmem:[#allocation3 + $0x8] sm:$0xff] %v859
      %863 = vst [vmem:[#allocation3 + $0x10] sm:$0xff] %v859
      %864 = vst [vmem:[#allocation3 + $0x18] sm:$0xff] %v859
      %865 = vst [vmem:[#allocation3 + $0x20] sm:$0xff] %v859
      %866 = vst [vmem:[#allocation3 + $0x28] sm:$0xff] %v859
      %867 = vst [vmem:[#allocation3 + $0x30] sm:$0xff] %v859
      %868 = vst [vmem:[#allocation3 + $0x38] sm:$0xff] %v859
      %869 = vst [vmem:[#allocation3 + $0x40] sm:$0xff] %v859
      %870 = vst [vmem:[#allocation3 + $0x48] sm:$0xff] %v859
      %871 = vst [vmem:[#allocation3 + $0x50] sm:$0xff] %v859
      %872 = vst [vmem:[#allocation3 + $0x58] sm:$0xff] %v859
      %873 = vst [vmem:[#allocation3 + $0x60] sm:$0xff] %v859
      %874 = vst [vmem:[#allocation3 + $0x68] sm:$0xff] %v859
      %875 = vst [vmem:[#allocation3 + $0x70] sm:$0xff] %v859
      %876 = vst [vmem:[#allocation3 + $0x78] sm:$0xff] %v859
      %s877 = smul.u32 %s24, 8
      %s878 = smul.addr %s877, 8
      %s879 = scalar_lea.vmem [#allocation2], %s878
      %v880 = vld [vmem:[%s879] sm:$0xff]
      %v881 = vld [vmem:[%s879 + $0x8] sm:$0xff]
      %v882 = vld [vmem:[%s879 + $0x10] sm:$0xff]
      %v883 = vld [vmem:[%s879 + $0x18] sm:$0xff]
      %v884 = vld [vmem:[%s879 + $0x20] sm:$0xff]
      %v885 = vld [vmem:[%s879 + $0x28] sm:$0xff]
      %v886 = vld [vmem:[%s879 + $0x30] sm:$0xff]
      %v887 = vld [vmem:[%s879 + $0x38] sm:$0xff]
      %v888 = vld [vmem:[#allocation3] sm:$0xff]
      %v889 = vld [vmem:[#allocation3 + $0x8] sm:$0xff]
      %v890 = vld [vmem:[#allocation3 + $0x10] sm:$0xff]
      %v891 = vld [vmem:[#allocation3 + $0x18] sm:$0xff]
      %v892 = vld [vmem:[#allocation3 + $0x20] sm:$0xff]
      %v893 = vld [vmem:[#allocation3 + $0x28] sm:$0xff]
      %v894 = vld [vmem:[#allocation3 + $0x30] sm:$0xff]
      %v895 = vld [vmem:[#allocation3 + $0x38] sm:$0xff]
      %v896 = vld [vmem:[#allocation3 + $0x40] sm:$0xff]
      %v897 = vld [vmem:[#allocation3 + $0x48] sm:$0xff]
      %v898 = vld [vmem:[#allocation3 + $0x50] sm:$0xff]
      %v899 = vld [vmem:[#allocation3 + $0x58] sm:$0xff]
      %v900 = vld [vmem:[#allocation3 + $0x60] sm:$0xff]
      %v901 = vld [vmem:[#allocation3 + $0x68] sm:$0xff]
      %v902 = vld [vmem:[#allocation3 + $0x70] sm:$0xff]
      %v903 = vld [vmem:[#allocation3 + $0x78] sm:$0xff]
      %v904 = vld [vmem:[%s3] sm:$0xf]
      %v905 = vld [vmem:[%s3 + $0x4] sm:$0xf]
      %v906 = vld [vmem:[%s3 + $0x8] sm:$0xf]
      %v907 = vld [vmem:[%s3 + $0xc] sm:$0xf]
      %v908 = vld [vmem:[%s3 + $0x10] sm:$0xf]
      %v909 = vld [vmem:[%s3 + $0x14] sm:$0xf]
      %v910 = vld [vmem:[%s3 + $0x18] sm:$0xf]
      %v911 = vld [vmem:[%s3 + $0x1c] sm:$0xf]
      %v912 = vld [vmem:[%s3 + $0x20] sm:$0xf]
      %v913 = vld [vmem:[%s3 + $0x24] sm:$0xf]
      %v914 = vld [vmem:[%s3 + $0x28] sm:$0xf]
      %v915 = vld [vmem:[%s3 + $0x2c] sm:$0xf]
      %v916 = vld [vmem:[%s3 + $0x30] sm:$0xf]
      %v917 = vld [vmem:[%s3 + $0x34] sm:$0xf]
      %v918 = vld [vmem:[%s3 + $0x38] sm:$0xf]
      %v919 = vld [vmem:[%s3 + $0x3c] sm:$0xf]
      %v936 = vunpack.c.l.b16 %v904
      %v937 = vunpack.c.l.b16 %v905
      %v938 = vunpack.c.l.b16 %v906
      %v939 = vunpack.c.l.b16 %v907
      %v940 = vunpack.c.l.b16 %v908
      %v941 = vunpack.c.l.b16 %v909
      %v942 = vunpack.c.l.b16 %v910
      %v943 = vunpack.c.l.b16 %v911
      %v944 = vunpack.c.l.b16 %v912
      %v945 = vunpack.c.l.b16 %v913
      %v946 = vunpack.c.l.b16 %v914
      %v947 = vunpack.c.l.b16 %v915
      %v948 = vunpack.c.l.b16 %v916
      %v949 = vunpack.c.l.b16 %v917
      %v950 = vunpack.c.l.b16 %v918
      %v951 = vunpack.c.l.b16 %v919
      %v952 = vpack.c.b16 %v937, %v936
      %v953 = vpack.c.b16 %v939, %v938
      %v954 = vpack.c.b16 %v941, %v940
      %v955 = vpack.c.b16 %v943, %v942
      %v956 = vpack.c.b16 %v945, %v944
      %v957 = vpack.c.b16 %v947, %v946
      %v958 = vpack.c.b16 %v949, %v948
      %v959 = vpack.c.b16 %v951, %v950
      %968 = vmatprep.subr.bf16.mxu0 0
      %969 = vmatpush1.bf16.msra.mxu0 %v952
      %970 = vmatprep.subr.bf16.mxu0 0
      %971 = vmatpush1.bf16.msra.mxu0 %v953
      %972 = vmatprep.subr.bf16.mxu0 0
      %973 = vmatpush1.bf16.msra.mxu0 %v954
      %974 = vmatprep.subr.bf16.mxu0 0
      %975 = vmatpush1.bf16.msra.mxu0 %v955
      %976 = vmatprep.subr.bf16.mxu0 0
      %977 = vmatpush1.bf16.msra.mxu0 %v956
      %978 = vmatprep.subr.bf16.mxu0 0
      %979 = vmatpush1.bf16.msra.mxu0 %v957
      %980 = vmatprep.subr.bf16.mxu0 0
      %981 = vmatpush1.bf16.msra.mxu0 %v958
      %982 = vmatprep.subr.bf16.mxu0 0
      %983 = vmatpush1.bf16.msra.mxu0 %v959
      %984 = vmatprep.subr.bf16.mxu0 0
      %985 = vmatpush1.bf16.msra.mxu0 0
      %986 = vmatprep.subr.bf16.mxu0 0
      %987 = vmatpush1.bf16.msra.mxu0 0
      %988 = vmatprep.subr.bf16.mxu0 0
      %989 = vmatpush1.bf16.msra.mxu0 0
      %990 = vmatprep.subr.bf16.mxu0 0
      %991 = vmatpush1.bf16.msra.mxu0 0
      %992 = vmatprep.subr.bf16.mxu0 0
      %993 = vmatpush1.bf16.msra.mxu0 0
      %994 = vmatprep.subr.bf16.mxu0 0
      %995 = vmatpush1.bf16.msra.mxu0 0
      %996 = vmatprep.subr.bf16.mxu0 0
      %997 = vmatpush1.bf16.msra.mxu0 0
      %998 = vmatprep.subr.bf16.mxu0 0
      %999 = vmatpush1.bf16.msra.mxu0 0
      %1000 = vmatprep.mubr.bf16.mxu0 0
      %1001 = vmatmul.mubr.bf16.gmra.mrb[0].mxu0 %v880
      %v1002 = vpop.f32.mrb[0].mxu0
      %v1003 = vadd.f32 0.0, %v1002
      %v1004 = vpop.f32.mrb[0].mxu0
      %v1005 = vpop.f32.mrb[0].mxu0
      %v1006 = vadd.f32 0.0, %v1005
      %v1007 = vpop.f32.mrb[0].mxu0
      %1008 = vmatprep.mubr.bf16.mxu0 0
      %1009 = vmatmul.mubr.bf16.gmra.mrb[0].mxu0 %v881
      %v1010 = vpop.f32.mrb[0].mxu0
      %v1011 = vadd.f32 0.0, %v1010
      %v1012 = vpop.f32.mrb[0].mxu0
      %v1013 = vpop.f32.mrb[0].mxu0
      %v1014 = vadd.f32 0.0, %v1013
      %v1015 = vpop.f32.mrb[0].mxu0
      %1016 = vmatprep.mubr.bf16.mxu0 0
      %1017 = vmatmul.mubr.bf16.gmra.mrb[0].mxu0 %v882
      %v1018 = vpop.f32.mrb[0].mxu0
      %v1019 = vadd.f32 0.0, %v1018
      %v1020 = vpop.f32.mrb[0].mxu0
      %v1021 = vpop.f32.mrb[0].mxu0
      %v1022 = vadd.f32 0.0, %v1021
      %v1023 = vpop.f32.mrb[0].mxu0
      %1024 = vmatprep.mubr.bf16.mxu0 0
      %1025 = vmatmul.mubr.bf16.gmra.mrb[0].mxu0 %v883
      %v1026 = vpop.f32.mrb[0].mxu0
      %v1027 = vadd.f32 0.0, %v1026
      %v1028 = vpop.f32.mrb[0].mxu0
      %v1029 = vpop.f32.mrb[0].mxu0
      %v1030 = vadd.f32 0.0, %v1029
      %v1031 = vpop.f32.mrb[0].mxu0
      %1032 = vmatprep.mubr.bf16.mxu0 0
      %1033 = vmatmul.mubr.bf16.gmra.mrb[0].mxu0 %v884
      %v1034 = vpop.f32.mrb[0].mxu0
      %v1035 = vadd.f32 0.0, %v1034
      %v1036 = vpop.f32.mrb[0].mxu0
      %v1037 = vpop.f32.mrb[0].mxu0
      %v1038 = vadd.f32 0.0, %v1037
      %v1039 = vpop.f32.mrb[0].mxu0
      %1040 = vmatprep.mubr.bf16.mxu0 0
      %1041 = vmatmul.mubr.bf16.gmra.mrb[0].mxu0 %v885
      %v1042 = vpop.f32.mrb[0].mxu0
      %v1043 = vadd.f32 0.0, %v1042
      %v1044 = vpop.f32.mrb[0].mxu0
      %v1045 = vpop.f32.mrb[0].mxu0
      %v1046 = vadd.f32 0.0, %v1045
      %v1047 = vpop.f32.mrb[0].mxu0
      %1048 = vmatprep.mubr.bf16.mxu0 0
      %1049 = vmatmul.mubr.bf16.gmra.mrb[0].mxu0 %v886
      %v1050 = vpop.f32.mrb[0].mxu0
      %v1051 = vadd.f32 0.0, %v1050
      %v1052 = vpop.f32.mrb[0].mxu0
      %v1053 = vpop.f32.mrb[0].mxu0
      %v1054 = vadd.f32 0.0, %v1053
      %v1055 = vpop.f32.mrb[0].mxu0
      %1056 = vmatprep.mubr.bf16.mxu0 0
      %1057 = vmatmul.mubr.bf16.gmra.mrb[0].mxu0 %v887
      %v1058 = vpop.f32.mrb[0].mxu0
      %v1059 = vadd.f32 0.0, %v1058
      %v1060 = vpop.f32.mrb[0].mxu0
      %v1061 = vpop.f32.mrb[0].mxu0
      %v1062 = vadd.f32 0.0, %v1061
      %v1063 = vpop.f32.mrb[0].mxu0
      %1064 = vdwg.mxu0
      %v1065 = vadd.f32 %v888, %v1003
      %v1066 = vadd.f32 %v889, %v1006
      %v1067 = vadd.f32 %v890, %v1011
      %v1068 = vadd.f32 %v891, %v1014
      %v1069 = vadd.f32 %v892, %v1019
      %v1070 = vadd.f32 %v893, %v1022
      %v1071 = vadd.f32 %v894, %v1027
      %v1072 = vadd.f32 %v895, %v1030
      %v1073 = vadd.f32 %v896, %v1035
      %v1074 = vadd.f32 %v897, %v1038
      %v1075 = vadd.f32 %v898, %v1043
      %v1076 = vadd.f32 %v899, %v1046
      %v1077 = vadd.f32 %v900, %v1051
      %v1078 = vadd.f32 %v901, %v1054
      %v1079 = vadd.f32 %v902, %v1059
      %v1080 = vadd.f32 %v903, %v1062
      %1081 = vst [vmem:[#allocation3] sm:$0xff] %v1065
      %1082 = vst [vmem:[#allocation3 + $0x8] sm:$0xff] %v1066
      %1083 = vst [vmem:[#allocation3 + $0x10] sm:$0xff] %v1067
      %1084 = vst [vmem:[#allocation3 + $0x18] sm:$0xff] %v1068
      %1085 = vst [vmem:[#allocation3 + $0x20] sm:$0xff] %v1069
      %1086 = vst [vmem:[#allocation3 + $0x28] sm:$0xff] %v1070
      %1087 = vst [vmem:[#allocation3 + $0x30] sm:$0xff] %v1071
      %1088 = vst [vmem:[#allocation3 + $0x38] sm:$0xff] %v1072
      %1089 = vst [vmem:[#allocation3 + $0x40] sm:$0xff] %v1073
      %1090 = vst [vmem:[#allocation3 + $0x48] sm:$0xff] %v1074
      %1091 = vst [vmem:[#allocation3 + $0x50] sm:$0xff] %v1075
      %1092 = vst [vmem:[#allocation3 + $0x58] sm:$0xff] %v1076
      %1093 = vst [vmem:[#allocation3 + $0x60] sm:$0xff] %v1077
      %1094 = vst [vmem:[#allocation3 + $0x68] sm:$0xff] %v1078
      %1095 = vst [vmem:[#allocation3 + $0x70] sm:$0xff] %v1079
      %1096 = vst [vmem:[#allocation3 + $0x78] sm:$0xff] %v1080
      %s1097 = sadd.s32 %s877, 18
      %s1098 = smul.addr %s1097, 8
      %s1099 = scalar_lea.vmem [#allocation2], %s1098
      %v1100 = vld [vmem:[%s1099] sm:$0xff]
      %v1101 = vld [vmem:[%s1099 + $0x8] sm:$0xff]
      %v1102 = vld [vmem:[%s1099 + $0x10] sm:$0xff]
      %v1103 = vld [vmem:[%s1099 + $0x18] sm:$0xff]
      %v1104 = vld [vmem:[%s1099 + $0x20] sm:$0xff]
      %v1105 = vld [vmem:[%s1099 + $0x28] sm:$0xff]
      %v1106 = vld [vmem:[%s1099 + $0x30] sm:$0xff]
      %v1107 = vld [vmem:[%s1099 + $0x38] sm:$0xff]
      %v1108 = vld [vmem:[#allocation3] sm:$0xff]
      %v1109 = vld [vmem:[#allocation3 + $0x8] sm:$0xff]
      %v1110 = vld [vmem:[#allocation3 + $0x10] sm:$0xff]
      %v1111 = vld [vmem:[#allocation3 + $0x18] sm:$0xff]
      %v1112 = vld [vmem:[#allocation3 + $0x20] sm:$0xff]
      %v1113 = vld [vmem:[#allocation3 + $0x28] sm:$0xff]
      %v1114 = vld [vmem:[#allocation3 + $0x30] sm:$0xff]
      %v1115 = vld [vmem:[#allocation3 + $0x38] sm:$0xff]
      %v1116 = vld [vmem:[#allocation3 + $0x40] sm:$0xff]
      %v1117 = vld [vmem:[#allocation3 + $0x48] sm:$0xff]
      %v1118 = vld [vmem:[#allocation3 + $0x50] sm:$0xff]
      %v1119 = vld [vmem:[#allocation3 + $0x58] sm:$0xff]
      %v1120 = vld [vmem:[#allocation3 + $0x60] sm:$0xff]
      %v1121 = vld [vmem:[#allocation3 + $0x68] sm:$0xff]
      %v1122 = vld [vmem:[#allocation3 + $0x70] sm:$0xff]
      %v1123 = vld [vmem:[#allocation3 + $0x78] sm:$0xff]
      %s1124 = scalar_lea.vmem %s3, 64
      %v1125 = vld [vmem:[%s1124] sm:$0xf]
      %v1126 = vld [vmem:[%s1124 + $0x4] sm:$0xf]
      %v1127 = vld [vmem:[%s1124 + $0x8] sm:$0xf]
      %v1128 = vld [vmem:[%s1124 + $0xc] sm:$0xf]
      %v1129 = vld [vmem:[%s1124 + $0x10] sm:$0xf]
      %v1130 = vld [vmem:[%s1124 + $0x14] sm:$0xf]
      %v1131 = vld [vmem:[%s1124 + $0x18] sm:$0xf]
      %v1132 = vld [vmem:[%s1124 + $0x1c] sm:$0xf]
      %v1133 = vld [vmem:[%s1124 + $0x20] sm:$0xf]
      %v1134 = vld [vmem:[%s1124 + $0x24] sm:$0xf]
      %v1135 = vld [vmem:[%s1124 + $0x28] sm:$0xf]
      %v1136 = vld [vmem:[%s1124 + $0x2c] sm:$0xf]
      %v1137 = vld [vmem:[%s1124 + $0x30] sm:$0xf]
      %v1138 = vld [vmem:[%s1124 + $0x34] sm:$0xf]
      %v1139 = vld [vmem:[%s1124 + $0x38] sm:$0xf]
      %v1140 = vld [vmem:[%s1124 + $0x3c] sm:$0xf]
      %v1157 = vunpack.c.l.b16 %v1125
      %v1158 = vunpack.c.l.b16 %v1126
      %v1159 = vunpack.c.l.b16 %v1127
      %v1160 = vunpack.c.l.b16 %v1128
      %v1161 = vunpack.c.l.b16 %v1129
      %v1162 = vunpack.c.l.b16 %v1130
      %v1163 = vunpack.c.l.b16 %v1131
      %v1164 = vunpack.c.l.b16 %v1132
      %v1165 = vunpack.c.l.b16 %v1133
      %v1166 = vunpack.c.l.b16 %v1134
      %v1167 = vunpack.c.l.b16 %v1135
      %v1168 = vunpack.c.l.b16 %v1136
      %v1169 = vunpack.c.l.b16 %v1137
      %v1170 = vunpack.c.l.b16 %v1138
      %v1171 = vunpack.c.l.b16 %v1139
      %v1172 = vunpack.c.l.b16 %v1140
      %v1173 = vpack.c.b16 %v1158, %v1157
      %v1174 = vpack.c.b16 %v1160, %v1159
      %v1175 = vpack.c.b16 %v1162, %v1161
      %v1176 = vpack.c.b16 %v1164, %v1163
      %v1177 = vpack.c.b16 %v1166, %v1165
      %v1178 = vpack.c.b16 %v1168, %v1167
      %v1179 = vpack.c.b16 %v1170, %v1169
      %v1180 = vpack.c.b16 %v1172, %v1171
      %1189 = vmatprep.subr.bf16.mxu0 0
      %1190 = vmatpush1.bf16.msra.mxu0 %v1173
      %1191 = vmatprep.subr.bf16.mxu0 0
      %1192 = vmatpush1.bf16.msra.mxu0 %v1174
      %1193 = vmatprep.subr.bf16.mxu0 0
      %1194 = vmatpush1.bf16.msra.mxu0 %v1175
      %1195 = vmatprep.subr.bf16.mxu0 0
      %1196 = vmatpush1.bf16.msra.mxu0 %v1176
      %1197 = vmatprep.subr.bf16.mxu0 0
      %1198 = vmatpush1.bf16.msra.mxu0 %v1177
      %1199 = vmatprep.subr.bf16.mxu0 0
      %1200 = vmatpush1.bf16.msra.mxu0 %v1178
      %1201 = vmatprep.subr.bf16.mxu0 0
      %1202 = vmatpush1.bf16.msra.mxu0 %v1179
      %1203 = vmatprep.subr.bf16.mxu0 0
      %1204 = vmatpush1.bf16.msra.mxu0 %v1180
      %1205 = vmatprep.subr.bf16.mxu0 0
      %1206 = vmatpush1.bf16.msra.mxu0 0
      %1207 = vmatprep.subr.bf16.mxu0 0
      %1208 = vmatpush1.bf16.msra.mxu0 0
      %1209 = vmatprep.subr.bf16.mxu0 0
      %1210 = vmatpush1.bf16.msra.mxu0 0
      %1211 = vmatprep.subr.bf16.mxu0 0
      %1212 = vmatpush1.bf16.msra.mxu0 0
      %1213 = vmatprep.subr.bf16.mxu0 0
      %1214 = vmatpush1.bf16.msra.mxu0 0
      %1215 = vmatprep.subr.bf16.mxu0 0
      %1216 = vmatpush1.bf16.msra.mxu0 0
      %1217 = vmatprep.subr.bf16.mxu0 0
      %1218 = vmatpush1.bf16.msra.mxu0 0
      %1219 = vmatprep.subr.bf16.mxu0 0
      %1220 = vmatpush1.bf16.msra.mxu0 0
      %1221 = vmatprep.mubr.bf16.mxu0 0
      %1222 = vmatmul.mubr.bf16.gmra.mrb[0].mxu0 %v1100
      %v1223 = vpop.f32.mrb[0].mxu0
      %v1224 = vadd.f32 0.0, %v1223
      %v1225 = vpop.f32.mrb[0].mxu0
      %v1226 = vpop.f32.mrb[0].mxu0
      %v1227 = vadd.f32 0.0, %v1226
      %v1228 = vpop.f32.mrb[0].mxu0
      %1229 = vmatprep.mubr.bf16.mxu0 0
      %1230 = vmatmul.mubr.bf16.gmra.mrb[0].mxu0 %v1101
      %v1231 = vpop.f32.mrb[0].mxu0
      %v1232 = vadd.f32 0.0, %v1231
      %v1233 = vpop.f32.mrb[0].mxu0
      %v1234 = vpop.f32.mrb[0].mxu0
      %v1235 = vadd.f32 0.0, %v1234
      %v1236 = vpop.f32.mrb[0].mxu0
      %1237 = vmatprep.mubr.bf16.mxu0 0
      %1238 = vmatmul.mubr.bf16.gmra.mrb[0].mxu0 %v1102
      %v1239 = vpop.f32.mrb[0].mxu0
      %v1240 = vadd.f32 0.0, %v1239
      %v1241 = vpop.f32.mrb[0].mxu0
      %v1242 = vpop.f32.mrb[0].mxu0
      %v1243 = vadd.f32 0.0, %v1242
      %v1244 = vpop.f32.mrb[0].mxu0
      %1245 = vmatprep.mubr.bf16.mxu0 0
      %1246 = vmatmul.mubr.bf16.gmra.mrb[0].mxu0 %v1103
      %v1247 = vpop.f32.mrb[0].mxu0
      %v1248 = vadd.f32 0.0, %v1247
      %v1249 = vpop.f32.mrb[0].mxu0
      %v1250 = vpop.f32.mrb[0].mxu0
      %v1251 = vadd.f32 0.0, %v1250
      %v1252 = vpop.f32.mrb[0].mxu0
      %1253 = vmatprep.mubr.bf16.mxu0 0
      %1254 = vmatmul.mubr.bf16.gmra.mrb[0].mxu0 %v1104
      %v1255 = vpop.f32.mrb[0].mxu0
      %v1256 = vadd.f32 0.0, %v1255
      %v1257 = vpop.f32.mrb[0].mxu0
      %v1258 = vpop.f32.mrb[0].mxu0
      %v1259 = vadd.f32 0.0, %v1258
      %v1260 = vpop.f32.mrb[0].mxu0
      %1261 = vmatprep.mubr.bf16.mxu0 0
      %1262 = vmatmul.mubr.bf16.gmra.mrb[0].mxu0 %v1105
      %v1263 = vpop.f32.mrb[0].mxu0
      %v1264 = vadd.f32 0.0, %v1263
      %v1265 = vpop.f32.mrb[0].mxu0
      %v1266 = vpop.f32.mrb[0].mxu0
      %v1267 = vadd.f32 0.0, %v1266
      %v1268 = vpop.f32.mrb[0].mxu0
      %1269 = vmatprep.mubr.bf16.mxu0 0
      %1270 = vmatmul.mubr.bf16.gmra.mrb[0].mxu0 %v1106
      %v1271 = vpop.f32.mrb[0].mxu0
      %v1272 = vadd.f32 0.0, %v1271
      %v1273 = vpop.f32.mrb[0].mxu0
      %v1274 = vpop.f32.mrb[0].mxu0
      %v1275 = vadd.f32 0.0, %v1274
      %v1276 = vpop.f32.mrb[0].mxu0
      %1277 = vmatprep.mubr.bf16.mxu0 0
      %1278 = vmatmul.mubr.bf16.gmra.mrb[0].mxu0 %v1107
      %v1279 = vpop.f32.mrb[0].mxu0
      %v1280 = vadd.f32 0.0, %v1279
      %v1281 = vpop.f32.mrb[0].mxu0
      %v1282 = vpop.f32.mrb[0].mxu0
      %v1283 = vadd.f32 0.0, %v1282
      %v1284 = vpop.f32.mrb[0].mxu0
      %1285 = vdwg.mxu0
      %v1286 = vadd.f32 %v1108, %v1224
      %v1287 = vadd.f32 %v1109, %v1227
      %v1288 = vadd.f32 %v1110, %v1232
      %v1289 = vadd.f32 %v1111, %v1235
      %v1290 = vadd.f32 %v1112, %v1240
      %v1291 = vadd.f32 %v1113, %v1243
      %v1292 = vadd.f32 %v1114, %v1248
      %v1293 = vadd.f32 %v1115, %v1251
      %v1294 = vadd.f32 %v1116, %v1256
      %v1295 = vadd.f32 %v1117, %v1259
      %v1296 = vadd.f32 %v1118, %v1264
      %v1297 = vadd.f32 %v1119, %v1267
      %v1298 = vadd.f32 %v1120, %v1272
      %v1299 = vadd.f32 %v1121, %v1275
      %v1300 = vadd.f32 %v1122, %v1280
      %v1301 = vadd.f32 %v1123, %v1283
      %1302 = vst [vmem:[#allocation3] sm:$0xff] %v1286
      %1303 = vst [vmem:[#allocation3 + $0x8] sm:$0xff] %v1287
      %1304 = vst [vmem:[#allocation3 + $0x10] sm:$0xff] %v1288
      %1305 = vst [vmem:[#allocation3 + $0x18] sm:$0xff] %v1289
      %1306 = vst [vmem:[#allocation3 + $0x20] sm:$0xff] %v1290
      %1307 = vst [vmem:[#allocation3 + $0x28] sm:$0xff] %v1291
      %1308 = vst [vmem:[#allocation3 + $0x30] sm:$0xff] %v1292
      %1309 = vst [vmem:[#allocation3 + $0x38] sm:$0xff] %v1293
      %1310 = vst [vmem:[#allocation3 + $0x40] sm:$0xff] %v1294
      %1311 = vst [vmem:[#allocation3 + $0x48] sm:$0xff] %v1295
      %1312 = vst [vmem:[#allocation3 + $0x50] sm:$0xff] %v1296
      %1313 = vst [vmem:[#allocation3 + $0x58] sm:$0xff] %v1297
      %1314 = vst [vmem:[#allocation3 + $0x60] sm:$0xff] %v1298
      %1315 = vst [vmem:[#allocation3 + $0x68] sm:$0xff] %v1299
      %1316 = vst [vmem:[#allocation3 + $0x70] sm:$0xff] %v1300
      %1317 = vst [vmem:[#allocation3 + $0x78] sm:$0xff] %v1301
      %s1318 = sadd.s32 %s877, 36
      %s1319 = smul.addr %s1318, 8
      %s1320 = scalar_lea.vmem [#allocation2], %s1319
      %v1321 = vld [vmem:[%s1320] sm:$0xff]
      %v1322 = vld [vmem:[%s1320 + $0x8] sm:$0xff]
      %v1323 = vld [vmem:[%s1320 + $0x10] sm:$0xff]
      %v1324 = vld [vmem:[%s1320 + $0x18] sm:$0xff]
      %v1325 = vld [vmem:[%s1320 + $0x20] sm:$0xff]
      %v1326 = vld [vmem:[%s1320 + $0x28] sm:$0xff]
      %v1327 = vld [vmem:[%s1320 + $0x30] sm:$0xff]
      %v1328 = vld [vmem:[%s1320 + $0x38] sm:$0xff]
      %v1329 = vld [vmem:[#allocation3] sm:$0xff]
      %v1330 = vld [vmem:[#allocation3 + $0x8] sm:$0xff]
      %v1331 = vld [vmem:[#allocation3 + $0x10] sm:$0xff]
      %v1332 = vld [vmem:[#allocation3 + $0x18] sm:$0xff]
      %v1333 = vld [vmem:[#allocation3 + $0x20] sm:$0xff]
      %v1334 = vld [vmem:[#allocation3 + $0x28] sm:$0xff]
      %v1335 = vld [vmem:[#allocation3 + $0x30] sm:$0xff]
      %v1336 = vld [vmem:[#allocation3 + $0x38] sm:$0xff]
      %v1337 = vld [vmem:[#allocation3 + $0x40] sm:$0xff]
      %v1338 = vld [vmem:[#allocation3 + $0x48] sm:$0xff]
      %v1339 = vld [vmem:[#allocation3 + $0x50] sm:$0xff]
      %v1340 = vld [vmem:[#allocation3 + $0x58] sm:$0xff]
      %v1341 = vld [vmem:[#allocation3 + $0x60] sm:$0xff]
      %v1342 = vld [vmem:[#allocation3 + $0x68] sm:$0xff]
      %v1343 = vld [vmem:[#allocation3 + $0x70] sm:$0xff]
      %v1344 = vld [vmem:[#allocation3 + $0x78] sm:$0xff]
      %s1345 = scalar_lea.vmem %s3, 128
      %v1346 = vld [vmem:[%s1345] sm:$0xf]
      %v1347 = vld [vmem:[%s1345 + $0x4] sm:$0xf]
      %v1348 = vld [vmem:[%s1345 + $0x8] sm:$0xf]
      %v1349 = vld [vmem:[%s1345 + $0xc] sm:$0xf]
      %v1350 = vld [vmem:[%s1345 + $0x10] sm:$0xf]
      %v1351 = vld [vmem:[%s1345 + $0x14] sm:$0xf]
      %v1352 = vld [vmem:[%s1345 + $0x18] sm:$0xf]
      %v1353 = vld [vmem:[%s1345 + $0x1c] sm:$0xf]
      %v1354 = vld [vmem:[%s1345 + $0x20] sm:$0xf]
      %v1355 = vld [vmem:[%s1345 + $0x24] sm:$0xf]
      %v1356 = vld [vmem:[%s1345 + $0x28] sm:$0xf]
      %v1357 = vld [vmem:[%s1345 + $0x2c] sm:$0xf]
      %v1358 = vld [vmem:[%s1345 + $0x30] sm:$0xf]
      %v1359 = vld [vmem:[%s1345 + $0x34] sm:$0xf]
      %v1360 = vld [vmem:[%s1345 + $0x38] sm:$0xf]
      %v1361 = vld [vmem:[%s1345 + $0x3c] sm:$0xf]
      %v1378 = vunpack.c.l.b16 %v1346
      %v1379 = vunpack.c.l.b16 %v1347
      %v1380 = vunpack.c.l.b16 %v1348
      %v1381 = vunpack.c.l.b16 %v1349
      %v1382 = vunpack.c.l.b16 %v1350
      %v1383 = vunpack.c.l.b16 %v1351
      %v1384 = vunpack.c.l.b16 %v1352
      %v1385 = vunpack.c.l.b16 %v1353
      %v1386 = vunpack.c.l.b16 %v1354
      %v1387 = vunpack.c.l.b16 %v1355
      %v1388 = vunpack.c.l.b16 %v1356
      %v1389 = vunpack.c.l.b16 %v1357
      %v1390 = vunpack.c.l.b16 %v1358
      %v1391 = vunpack.c.l.b16 %v1359
      %v1392 = vunpack.c.l.b16 %v1360
      %v1393 = vunpack.c.l.b16 %v1361
      %v1394 = vpack.c.b16 %v1379, %v1378
      %v1395 = vpack.c.b16 %v1381, %v1380
      %v1396 = vpack.c.b16 %v1383, %v1382
      %v1397 = vpack.c.b16 %v1385, %v1384
      %v1398 = vpack.c.b16 %v1387, %v1386
      %v1399 = vpack.c.b16 %v1389, %v1388
      %v1400 = vpack.c.b16 %v1391, %v1390
      %v1401 = vpack.c.b16 %v1393, %v1392
      %1410 = vmatprep.subr.bf16.mxu0 0
      %1411 = vmatpush1.bf16.msra.mxu0 %v1394
      %1412 = vmatprep.subr.bf16.mxu0 0
      %1413 = vmatpush1.bf16.msra.mxu0 %v1395
      %1414 = vmatprep.subr.bf16.mxu0 0
      %1415 = vmatpush1.bf16.msra.mxu0 %v1396
      %1416 = vmatprep.subr.bf16.mxu0 0
      %1417 = vmatpush1.bf16.msra.mxu0 %v1397
      %1418 = vmatprep.subr.bf16.mxu0 0
      %1419 = vmatpush1.bf16.msra.mxu0 %v1398
      %1420 = vmatprep.subr.bf16.mxu0 0
      %1421 = vmatpush1.bf16.msra.mxu0 %v1399
      %1422 = vmatprep.subr.bf16.mxu0 0
      %1423 = vmatpush1.bf16.msra.mxu0 %v1400
      %1424 = vmatprep.subr.bf16.mxu0 0
      %1425 = vmatpush1.bf16.msra.mxu0 %v1401
      %1426 = vmatprep.subr.bf16.mxu0 0
      %1427 = vmatpush1.bf16.msra.mxu0 0
      %1428 = vmatprep.subr.bf16.mxu0 0
      %1429 = vmatpush1.bf16.msra.mxu0 0
      %1430 = vmatprep.subr.bf16.mxu0 0
      %1431 = vmatpush1.bf16.msra.mxu0 0
      %1432 = vmatprep.subr.bf16.mxu0 0
      %1433 = vmatpush1.bf16.msra.mxu0 0
      %1434 = vmatprep.subr.bf16.mxu0 0
      %1435 = vmatpush1.bf16.msra.mxu0 0
      %1436 = vmatprep.subr.bf16.mxu0 0
      %1437 = vmatpush1.bf16.msra.mxu0 0
      %1438 = vmatprep.subr.bf16.mxu0 0
      %1439 = vmatpush1.bf16.msra.mxu0 0
      %1440 = vmatprep.subr.bf16.mxu0 0
      %1441 = vmatpush1.bf16.msra.mxu0 0
      %1442 = vmatprep.mubr.bf16.mxu0 0
      %1443 = vmatmul.mubr.bf16.gmra.mrb[0].mxu0 %v1321
      %v1444 = vpop.f32.mrb[0].mxu0
      %v1445 = vadd.f32 0.0, %v1444
      %v1446 = vpop.f32.mrb[0].mxu0
      %v1447 = vpop.f32.mrb[0].mxu0
      %v1448 = vadd.f32 0.0, %v1447
      %v1449 = vpop.f32.mrb[0].mxu0
      %1450 = vmatprep.mubr.bf16.mxu0 0
      %1451 = vmatmul.mubr.bf16.gmra.mrb[0].mxu0 %v1322
      %v1452 = vpop.f32.mrb[0].mxu0
      %v1453 = vadd.f32 0.0, %v1452
      %v1454 = vpop.f32.mrb[0].mxu0
      %v1455 = vpop.f32.mrb[0].mxu0
      %v1456 = vadd.f32 0.0, %v1455
      %v1457 = vpop.f32.mrb[0].mxu0
      %1458 = vmatprep.mubr.bf16.mxu0 0
      %1459 = vmatmul.mubr.bf16.gmra.mrb[0].mxu0 %v1323
      %v1460 = vpop.f32.mrb[0].mxu0
      %v1461 = vadd.f32 0.0, %v1460
      %v1462 = vpop.f32.mrb[0].mxu0
      %v1463 = vpop.f32.mrb[0].mxu0
      %v1464 = vadd.f32 0.0, %v1463
      %v1465 = vpop.f32.mrb[0].mxu0
      %1466 = vmatprep.mubr.bf16.mxu0 0
      %1467 = vmatmul.mubr.bf16.gmra.mrb[0].mxu0 %v1324
      %v1468 = vpop.f32.mrb[0].mxu0
      %v1469 = vadd.f32 0.0, %v1468
      %v1470 = vpop.f32.mrb[0].mxu0
      %v1471 = vpop.f32.mrb[0].mxu0
      %v1472 = vadd.f32 0.0, %v1471
      %v1473 = vpop.f32.mrb[0].mxu0
      %1474 = vmatprep.mubr.bf16.mxu0 0
      %1475 = vmatmul.mubr.bf16.gmra.mrb[0].mxu0 %v1325
      %v1476 = vpop.f32.mrb[0].mxu0
      %v1477 = vadd.f32 0.0, %v1476
      %v1478 = vpop.f32.mrb[0].mxu0
      %v1479 = vpop.f32.mrb[0].mxu0
      %v1480 = vadd.f32 0.0, %v1479
      %v1481 = vpop.f32.mrb[0].mxu0
      %1482 = vmatprep.mubr.bf16.mxu0 0
      %1483 = vmatmul.mubr.bf16.gmra.mrb[0].mxu0 %v1326
      %v1484 = vpop.f32.mrb[0].mxu0
      %v1485 = vadd.f32 0.0, %v1484
      %v1486 = vpop.f32.mrb[0].mxu0
      %v1487 = vpop.f32.mrb[0].mxu0
      %v1488 = vadd.f32 0.0, %v1487
      %v1489 = vpop.f32.mrb[0].mxu0
      %1490 = vmatprep.mubr.bf16.mxu0 0
      %1491 = vmatmul.mubr.bf16.gmra.mrb[0].mxu0 %v1327
      %v1492 = vpop.f32.mrb[0].mxu0
      %v1493 = vadd.f32 0.0, %v1492
      %v1494 = vpop.f32.mrb[0].mxu0
      %v1495 = vpop.f32.mrb[0].mxu0
      %v1496 = vadd.f32 0.0, %v1495
      %v1497 = vpop.f32.mrb[0].mxu0
      %1498 = vmatprep.mubr.bf16.mxu0 0
      %1499 = vmatmul.mubr.bf16.gmra.mrb[0].mxu0 %v1328
      %v1500 = vpop.f32.mrb[0].mxu0
      %v1501 = vadd.f32 0.0, %v1500
      %v1502 = vpop.f32.mrb[0].mxu0
      %v1503 = vpop.f32.mrb[0].mxu0
      %v1504 = vadd.f32 0.0, %v1503
      %v1505 = vpop.f32.mrb[0].mxu0
      %1506 = vdwg.mxu0
      %v1507 = vadd.f32 %v1329, %v1445
      %v1508 = vadd.f32 %v1330, %v1448
      %v1509 = vadd.f32 %v1331, %v1453
      %v1510 = vadd.f32 %v1332, %v1456
      %v1511 = vadd.f32 %v1333, %v1461
      %v1512 = vadd.f32 %v1334, %v1464
      %v1513 = vadd.f32 %v1335, %v1469
      %v1514 = vadd.f32 %v1336, %v1472
      %v1515 = vadd.f32 %v1337, %v1477
      %v1516 = vadd.f32 %v1338, %v1480
      %v1517 = vadd.f32 %v1339, %v1485
      %v1518 = vadd.f32 %v1340, %v1488
      %v1519 = vadd.f32 %v1341, %v1493
      %v1520 = vadd.f32 %v1342, %v1496
      %v1521 = vadd.f32 %v1343, %v1501
      %v1522 = vadd.f32 %v1344, %v1504
      %1523 = vst [vmem:[#allocation3] sm:$0xff] %v1507
      %1524 = vst [vmem:[#allocation3 + $0x8] sm:$0xff] %v1508
      %1525 = vst [vmem:[#allocation3 + $0x10] sm:$0xff] %v1509
      %1526 = vst [vmem:[#allocation3 + $0x18] sm:$0xff] %v1510
      %1527 = vst [vmem:[#allocation3 + $0x20] sm:$0xff] %v1511
      %1528 = vst [vmem:[#allocation3 + $0x28] sm:$0xff] %v1512
      %1529 = vst [vmem:[#allocation3 + $0x30] sm:$0xff] %v1513
      %1530 = vst [vmem:[#allocation3 + $0x38] sm:$0xff] %v1514
      %1531 = vst [vmem:[#allocation3 + $0x40] sm:$0xff] %v1515
      %1532 = vst [vmem:[#allocation3 + $0x48] sm:$0xff] %v1516
      %1533 = vst [vmem:[#allocation3 + $0x50] sm:$0xff] %v1517
      %1534 = vst [vmem:[#allocation3 + $0x58] sm:$0xff] %v1518
      %1535 = vst [vmem:[#allocation3 + $0x60] sm:$0xff] %v1519
      %1536 = vst [vmem:[#allocation3 + $0x68] sm:$0xff] %v1520
      %1537 = vst [vmem:[#allocation3 + $0x70] sm:$0xff] %v1521
      %1538 = vst [vmem:[#allocation3 + $0x78] sm:$0xff] %v1522
      %s1539 = sadd.s32 %s877, 1
      %s1540 = smul.addr %s1539, 8
      %s1541 = scalar_lea.vmem [#allocation2], %s1540
      %v1542 = vld [vmem:[%s1541] sm:$0xff]
      %v1543 = vld [vmem:[%s1541 + $0x8] sm:$0xff]
      %v1544 = vld [vmem:[%s1541 + $0x10] sm:$0xff]
      %v1545 = vld [vmem:[%s1541 + $0x18] sm:$0xff]
      %v1546 = vld [vmem:[%s1541 + $0x20] sm:$0xff]
      %v1547 = vld [vmem:[%s1541 + $0x28] sm:$0xff]
      %v1548 = vld [vmem:[%s1541 + $0x30] sm:$0xff]
      %v1549 = vld [vmem:[%s1541 + $0x38] sm:$0xff]
      %v1550 = vld [vmem:[#allocation3] sm:$0xff]
      %v1551 = vld [vmem:[#allocation3 + $0x8] sm:$0xff]
      %v1552 = vld [vmem:[#allocation3 + $0x10] sm:$0xff]
      %v1553 = vld [vmem:[#allocation3 + $0x18] sm:$0xff]
      %v1554 = vld [vmem:[#allocation3 + $0x20] sm:$0xff]
      %v1555 = vld [vmem:[#allocation3 + $0x28] sm:$0xff]
      %v1556 = vld [vmem:[#allocation3 + $0x30] sm:$0xff]
      %v1557 = vld [vmem:[#allocation3 + $0x38] sm:$0xff]
      %v1558 = vld [vmem:[#allocation3 + $0x40] sm:$0xff]
      %v1559 = vld [vmem:[#allocation3 + $0x48] sm:$0xff]
      %v1560 = vld [vmem:[#allocation3 + $0x50] sm:$0xff]
      %v1561 = vld [vmem:[#allocation3 + $0x58] sm:$0xff]
      %v1562 = vld [vmem:[#allocation3 + $0x60] sm:$0xff]
      %v1563 = vld [vmem:[#allocation3 + $0x68] sm:$0xff]
      %v1564 = vld [vmem:[#allocation3 + $0x70] sm:$0xff]
      %v1565 = vld [vmem:[#allocation3 + $0x78] sm:$0xff]
      %s1566 = scalar_lea.vmem %s3, 192
      %v1567 = vld [vmem:[%s1566] sm:$0xf]
      %v1568 = vld [vmem:[%s1566 + $0x4] sm:$0xf]
      %v1569 = vld [vmem:[%s1566 + $0x8] sm:$0xf]
      %v1570 = vld [vmem:[%s1566 + $0xc] sm:$0xf]
      %v1571 = vld [vmem:[%s1566 + $0x10] sm:$0xf]
      %v1572 = vld [vmem:[%s1566 + $0x14] sm:$0xf]
      %v1573 = vld [vmem:[%s1566 + $0x18] sm:$0xf]
      %v1574 = vld [vmem:[%s1566 + $0x1c] sm:$0xf]
      %v1575 = vld [vmem:[%s1566 + $0x20] sm:$0xf]
      %v1576 = vld [vmem:[%s1566 + $0x24] sm:$0xf]
      %v1577 = vld [vmem:[%s1566 + $0x28] sm:$0xf]
      %v1578 = vld [vmem:[%s1566 + $0x2c] sm:$0xf]
      %v1579 = vld [vmem:[%s1566 + $0x30] sm:$0xf]
      %v1580 = vld [vmem:[%s1566 + $0x34] sm:$0xf]
      %v1581 = vld [vmem:[%s1566 + $0x38] sm:$0xf]
      %v1582 = vld [vmem:[%s1566 + $0x3c] sm:$0xf]
      %v1599 = vunpack.c.l.b16 %v1567
      %v1600 = vunpack.c.l.b16 %v1568
      %v1601 = vunpack.c.l.b16 %v1569
      %v1602 = vunpack.c.l.b16 %v1570
      %v1603 = vunpack.c.l.b16 %v1571
      %v1604 = vunpack.c.l.b16 %v1572
      %v1605 = vunpack.c.l.b16 %v1573
      %v1606 = vunpack.c.l.b16 %v1574
      %v1607 = vunpack.c.l.b16 %v1575
      %v1608 = vunpack.c.l.b16 %v1576
      %v1609 = vunpack.c.l.b16 %v1577
      %v1610 = vunpack.c.l.b16 %v1578
      %v1611 = vunpack.c.l.b16 %v1579
      %v1612 = vunpack.c.l.b16 %v1580
      %v1613 = vunpack.c.l.b16 %v1581
      %v1614 = vunpack.c.l.b16 %v1582
      %v1615 = vpack.c.b16 %v1600, %v1599
      %v1616 = vpack.c.b16 %v1602, %v1601
      %v1617 = vpack.c.b16 %v1604, %v1603
      %v1618 = vpack.c.b16 %v1606, %v1605
      %v1619 = vpack.c.b16 %v1608, %v1607
      %v1620 = vpack.c.b16 %v1610, %v1609
      %v1621 = vpack.c.b16 %v1612, %v1611
      %v1622 = vpack.c.b16 %v1614, %v1613
      %1631 = vmatprep.subr.bf16.mxu0 0
      %1632 = vmatpush1.bf16.msra.mxu0 %v1615
      %1633 = vmatprep.subr.bf16.mxu0 0
      %1634 = vmatpush1.bf16.msra.mxu0 %v1616
      %1635 = vmatprep.subr.bf16.mxu0 0
      %1636 = vmatpush1.bf16.msra.mxu0 %v1617
      %1637 = vmatprep.subr.bf16.mxu0 0
      %1638 = vmatpush1.bf16.msra.mxu0 %v1618
      %1639 = vmatprep.subr.bf16.mxu0 0
      %1640 = vmatpush1.bf16.msra.mxu0 %v1619
      %1641 = vmatprep.subr.bf16.mxu0 0
      %1642 = vmatpush1.bf16.msra.mxu0 %v1620
      %1643 = vmatprep.subr.bf16.mxu0 0
      %1644 = vmatpush1.bf16.msra.mxu0 %v1621
      %1645 = vmatprep.subr.bf16.mxu0 0
      %1646 = vmatpush1.bf16.msra.mxu0 %v1622
      %1647 = vmatprep.subr.bf16.mxu0 0
      %1648 = vmatpush1.bf16.msra.mxu0 0
      %1649 = vmatprep.subr.bf16.mxu0 0
      %1650 = vmatpush1.bf16.msra.mxu0 0
      %1651 = vmatprep.subr.bf16.mxu0 0
      %1652 = vmatpush1.bf16.msra.mxu0 0
      %1653 = vmatprep.subr.bf16.mxu0 0
      %1654 = vmatpush1.bf16.msra.mxu0 0
      %1655 = vmatprep.subr.bf16.mxu0 0
      %1656 = vmatpush1.bf16.msra.mxu0 0
      %1657 = vmatprep.subr.bf16.mxu0 0
      %1658 = vmatpush1.bf16.msra.mxu0 0
      %1659 = vmatprep.subr.bf16.mxu0 0
      %1660 = vmatpush1.bf16.msra.mxu0 0
      %1661 = vmatprep.subr.bf16.mxu0 0
      %1662 = vmatpush1.bf16.msra.mxu0 0
      %1663 = vmatprep.mubr.bf16.mxu0 0
      %1664 = vmatmul.mubr.bf16.gmra.mrb[0].mxu0 %v1542
      %v1665 = vpop.f32.mrb[0].mxu0
      %v1666 = vadd.f32 0.0, %v1665
      %v1667 = vpop.f32.mrb[0].mxu0
      %v1668 = vpop.f32.mrb[0].mxu0
      %v1669 = vadd.f32 0.0, %v1668
      %v1670 = vpop.f32.mrb[0].mxu0
      %1671 = vmatprep.mubr.bf16.mxu0 0
      %1672 = vmatmul.mubr.bf16.gmra.mrb[0].mxu0 %v1543
      %v1673 = vpop.f32.mrb[0].mxu0
      %v1674 = vadd.f32 0.0, %v1673
      %v1675 = vpop.f32.mrb[0].mxu0
      %v1676 = vpop.f32.mrb[0].mxu0
      %v1677 = vadd.f32 0.0, %v1676
      %v1678 = vpop.f32.mrb[0].mxu0
      %1679 = vmatprep.mubr.bf16.mxu0 0
      %1680 = vmatmul.mubr.bf16.gmra.mrb[0].mxu0 %v1544
      %v1681 = vpop.f32.mrb[0].mxu0
      %v1682 = vadd.f32 0.0, %v1681
      %v1683 = vpop.f32.mrb[0].mxu0
      %v1684 = vpop.f32.mrb[0].mxu0
      %v1685 = vadd.f32 0.0, %v1684
      %v1686 = vpop.f32.mrb[0].mxu0
      %1687 = vmatprep.mubr.bf16.mxu0 0
      %1688 = vmatmul.mubr.bf16.gmra.mrb[0].mxu0 %v1545
      %v1689 = vpop.f32.mrb[0].mxu0
      %v1690 = vadd.f32 0.0, %v1689
      %v1691 = vpop.f32.mrb[0].mxu0
      %v1692 = vpop.f32.mrb[0].mxu0
      %v1693 = vadd.f32 0.0, %v1692
      %v1694 = vpop.f32.mrb[0].mxu0
      %1695 = vmatprep.mubr.bf16.mxu0 0
      %1696 = vmatmul.mubr.bf16.gmra.mrb[0].mxu0 %v1546
      %v1697 = vpop.f32.mrb[0].mxu0
      %v1698 = vadd.f32 0.0, %v1697
      %v1699 = vpop.f32.mrb[0].mxu0
      %v1700 = vpop.f32.mrb[0].mxu0
      %v1701 = vadd.f32 0.0, %v1700
      %v1702 = vpop.f32.mrb[0].mxu0
      %1703 = vmatprep.mubr.bf16.mxu0 0
      %1704 = vmatmul.mubr.bf16.gmra.mrb[0].mxu0 %v1547
      %v1705 = vpop.f32.mrb[0].mxu0
      %v1706 = vadd.f32 0.0, %v1705
      %v1707 = vpop.f32.mrb[0].mxu0
      %v1708 = vpop.f32.mrb[0].mxu0
      %v1709 = vadd.f32 0.0, %v1708
      %v1710 = vpop.f32.mrb[0].mxu0
      %1711 = vmatprep.mubr.bf16.mxu0 0
      %1712 = vmatmul.mubr.bf16.gmra.mrb[0].mxu0 %v1548
      %v1713 = vpop.f32.mrb[0].mxu0
      %v1714 = vadd.f32 0.0, %v1713
      %v1715 = vpop.f32.mrb[0].mxu0
      %v1716 = vpop.f32.mrb[0].mxu0
      %v1717 = vadd.f32 0.0, %v1716
      %v1718 = vpop.f32.mrb[0].mxu0
      %1719 = vmatprep.mubr.bf16.mxu0 0
      %1720 = vmatmul.mubr.bf16.gmra.mrb[0].mxu0 %v1549
      %v1721 = vpop.f32.mrb[0].mxu0
      %v1722 = vadd.f32 0.0, %v1721
      %v1723 = vpop.f32.mrb[0].mxu0
      %v1724 = vpop.f32.mrb[0].mxu0
      %v1725 = vadd.f32 0.0, %v1724
      %v1726 = vpop.f32.mrb[0].mxu0
      %1727 = vdwg.mxu0
      %v1728 = vadd.f32 %v1550, %v1666
      %v1729 = vadd.f32 %v1551, %v1669
      %v1730 = vadd.f32 %v1552, %v1674
      %v1731 = vadd.f32 %v1553, %v1677
      %v1732 = vadd.f32 %v1554, %v1682
      %v1733 = vadd.f32 %v1555, %v1685
      %v1734 = vadd.f32 %v1556, %v1690
      %v1735 = vadd.f32 %v1557, %v1693
      %v1736 = vadd.f32 %v1558, %v1698
      %v1737 = vadd.f32 %v1559, %v1701
      %v1738 = vadd.f32 %v1560, %v1706
      %v1739 = vadd.f32 %v1561, %v1709
      %v1740 = vadd.f32 %v1562, %v1714
      %v1741 = vadd.f32 %v1563, %v1717
      %v1742 = vadd.f32 %v1564, %v1722
      %v1743 = vadd.f32 %v1565, %v1725
      %1744 = vst [vmem:[#allocation3] sm:$0xff] %v1728
      %1745 = vst [vmem:[#allocation3 + $0x8] sm:$0xff] %v1729
      %1746 = vst [vmem:[#allocation3 + $0x10] sm:$0xff] %v1730
      %1747 = vst [vmem:[#allocation3 + $0x18] sm:$0xff] %v1731
      %1748 = vst [vmem:[#allocation3 + $0x20] sm:$0xff] %v1732
      %1749 = vst [vmem:[#allocation3 + $0x28] sm:$0xff] %v1733
      %1750 = vst [vmem:[#allocation3 + $0x30] sm:$0xff] %v1734
      %1751 = vst [vmem:[#allocation3 + $0x38] sm:$0xff] %v1735
      %1752 = vst [vmem:[#allocation3 + $0x40] sm:$0xff] %v1736
      %1753 = vst [vmem:[#allocation3 + $0x48] sm:$0xff] %v1737
      %1754 = vst [vmem:[#allocation3 + $0x50] sm:$0xff] %v1738
      %1755 = vst [vmem:[#allocation3 + $0x58] sm:$0xff] %v1739
      %1756 = vst [vmem:[#allocation3 + $0x60] sm:$0xff] %v1740
      %1757 = vst [vmem:[#allocation3 + $0x68] sm:$0xff] %v1741
      %1758 = vst [vmem:[#allocation3 + $0x70] sm:$0xff] %v1742
      %1759 = vst [vmem:[#allocation3 + $0x78] sm:$0xff] %v1743
      %s1760 = sadd.s32 %s1539, 18
      %s1761 = smul.addr %s1760, 8
      %s1762 = scalar_lea.vmem [#allocation2], %s1761
      %v1763 = vld [vmem:[%s1762] sm:$0xff]
      %v1764 = vld [vmem:[%s1762 + $0x8] sm:$0xff]
      %v1765 = vld [vmem:[%s1762 + $0x10] sm:$0xff]
      %v1766 = vld [vmem:[%s1762 + $0x18] sm:$0xff]
      %v1767 = vld [vmem:[%s1762 + $0x20] sm:$0xff]
      %v1768 = vld [vmem:[%s1762 + $0x28] sm:$0xff]
      %v1769 = vld [vmem:[%s1762 + $0x30] sm:$0xff]
      %v1770 = vld [vmem:[%s1762 + $0x38] sm:$0xff]
      %v1771 = vld [vmem:[#allocation3] sm:$0xff]
      %v1772 = vld [vmem:[#allocation3 + $0x8] sm:$0xff]
      %v1773 = vld [vmem:[#allocation3 + $0x10] sm:$0xff]
      %v1774 = vld [vmem:[#allocation3 + $0x18] sm:$0xff]
      %v1775 = vld [vmem:[#allocation3 + $0x20] sm:$0xff]
      %v1776 = vld [vmem:[#allocation3 + $0x28] sm:$0xff]
      %v1777 = vld [vmem:[#allocation3 + $0x30] sm:$0xff]
      %v1778 = vld [vmem:[#allocation3 + $0x38] sm:$0xff]
      %v1779 = vld [vmem:[#allocation3 + $0x40] sm:$0xff]
      %v1780 = vld [vmem:[#allocation3 + $0x48] sm:$0xff]
      %v1781 = vld [vmem:[#allocation3 + $0x50] sm:$0xff]
      %v1782 = vld [vmem:[#allocation3 + $0x58] sm:$0xff]
      %v1783 = vld [vmem:[#allocation3 + $0x60] sm:$0xff]
      %v1784 = vld [vmem:[#allocation3 + $0x68] sm:$0xff]
      %v1785 = vld [vmem:[#allocation3 + $0x70] sm:$0xff]
      %v1786 = vld [vmem:[#allocation3 + $0x78] sm:$0xff]
      %s1787 = scalar_lea.vmem %s3, 256
      %v1788 = vld [vmem:[%s1787] sm:$0xf]
      %v1789 = vld [vmem:[%s1787 + $0x4] sm:$0xf]
      %v1790 = vld [vmem:[%s1787 + $0x8] sm:$0xf]
      %v1791 = vld [vmem:[%s1787 + $0xc] sm:$0xf]
      %v1792 = vld [vmem:[%s1787 + $0x10] sm:$0xf]
      %v1793 = vld [vmem:[%s1787 + $0x14] sm:$0xf]
      %v1794 = vld [vmem:[%s1787 + $0x18] sm:$0xf]
      %v1795 = vld [vmem:[%s1787 + $0x1c] sm:$0xf]
      %v1796 = vld [vmem:[%s1787 + $0x20] sm:$0xf]
      %v1797 = vld [vmem:[%s1787 + $0x24] sm:$0xf]
      %v1798 = vld [vmem:[%s1787 + $0x28] sm:$0xf]
      %v1799 = vld [vmem:[%s1787 + $0x2c] sm:$0xf]
      %v1800 = vld [vmem:[%s1787 + $0x30] sm:$0xf]
      %v1801 = vld [vmem:[%s1787 + $0x34] sm:$0xf]
      %v1802 = vld [vmem:[%s1787 + $0x38] sm:$0xf]
      %v1803 = vld [vmem:[%s1787 + $0x3c] sm:$0xf]
      %v1820 = vunpack.c.l.b16 %v1788
      %v1821 = vunpack.c.l.b16 %v1789
      %v1822 = vunpack.c.l.b16 %v1790
      %v1823 = vunpack.c.l.b16 %v1791
      %v1824 = vunpack.c.l.b16 %v1792
      %v1825 = vunpack.c.l.b16 %v1793
      %v1826 = vunpack.c.l.b16 %v1794
      %v1827 = vunpack.c.l.b16 %v1795
      %v1828 = vunpack.c.l.b16 %v1796
      %v1829 = vunpack.c.l.b16 %v1797
      %v1830 = vunpack.c.l.b16 %v1798
      %v1831 = vunpack.c.l.b16 %v1799
      %v1832 = vunpack.c.l.b16 %v1800
      %v1833 = vunpack.c.l.b16 %v1801
      %v1834 = vunpack.c.l.b16 %v1802
      %v1835 = vunpack.c.l.b16 %v1803
      %v1836 = vpack.c.b16 %v1821, %v1820
      %v1837 = vpack.c.b16 %v1823, %v1822
      %v1838 = vpack.c.b16 %v1825, %v1824
      %v1839 = vpack.c.b16 %v1827, %v1826
      %v1840 = vpack.c.b16 %v1829, %v1828
      %v1841 = vpack.c.b16 %v1831, %v1830
      %v1842 = vpack.c.b16 %v1833, %v1832
      %v1843 = vpack.c.b16 %v1835, %v1834
      %1852 = vmatprep.subr.bf16.mxu0 0
      %1853 = vmatpush1.bf16.msra.mxu0 %v1836
      %1854 = vmatprep.subr.bf16.mxu0 0
      %1855 = vmatpush1.bf16.msra.mxu0 %v1837
      %1856 = vmatprep.subr.bf16.mxu0 0
      %1857 = vmatpush1.bf16.msra.mxu0 %v1838
      %1858 = vmatprep.subr.bf16.mxu0 0
      %1859 = vmatpush1.bf16.msra.mxu0 %v1839
      %1860 = vmatprep.subr.bf16.mxu0 0
      %1861 = vmatpush1.bf16.msra.mxu0 %v1840
      %1862 = vmatprep.subr.bf16.mxu0 0
      %1863 = vmatpush1.bf16.msra.mxu0 %v1841
      %1864 = vmatprep.subr.bf16.mxu0 0
      %1865 = vmatpush1.bf16.msra.mxu0 %v1842
      %1866 = vmatprep.subr.bf16.mxu0 0
      %1867 = vmatpush1.bf16.msra.mxu0 %v1843
      %1868 = vmatprep.subr.bf16.mxu0 0
      %1869 = vmatpush1.bf16.msra.mxu0 0
      %1870 = vmatprep.subr.bf16.mxu0 0
      %1871 = vmatpush1.bf16.msra.mxu0 0
      %1872 = vmatprep.subr.bf16.mxu0 0
      %1873 = vmatpush1.bf16.msra.mxu0 0
      %1874 = vmatprep.subr.bf16.mxu0 0
      %1875 = vmatpush1.bf16.msra.mxu0 0
      %1876 = vmatprep.subr.bf16.mxu0 0
      %1877 = vmatpush1.bf16.msra.mxu0 0
      %1878 = vmatprep.subr.bf16.mxu0 0
      %1879 = vmatpush1.bf16.msra.mxu0 0
      %1880 = vmatprep.subr.bf16.mxu0 0
      %1881 = vmatpush1.bf16.msra.mxu0 0
      %1882 = vmatprep.subr.bf16.mxu0 0
      %1883 = vmatpush1.bf16.msra.mxu0 0
      %1884 = vmatprep.mubr.bf16.mxu0 0
      %1885 = vmatmul.mubr.bf16.gmra.mrb[0].mxu0 %v1763
      %v1886 = vpop.f32.mrb[0].mxu0
      %v1887 = vadd.f32 0.0, %v1886
      %v1888 = vpop.f32.mrb[0].mxu0
      %v1889 = vpop.f32.mrb[0].mxu0
      %v1890 = vadd.f32 0.0, %v1889
      %v1891 = vpop.f32.mrb[0].mxu0
      %1892 = vmatprep.mubr.bf16.mxu0 0
      %1893 = vmatmul.mubr.bf16.gmra.mrb[0].mxu0 %v1764
      %v1894 = vpop.f32.mrb[0].mxu0
      %v1895 = vadd.f32 0.0, %v1894
      %v1896 = vpop.f32.mrb[0].mxu0
      %v1897 = vpop.f32.mrb[0].mxu0
      %v1898 = vadd.f32 0.0, %v1897
      %v1899 = vpop.f32.mrb[0].mxu0
      %1900 = vmatprep.mubr.bf16.mxu0 0
      %1901 = vmatmul.mubr.bf16.gmra.mrb[0].mxu0 %v1765
      %v1902 = vpop.f32.mrb[0].mxu0
      %v1903 = vadd.f32 0.0, %v1902
      %v1904 = vpop.f32.mrb[0].mxu0
      %v1905 = vpop.f32.mrb[0].mxu0
      %v1906 = vadd.f32 0.0, %v1905
      %v1907 = vpop.f32.mrb[0].mxu0
      %1908 = vmatprep.mubr.bf16.mxu0 0
      %1909 = vmatmul.mubr.bf16.gmra.mrb[0].mxu0 %v1766
      %v1910 = vpop.f32.mrb[0].mxu0
      %v1911 = vadd.f32 0.0, %v1910
      %v1912 = vpop.f32.mrb[0].mxu0
      %v1913 = vpop.f32.mrb[0].mxu0
      %v1914 = vadd.f32 0.0, %v1913
      %v1915 = vpop.f32.mrb[0].mxu0
      %1916 = vmatprep.mubr.bf16.mxu0 0
      %1917 = vmatmul.mubr.bf16.gmra.mrb[0].mxu0 %v1767
      %v1918 = vpop.f32.mrb[0].mxu0
      %v1919 = vadd.f32 0.0, %v1918
      %v1920 = vpop.f32.mrb[0].mxu0
      %v1921 = vpop.f32.mrb[0].mxu0
      %v1922 = vadd.f32 0.0, %v1921
      %v1923 = vpop.f32.mrb[0].mxu0
      %1924 = vmatprep.mubr.bf16.mxu0 0
      %1925 = vmatmul.mubr.bf16.gmra.mrb[0].mxu0 %v1768
      %v1926 = vpop.f32.mrb[0].mxu0
      %v1927 = vadd.f32 0.0, %v1926
      %v1928 = vpop.f32.mrb[0].mxu0
      %v1929 = vpop.f32.mrb[0].mxu0
      %v1930 = vadd.f32 0.0, %v1929
      %v1931 = vpop.f32.mrb[0].mxu0
      %1932 = vmatprep.mubr.bf16.mxu0 0
      %1933 = vmatmul.mubr.bf16.gmra.mrb[0].mxu0 %v1769
      %v1934 = vpop.f32.mrb[0].mxu0
      %v1935 = vadd.f32 0.0, %v1934
      %v1936 = vpop.f32.mrb[0].mxu0
      %v1937 = vpop.f32.mrb[0].mxu0
      %v1938 = vadd.f32 0.0, %v1937
      %v1939 = vpop.f32.mrb[0].mxu0
      %1940 = vmatprep.mubr.bf16.mxu0 0
      %1941 = vmatmul.mubr.bf16.gmra.mrb[0].mxu0 %v1770
      %v1942 = vpop.f32.mrb[0].mxu0
      %v1943 = vadd.f32 0.0, %v1942
      %v1944 = vpop.f32.mrb[0].mxu0
      %v1945 = vpop.f32.mrb[0].mxu0
      %v1946 = vadd.f32 0.0, %v1945
      %v1947 = vpop.f32.mrb[0].mxu0
      %1948 = vdwg.mxu0
      %v1949 = vadd.f32 %v1771, %v1887
      %v1950 = vadd.f32 %v1772, %v1890
      %v1951 = vadd.f32 %v1773, %v1895
      %v1952 = vadd.f32 %v1774, %v1898
      %v1953 = vadd.f32 %v1775, %v1903
      %v1954 = vadd.f32 %v1776, %v1906
      %v1955 = vadd.f32 %v1777, %v1911
      %v1956 = vadd.f32 %v1778, %v1914
      %v1957 = vadd.f32 %v1779, %v1919
      %v1958 = vadd.f32 %v1780, %v1922
      %v1959 = vadd.f32 %v1781, %v1927
      %v1960 = vadd.f32 %v1782, %v1930
      %v1961 = vadd.f32 %v1783, %v1935
      %v1962 = vadd.f32 %v1784, %v1938
      %v1963 = vadd.f32 %v1785, %v1943
      %v1964 = vadd.f32 %v1786, %v1946
      %1965 = vst [vmem:[#allocation3] sm:$0xff] %v1949
      %1966 = vst [vmem:[#allocation3 + $0x8] sm:$0xff] %v1950
      %1967 = vst [vmem:[#allocation3 + $0x10] sm:$0xff] %v1951
      %1968 = vst [vmem:[#allocation3 + $0x18] sm:$0xff] %v1952
      %1969 = vst [vmem:[#allocation3 + $0x20] sm:$0xff] %v1953
      %1970 = vst [vmem:[#allocation3 + $0x28] sm:$0xff] %v1954
      %1971 = vst [vmem:[#allocation3 + $0x30] sm:$0xff] %v1955
      %1972 = vst [vmem:[#allocation3 + $0x38] sm:$0xff] %v1956
      %1973 = vst [vmem:[#allocation3 + $0x40] sm:$0xff] %v1957
      %1974 = vst [vmem:[#allocation3 + $0x48] sm:$0xff] %v1958
      %1975 = vst [vmem:[#allocation3 + $0x50] sm:$0xff] %v1959
      %1976 = vst [vmem:[#allocation3 + $0x58] sm:$0xff] %v1960
      %1977 = vst [vmem:[#allocation3 + $0x60] sm:$0xff] %v1961
      %1978 = vst [vmem:[#allocation3 + $0x68] sm:$0xff] %v1962
      %1979 = vst [vmem:[#allocation3 + $0x70] sm:$0xff] %v1963
      %1980 = vst [vmem:[#allocation3 + $0x78] sm:$0xff] %v1964
      %s1981 = sadd.s32 %s1539, 36
      %s1982 = smul.addr %s1981, 8
      %s1983 = scalar_lea.vmem [#allocation2], %s1982
      %v1984 = vld [vmem:[%s1983] sm:$0xff]
      %v1985 = vld [vmem:[%s1983 + $0x8] sm:$0xff]
      %v1986 = vld [vmem:[%s1983 + $0x10] sm:$0xff]
      %v1987 = vld [vmem:[%s1983 + $0x18] sm:$0xff]
      %v1988 = vld [vmem:[%s1983 + $0x20] sm:$0xff]
      %v1989 = vld [vmem:[%s1983 + $0x28] sm:$0xff]
      %v1990 = vld [vmem:[%s1983 + $0x30] sm:$0xff]
      %v1991 = vld [vmem:[%s1983 + $0x38] sm:$0xff]
      %v1992 = vld [vmem:[#allocation3] sm:$0xff]
      %v1993 = vld [vmem:[#allocation3 + $0x8] sm:$0xff]
      %v1994 = vld [vmem:[#allocation3 + $0x10] sm:$0xff]
      %v1995 = vld [vmem:[#allocation3 + $0x18] sm:$0xff]
      %v1996 = vld [vmem:[#allocation3 + $0x20] sm:$0xff]
      %v1997 = vld [vmem:[#allocation3 + $0x28] sm:$0xff]
      %v1998 = vld [vmem:[#allocation3 + $0x30] sm:$0xff]
      %v1999 = vld [vmem:[#allocation3 + $0x38] sm:$0xff]
      %v2000 = vld [vmem:[#allocation3 + $0x40] sm:$0xff]
      %v2001 = vld [vmem:[#allocation3 + $0x48] sm:$0xff]
      %v2002 = vld [vmem:[#allocation3 + $0x50] sm:$0xff]
      %v2003 = vld [vmem:[#allocation3 + $0x58] sm:$0xff]
      %v2004 = vld [vmem:[#allocation3 + $0x60] sm:$0xff]
      %v2005 = vld [vmem:[#allocation3 + $0x68] sm:$0xff]
      %v2006 = vld [vmem:[#allocation3 + $0x70] sm:$0xff]
      %v2007 = vld [vmem:[#allocation3 + $0x78] sm:$0xff]
      %s2008 = scalar_lea.vmem %s3, 320
      %v2009 = vld [vmem:[%s2008] sm:$0xf]
      %v2010 = vld [vmem:[%s2008 + $0x4] sm:$0xf]
      %v2011 = vld [vmem:[%s2008 + $0x8] sm:$0xf]
      %v2012 = vld [vmem:[%s2008 + $0xc] sm:$0xf]
      %v2013 = vld [vmem:[%s2008 + $0x10] sm:$0xf]
      %v2014 = vld [vmem:[%s2008 + $0x14] sm:$0xf]
      %v2015 = vld [vmem:[%s2008 + $0x18] sm:$0xf]
      %v2016 = vld [vmem:[%s2008 + $0x1c] sm:$0xf]
      %v2017 = vld [vmem:[%s2008 + $0x20] sm:$0xf]
      %v2018 = vld [vmem:[%s2008 + $0x24] sm:$0xf]
      %v2019 = vld [vmem:[%s2008 + $0x28] sm:$0xf]
      %v2020 = vld [vmem:[%s2008 + $0x2c] sm:$0xf]
      %v2021 = vld [vmem:[%s2008 + $0x30] sm:$0xf]
      %v2022 = vld [vmem:[%s2008 + $0x34] sm:$0xf]
      %v2023 = vld [vmem:[%s2008 + $0x38] sm:$0xf]
      %v2024 = vld [vmem:[%s2008 + $0x3c] sm:$0xf]
      %v2041 = vunpack.c.l.b16 %v2009
      %v2042 = vunpack.c.l.b16 %v2010
      %v2043 = vunpack.c.l.b16 %v2011
      %v2044 = vunpack.c.l.b16 %v2012
      %v2045 = vunpack.c.l.b16 %v2013
      %v2046 = vunpack.c.l.b16 %v2014
      %v2047 = vunpack.c.l.b16 %v2015
      %v2048 = vunpack.c.l.b16 %v2016
      %v2049 = vunpack.c.l.b16 %v2017
      %v2050 = vunpack.c.l.b16 %v2018
      %v2051 = vunpack.c.l.b16 %v2019
      %v2052 = vunpack.c.l.b16 %v2020
      %v2053 = vunpack.c.l.b16 %v2021
      %v2054 = vunpack.c.l.b16 %v2022
      %v2055 = vunpack.c.l.b16 %v2023
      %v2056 = vunpack.c.l.b16 %v2024
      %v2057 = vpack.c.b16 %v2042, %v2041
      %v2058 = vpack.c.b16 %v2044, %v2043
      %v2059 = vpack.c.b16 %v2046, %v2045
      %v2060 = vpack.c.b16 %v2048, %v2047
      %v2061 = vpack.c.b16 %v2050, %v2049
      %v2062 = vpack.c.b16 %v2052, %v2051
      %v2063 = vpack.c.b16 %v2054, %v2053
      %v2064 = vpack.c.b16 %v2056, %v2055
      %2073 = vmatprep.subr.bf16.mxu0 0
      %2074 = vmatpush1.bf16.msra.mxu0 %v2057
      %2075 = vmatprep.subr.bf16.mxu0 0
      %2076 = vmatpush1.bf16.msra.mxu0 %v2058
      %2077 = vmatprep.subr.bf16.mxu0 0
      %2078 = vmatpush1.bf16.msra.mxu0 %v2059
      %2079 = vmatprep.subr.bf16.mxu0 0
      %2080 = vmatpush1.bf16.msra.mxu0 %v2060
      %2081 = vmatprep.subr.bf16.mxu0 0
      %2082 = vmatpush1.bf16.msra.mxu0 %v2061
      %2083 = vmatprep.subr.bf16.mxu0 0
      %2084 = vmatpush1.bf16.msra.mxu0 %v2062
      %2085 = vmatprep.subr.bf16.mxu0 0
      %2086 = vmatpush1.bf16.msra.mxu0 %v2063
      %2087 = vmatprep.subr.bf16.mxu0 0
      %2088 = vmatpush1.bf16.msra.mxu0 %v2064
      %2089 = vmatprep.subr.bf16.mxu0 0
      %2090 = vmatpush1.bf16.msra.mxu0 0
      %2091 = vmatprep.subr.bf16.mxu0 0
      %2092 = vmatpush1.bf16.msra.mxu0 0
      %2093 = vmatprep.subr.bf16.mxu0 0
      %2094 = vmatpush1.bf16.msra.mxu0 0
      %2095 = vmatprep.subr.bf16.mxu0 0
      %2096 = vmatpush1.bf16.msra.mxu0 0
      %2097 = vmatprep.subr.bf16.mxu0 0
      %2098 = vmatpush1.bf16.msra.mxu0 0
      %2099 = vmatprep.subr.bf16.mxu0 0
      %2100 = vmatpush1.bf16.msra.mxu0 0
      %2101 = vmatprep.subr.bf16.mxu0 0
      %2102 = vmatpush1.bf16.msra.mxu0 0
      %2103 = vmatprep.subr.bf16.mxu0 0
      %2104 = vmatpush1.bf16.msra.mxu0 0
      %2105 = vmatprep.mubr.bf16.mxu0 0
      %2106 = vmatmul.mubr.bf16.gmra.mrb[0].mxu0 %v1984
      %v2107 = vpop.f32.mrb[0].mxu0
      %v2108 = vadd.f32 0.0, %v2107
      %v2109 = vpop.f32.mrb[0].mxu0
      %v2110 = vpop.f32.mrb[0].mxu0
      %v2111 = vadd.f32 0.0, %v2110
      %v2112 = vpop.f32.mrb[0].mxu0
      %2113 = vmatprep.mubr.bf16.mxu0 0
      %2114 = vmatmul.mubr.bf16.gmra.mrb[0].mxu0 %v1985
      %v2115 = vpop.f32.mrb[0].mxu0
      %v2116 = vadd.f32 0.0, %v2115
      %v2117 = vpop.f32.mrb[0].mxu0
      %v2118 = vpop.f32.mrb[0].mxu0
      %v2119 = vadd.f32 0.0, %v2118
      %v2120 = vpop.f32.mrb[0].mxu0
      %2121 = vmatprep.mubr.bf16.mxu0 0
      %2122 = vmatmul.mubr.bf16.gmra.mrb[0].mxu0 %v1986
      %v2123 = vpop.f32.mrb[0].mxu0
      %v2124 = vadd.f32 0.0, %v2123
      %v2125 = vpop.f32.mrb[0].mxu0
      %v2126 = vpop.f32.mrb[0].mxu0
      %v2127 = vadd.f32 0.0, %v2126
      %v2128 = vpop.f32.mrb[0].mxu0
      %2129 = vmatprep.mubr.bf16.mxu0 0
      %2130 = vmatmul.mubr.bf16.gmra.mrb[0].mxu0 %v1987
      %v2131 = vpop.f32.mrb[0].mxu0
      %v2132 = vadd.f32 0.0, %v2131
      %v2133 = vpop.f32.mrb[0].mxu0
      %v2134 = vpop.f32.mrb[0].mxu0
      %v2135 = vadd.f32 0.0, %v2134
      %v2136 = vpop.f32.mrb[0].mxu0
      %2137 = vmatprep.mubr.bf16.mxu0 0
      %2138 = vmatmul.mubr.bf16.gmra.mrb[0].mxu0 %v1988
      %v2139 = vpop.f32.mrb[0].mxu0
      %v2140 = vadd.f32 0.0, %v2139
      %v2141 = vpop.f32.mrb[0].mxu0
      %v2142 = vpop.f32.mrb[0].mxu0
      %v2143 = vadd.f32 0.0, %v2142
      %v2144 = vpop.f32.mrb[0].mxu0
      %2145 = vmatprep.mubr.bf16.mxu0 0
      %2146 = vmatmul.mubr.bf16.gmra.mrb[0].mxu0 %v1989
      %v2147 = vpop.f32.mrb[0].mxu0
      %v2148 = vadd.f32 0.0, %v2147
      %v2149 = vpop.f32.mrb[0].mxu0
      %v2150 = vpop.f32.mrb[0].mxu0
      %v2151 = vadd.f32 0.0, %v2150
      %v2152 = vpop.f32.mrb[0].mxu0
      %2153 = vmatprep.mubr.bf16.mxu0 0
      %2154 = vmatmul.mubr.bf16.gmra.mrb[0].mxu0 %v1990
      %v2155 = vpop.f32.mrb[0].mxu0
      %v2156 = vadd.f32 0.0, %v2155
      %v2157 = vpop.f32.mrb[0].mxu0
      %v2158 = vpop.f32.mrb[0].mxu0
      %v2159 = vadd.f32 0.0, %v2158
      %v2160 = vpop.f32.mrb[0].mxu0
      %2161 = vmatprep.mubr.bf16.mxu0 0
      %2162 = vmatmul.mubr.bf16.gmra.mrb[0].mxu0 %v1991
      %v2163 = vpop.f32.mrb[0].mxu0
      %v2164 = vadd.f32 0.0, %v2163
      %v2165 = vpop.f32.mrb[0].mxu0
      %v2166 = vpop.f32.mrb[0].mxu0
      %v2167 = vadd.f32 0.0, %v2166
      %v2168 = vpop.f32.mrb[0].mxu0
      %2169 = vdwg.mxu0
      %v2170 = vadd.f32 %v1992, %v2108
      %v2171 = vadd.f32 %v1993, %v2111
      %v2172 = vadd.f32 %v1994, %v2116
      %v2173 = vadd.f32 %v1995, %v2119
      %v2174 = vadd.f32 %v1996, %v2124
      %v2175 = vadd.f32 %v1997, %v2127
      %v2176 = vadd.f32 %v1998, %v2132
      %v2177 = vadd.f32 %v1999, %v2135
      %v2178 = vadd.f32 %v2000, %v2140
      %v2179 = vadd.f32 %v2001, %v2143
      %v2180 = vadd.f32 %v2002, %v2148
      %v2181 = vadd.f32 %v2003, %v2151
      %v2182 = vadd.f32 %v2004, %v2156
      %v2183 = vadd.f32 %v2005, %v2159
      %v2184 = vadd.f32 %v2006, %v2164
      %v2185 = vadd.f32 %v2007, %v2167
      %2186 = vst [vmem:[#allocation3] sm:$0xff] %v2170
      %2187 = vst [vmem:[#allocation3 + $0x8] sm:$0xff] %v2171
      %2188 = vst [vmem:[#allocation3 + $0x10] sm:$0xff] %v2172
      %2189 = vst [vmem:[#allocation3 + $0x18] sm:$0xff] %v2173
      %2190 = vst [vmem:[#allocation3 + $0x20] sm:$0xff] %v2174
      %2191 = vst [vmem:[#allocation3 + $0x28] sm:$0xff] %v2175
      %2192 = vst [vmem:[#allocation3 + $0x30] sm:$0xff] %v2176
      %2193 = vst [vmem:[#allocation3 + $0x38] sm:$0xff] %v2177
      %2194 = vst [vmem:[#allocation3 + $0x40] sm:$0xff] %v2178
      %2195 = vst [vmem:[#allocation3 + $0x48] sm:$0xff] %v2179
      %2196 = vst [vmem:[#allocation3 + $0x50] sm:$0xff] %v2180
      %2197 = vst [vmem:[#allocation3 + $0x58] sm:$0xff] %v2181
      %2198 = vst [vmem:[#allocation3 + $0x60] sm:$0xff] %v2182
      %2199 = vst [vmem:[#allocation3 + $0x68] sm:$0xff] %v2183
      %2200 = vst [vmem:[#allocation3 + $0x70] sm:$0xff] %v2184
      %2201 = vst [vmem:[#allocation3 + $0x78] sm:$0xff] %v2185
      %s2202 = sadd.s32 %s877, 2
      %s2203 = smul.addr %s2202, 8
      %s2204 = scalar_lea.vmem [#allocation2], %s2203
      %v2205 = vld [vmem:[%s2204] sm:$0xff]
      %v2206 = vld [vmem:[%s2204 + $0x8] sm:$0xff]
      %v2207 = vld [vmem:[%s2204 + $0x10] sm:$0xff]
      %v2208 = vld [vmem:[%s2204 + $0x18] sm:$0xff]
      %v2209 = vld [vmem:[%s2204 + $0x20] sm:$0xff]
      %v2210 = vld [vmem:[%s2204 + $0x28] sm:$0xff]
      %v2211 = vld [vmem:[%s2204 + $0x30] sm:$0xff]
      %v2212 = vld [vmem:[%s2204 + $0x38] sm:$0xff]
      %v2213 = vld [vmem:[#allocation3] sm:$0xff]
      %v2214 = vld [vmem:[#allocation3 + $0x8] sm:$0xff]
      %v2215 = vld [vmem:[#allocation3 + $0x10] sm:$0xff]
      %v2216 = vld [vmem:[#allocation3 + $0x18] sm:$0xff]
      %v2217 = vld [vmem:[#allocation3 + $0x20] sm:$0xff]
      %v2218 = vld [vmem:[#allocation3 + $0x28] sm:$0xff]
      %v2219 = vld [vmem:[#allocation3 + $0x30] sm:$0xff]
      %v2220 = vld [vmem:[#allocation3 + $0x38] sm:$0xff]
      %v2221 = vld [vmem:[#allocation3 + $0x40] sm:$0xff]
      %v2222 = vld [vmem:[#allocation3 + $0x48] sm:$0xff]
      %v2223 = vld [vmem:[#allocation3 + $0x50] sm:$0xff]
      %v2224 = vld [vmem:[#allocation3 + $0x58] sm:$0xff]
      %v2225 = vld [vmem:[#allocation3 + $0x60] sm:$0xff]
      %v2226 = vld [vmem:[#allocation3 + $0x68] sm:$0xff]
      %v2227 = vld [vmem:[#allocation3 + $0x70] sm:$0xff]
      %v2228 = vld [vmem:[#allocation3 + $0x78] sm:$0xff]
      %s2229 = scalar_lea.vmem %s3, 384
      %v2230 = vld [vmem:[%s2229] sm:$0xf]
      %v2231 = vld [vmem:[%s2229 + $0x4] sm:$0xf]
      %v2232 = vld [vmem:[%s2229 + $0x8] sm:$0xf]
      %v2233 = vld [vmem:[%s2229 + $0xc] sm:$0xf]
      %v2234 = vld [vmem:[%s2229 + $0x10] sm:$0xf]
      %v2235 = vld [vmem:[%s2229 + $0x14] sm:$0xf]
      %v2236 = vld [vmem:[%s2229 + $0x18] sm:$0xf]
      %v2237 = vld [vmem:[%s2229 + $0x1c] sm:$0xf]
      %v2238 = vld [vmem:[%s2229 + $0x20] sm:$0xf]
      %v2239 = vld [vmem:[%s2229 + $0x24] sm:$0xf]
      %v2240 = vld [vmem:[%s2229 + $0x28] sm:$0xf]
      %v2241 = vld [vmem:[%s2229 + $0x2c] sm:$0xf]
      %v2242 = vld [vmem:[%s2229 + $0x30] sm:$0xf]
      %v2243 = vld [vmem:[%s2229 + $0x34] sm:$0xf]
      %v2244 = vld [vmem:[%s2229 + $0x38] sm:$0xf]
      %v2245 = vld [vmem:[%s2229 + $0x3c] sm:$0xf]
      %v2262 = vunpack.c.l.b16 %v2230
      %v2263 = vunpack.c.l.b16 %v2231
      %v2264 = vunpack.c.l.b16 %v2232
      %v2265 = vunpack.c.l.b16 %v2233
      %v2266 = vunpack.c.l.b16 %v2234
      %v2267 = vunpack.c.l.b16 %v2235
      %v2268 = vunpack.c.l.b16 %v2236
      %v2269 = vunpack.c.l.b16 %v2237
      %v2270 = vunpack.c.l.b16 %v2238
      %v2271 = vunpack.c.l.b16 %v2239
      %v2272 = vunpack.c.l.b16 %v2240
      %v2273 = vunpack.c.l.b16 %v2241
      %v2274 = vunpack.c.l.b16 %v2242
      %v2275 = vunpack.c.l.b16 %v2243
      %v2276 = vunpack.c.l.b16 %v2244
      %v2277 = vunpack.c.l.b16 %v2245
      %v2278 = vpack.c.b16 %v2263, %v2262
      %v2279 = vpack.c.b16 %v2265, %v2264
      %v2280 = vpack.c.b16 %v2267, %v2266
      %v2281 = vpack.c.b16 %v2269, %v2268
      %v2282 = vpack.c.b16 %v2271, %v2270
      %v2283 = vpack.c.b16 %v2273, %v2272
      %v2284 = vpack.c.b16 %v2275, %v2274
      %v2285 = vpack.c.b16 %v2277, %v2276
      %2294 = vmatprep.subr.bf16.mxu0 0
      %2295 = vmatpush1.bf16.msra.mxu0 %v2278
      %2296 = vmatprep.subr.bf16.mxu0 0
      %2297 = vmatpush1.bf16.msra.mxu0 %v2279
      %2298 = vmatprep.subr.bf16.mxu0 0
      %2299 = vmatpush1.bf16.msra.mxu0 %v2280
      %2300 = vmatprep.subr.bf16.mxu0 0
      %2301 = vmatpush1.bf16.msra.mxu0 %v2281
      %2302 = vmatprep.subr.bf16.mxu0 0
      %2303 = vmatpush1.bf16.msra.mxu0 %v2282
      %2304 = vmatprep.subr.bf16.mxu0 0
      %2305 = vmatpush1.bf16.msra.mxu0 %v2283
      %2306 = vmatprep.subr.bf16.mxu0 0
      %2307 = vmatpush1.bf16.msra.mxu0 %v2284
      %2308 = vmatprep.subr.bf16.mxu0 0
      %2309 = vmatpush1.bf16.msra.mxu0 %v2285
      %2310 = vmatprep.subr.bf16.mxu0 0
      %2311 = vmatpush1.bf16.msra.mxu0 0
      %2312 = vmatprep.subr.bf16.mxu0 0
      %2313 = vmatpush1.bf16.msra.mxu0 0
      %2314 = vmatprep.subr.bf16.mxu0 0
      %2315 = vmatpush1.bf16.msra.mxu0 0
      %2316 = vmatprep.subr.bf16.mxu0 0
      %2317 = vmatpush1.bf16.msra.mxu0 0
      %2318 = vmatprep.subr.bf16.mxu0 0
      %2319 = vmatpush1.bf16.msra.mxu0 0
      %2320 = vmatprep.subr.bf16.mxu0 0
      %2321 = vmatpush1.bf16.msra.mxu0 0
      %2322 = vmatprep.subr.bf16.mxu0 0
      %2323 = vmatpush1.bf16.msra.mxu0 0
      %2324 = vmatprep.subr.bf16.mxu0 0
      %2325 = vmatpush1.bf16.msra.mxu0 0
      %2326 = vmatprep.mubr.bf16.mxu0 0
      %2327 = vmatmul.mubr.bf16.gmra.mrb[0].mxu0 %v2205
      %v2328 = vpop.f32.mrb[0].mxu0
      %v2329 = vadd.f32 0.0, %v2328
      %v2330 = vpop.f32.mrb[0].mxu0
      %v2331 = vpop.f32.mrb[0].mxu0
      %v2332 = vadd.f32 0.0, %v2331
      %v2333 = vpop.f32.mrb[0].mxu0
      %2334 = vmatprep.mubr.bf16.mxu0 0
      %2335 = vmatmul.mubr.bf16.gmra.mrb[0].mxu0 %v2206
      %v2336 = vpop.f32.mrb[0].mxu0
      %v2337 = vadd.f32 0.0, %v2336
      %v2338 = vpop.f32.mrb[0].mxu0
      %v2339 = vpop.f32.mrb[0].mxu0
      %v2340 = vadd.f32 0.0, %v2339
      %v2341 = vpop.f32.mrb[0].mxu0
      %2342 = vmatprep.mubr.bf16.mxu0 0
      %2343 = vmatmul.mubr.bf16.gmra.mrb[0].mxu0 %v2207
      %v2344 = vpop.f32.mrb[0].mxu0
      %v2345 = vadd.f32 0.0, %v2344
      %v2346 = vpop.f32.mrb[0].mxu0
      %v2347 = vpop.f32.mrb[0].mxu0
      %v2348 = vadd.f32 0.0, %v2347
      %v2349 = vpop.f32.mrb[0].mxu0
      %2350 = vmatprep.mubr.bf16.mxu0 0
      %2351 = vmatmul.mubr.bf16.gmra.mrb[0].mxu0 %v2208
      %v2352 = vpop.f32.mrb[0].mxu0
      %v2353 = vadd.f32 0.0, %v2352
      %v2354 = vpop.f32.mrb[0].mxu0
      %v2355 = vpop.f32.mrb[0].mxu0
      %v2356 = vadd.f32 0.0, %v2355
      %v2357 = vpop.f32.mrb[0].mxu0
      %2358 = vmatprep.mubr.bf16.mxu0 0
      %2359 = vmatmul.mubr.bf16.gmra.mrb[0].mxu0 %v2209
      %v2360 = vpop.f32.mrb[0].mxu0
      %v2361 = vadd.f32 0.0, %v2360
      %v2362 = vpop.f32.mrb[0].mxu0
      %v2363 = vpop.f32.mrb[0].mxu0
      %v2364 = vadd.f32 0.0, %v2363
      %v2365 = vpop.f32.mrb[0].mxu0
      %2366 = vmatprep.mubr.bf16.mxu0 0
      %2367 = vmatmul.mubr.bf16.gmra.mrb[0].mxu0 %v2210
      %v2368 = vpop.f32.mrb[0].mxu0
      %v2369 = vadd.f32 0.0, %v2368
      %v2370 = vpop.f32.mrb[0].mxu0
      %v2371 = vpop.f32.mrb[0].mxu0
      %v2372 = vadd.f32 0.0, %v2371
      %v2373 = vpop.f32.mrb[0].mxu0
      %2374 = vmatprep.mubr.bf16.mxu0 0
      %2375 = vmatmul.mubr.bf16.gmra.mrb[0].mxu0 %v2211
      %v2376 = vpop.f32.mrb[0].mxu0
      %v2377 = vadd.f32 0.0, %v2376
      %v2378 = vpop.f32.mrb[0].mxu0
      %v2379 = vpop.f32.mrb[0].mxu0
      %v2380 = vadd.f32 0.0, %v2379
      %v2381 = vpop.f32.mrb[0].mxu0
      %2382 = vmatprep.mubr.bf16.mxu0 0
      %2383 = vmatmul.mubr.bf16.gmra.mrb[0].mxu0 %v2212
      %v2384 = vpop.f32.mrb[0].mxu0
      %v2385 = vadd.f32 0.0, %v2384
      %v2386 = vpop.f32.mrb[0].mxu0
      %v2387 = vpop.f32.mrb[0].mxu0
      %v2388 = vadd.f32 0.0, %v2387
      %v2389 = vpop.f32.mrb[0].mxu0
      %2390 = vdwg.mxu0
      %v2391 = vadd.f32 %v2213, %v2329
      %v2392 = vadd.f32 %v2214, %v2332
      %v2393 = vadd.f32 %v2215, %v2337
      %v2394 = vadd.f32 %v2216, %v2340
      %v2395 = vadd.f32 %v2217, %v2345
      %v2396 = vadd.f32 %v2218, %v2348
      %v2397 = vadd.f32 %v2219, %v2353
      %v2398 = vadd.f32 %v2220, %v2356
      %v2399 = vadd.f32 %v2221, %v2361
      %v2400 = vadd.f32 %v2222, %v2364
      %v2401 = vadd.f32 %v2223, %v2369
      %v2402 = vadd.f32 %v2224, %v2372
      %v2403 = vadd.f32 %v2225, %v2377
      %v2404 = vadd.f32 %v2226, %v2380
      %v2405 = vadd.f32 %v2227, %v2385
      %v2406 = vadd.f32 %v2228, %v2388
      %2407 = vst [vmem:[#allocation3] sm:$0xff] %v2391
      %2408 = vst [vmem:[#allocation3 + $0x8] sm:$0xff] %v2392
      %2409 = vst [vmem:[#allocation3 + $0x10] sm:$0xff] %v2393
      %2410 = vst [vmem:[#allocation3 + $0x18] sm:$0xff] %v2394
      %2411 = vst [vmem:[#allocation3 + $0x20] sm:$0xff] %v2395
      %2412 = vst [vmem:[#allocation3 + $0x28] sm:$0xff] %v2396
      %2413 = vst [vmem:[#allocation3 + $0x30] sm:$0xff] %v2397
      %2414 = vst [vmem:[#allocation3 + $0x38] sm:$0xff] %v2398
      %2415 = vst [vmem:[#allocation3 + $0x40] sm:$0xff] %v2399
      %2416 = vst [vmem:[#allocation3 + $0x48] sm:$0xff] %v2400
      %2417 = vst [vmem:[#allocation3 + $0x50] sm:$0xff] %v2401
      %2418 = vst [vmem:[#allocation3 + $0x58] sm:$0xff] %v2402
      %2419 = vst [vmem:[#allocation3 + $0x60] sm:$0xff] %v2403
      %2420 = vst [vmem:[#allocation3 + $0x68] sm:$0xff] %v2404
      %2421 = vst [vmem:[#allocation3 + $0x70] sm:$0xff] %v2405
      %2422 = vst [vmem:[#allocation3 + $0x78] sm:$0xff] %v2406
      %s2423 = sadd.s32 %s2202, 18
      %s2424 = smul.addr %s2423, 8
      %s2425 = scalar_lea.vmem [#allocation2], %s2424
      %v2426 = vld [vmem:[%s2425] sm:$0xff]
      %v2427 = vld [vmem:[%s2425 + $0x8] sm:$0xff]
      %v2428 = vld [vmem:[%s2425 + $0x10] sm:$0xff]
      %v2429 = vld [vmem:[%s2425 + $0x18] sm:$0xff]
      %v2430 = vld [vmem:[%s2425 + $0x20] sm:$0xff]
      %v2431 = vld [vmem:[%s2425 + $0x28] sm:$0xff]
      %v2432 = vld [vmem:[%s2425 + $0x30] sm:$0xff]
      %v2433 = vld [vmem:[%s2425 + $0x38] sm:$0xff]
      %v2434 = vld [vmem:[#allocation3] sm:$0xff]
      %v2435 = vld [vmem:[#allocation3 + $0x8] sm:$0xff]
      %v2436 = vld [vmem:[#allocation3 + $0x10] sm:$0xff]
      %v2437 = vld [vmem:[#allocation3 + $0x18] sm:$0xff]
      %v2438 = vld [vmem:[#allocation3 + $0x20] sm:$0xff]
      %v2439 = vld [vmem:[#allocation3 + $0x28] sm:$0xff]
      %v2440 = vld [vmem:[#allocation3 + $0x30] sm:$0xff]
      %v2441 = vld [vmem:[#allocation3 + $0x38] sm:$0xff]
      %v2442 = vld [vmem:[#allocation3 + $0x40] sm:$0xff]
      %v2443 = vld [vmem:[#allocation3 + $0x48] sm:$0xff]
      %v2444 = vld [vmem:[#allocation3 + $0x50] sm:$0xff]
      %v2445 = vld [vmem:[#allocation3 + $0x58] sm:$0xff]
      %v2446 = vld [vmem:[#allocation3 + $0x60] sm:$0xff]
      %v2447 = vld [vmem:[#allocation3 + $0x68] sm:$0xff]
      %v2448 = vld [vmem:[#allocation3 + $0x70] sm:$0xff]
      %v2449 = vld [vmem:[#allocation3 + $0x78] sm:$0xff]
      %s2450 = scalar_lea.vmem %s3, 448
      %v2451 = vld [vmem:[%s2450] sm:$0xf]
      %v2452 = vld [vmem:[%s2450 + $0x4] sm:$0xf]
      %v2453 = vld [vmem:[%s2450 + $0x8] sm:$0xf]
      %v2454 = vld [vmem:[%s2450 + $0xc] sm:$0xf]
      %v2455 = vld [vmem:[%s2450 + $0x10] sm:$0xf]
      %v2456 = vld [vmem:[%s2450 + $0x14] sm:$0xf]
      %v2457 = vld [vmem:[%s2450 + $0x18] sm:$0xf]
      %v2458 = vld [vmem:[%s2450 + $0x1c] sm:$0xf]
      %v2459 = vld [vmem:[%s2450 + $0x20] sm:$0xf]
      %v2460 = vld [vmem:[%s2450 + $0x24] sm:$0xf]
      %v2461 = vld [vmem:[%s2450 + $0x28] sm:$0xf]
      %v2462 = vld [vmem:[%s2450 + $0x2c] sm:$0xf]
      %v2463 = vld [vmem:[%s2450 + $0x30] sm:$0xf]
      %v2464 = vld [vmem:[%s2450 + $0x34] sm:$0xf]
      %v2465 = vld [vmem:[%s2450 + $0x38] sm:$0xf]
      %v2466 = vld [vmem:[%s2450 + $0x3c] sm:$0xf]
      %v2483 = vunpack.c.l.b16 %v2451
      %v2484 = vunpack.c.l.b16 %v2452
      %v2485 = vunpack.c.l.b16 %v2453
      %v2486 = vunpack.c.l.b16 %v2454
      %v2487 = vunpack.c.l.b16 %v2455
      %v2488 = vunpack.c.l.b16 %v2456
      %v2489 = vunpack.c.l.b16 %v2457
      %v2490 = vunpack.c.l.b16 %v2458
      %v2491 = vunpack.c.l.b16 %v2459
      %v2492 = vunpack.c.l.b16 %v2460
      %v2493 = vunpack.c.l.b16 %v2461
      %v2494 = vunpack.c.l.b16 %v2462
      %v2495 = vunpack.c.l.b16 %v2463
      %v2496 = vunpack.c.l.b16 %v2464
      %v2497 = vunpack.c.l.b16 %v2465
      %v2498 = vunpack.c.l.b16 %v2466
      %v2499 = vpack.c.b16 %v2484, %v2483
      %v2500 = vpack.c.b16 %v2486, %v2485
      %v2501 = vpack.c.b16 %v2488, %v2487
      %v2502 = vpack.c.b16 %v2490, %v2489
      %v2503 = vpack.c.b16 %v2492, %v2491
      %v2504 = vpack.c.b16 %v2494, %v2493
      %v2505 = vpack.c.b16 %v2496, %v2495
      %v2506 = vpack.c.b16 %v2498, %v2497
      %2515 = vmatprep.subr.bf16.mxu0 0
      %2516 = vmatpush1.bf16.msra.mxu0 %v2499
      %2517 = vmatprep.subr.bf16.mxu0 0
      %2518 = vmatpush1.bf16.msra.mxu0 %v2500
      %2519 = vmatprep.subr.bf16.mxu0 0
      %2520 = vmatpush1.bf16.msra.mxu0 %v2501
      %2521 = vmatprep.subr.bf16.mxu0 0
      %2522 = vmatpush1.bf16.msra.mxu0 %v2502
      %2523 = vmatprep.subr.bf16.mxu0 0
      %2524 = vmatpush1.bf16.msra.mxu0 %v2503
      %2525 = vmatprep.subr.bf16.mxu0 0
      %2526 = vmatpush1.bf16.msra.mxu0 %v2504
      %2527 = vmatprep.subr.bf16.mxu0 0
      %2528 = vmatpush1.bf16.msra.mxu0 %v2505
      %2529 = vmatprep.subr.bf16.mxu0 0
      %2530 = vmatpush1.bf16.msra.mxu0 %v2506
      %2531 = vmatprep.subr.bf16.mxu0 0
      %2532 = vmatpush1.bf16.msra.mxu0 0
      %2533 = vmatprep.subr.bf16.mxu0 0
      %2534 = vmatpush1.bf16.msra.mxu0 0
      %2535 = vmatprep.subr.bf16.mxu0 0
      %2536 = vmatpush1.bf16.msra.mxu0 0
      %2537 = vmatprep.subr.bf16.mxu0 0
      %2538 = vmatpush1.bf16.msra.mxu0 0
      %2539 = vmatprep.subr.bf16.mxu0 0
      %2540 = vmatpush1.bf16.msra.mxu0 0
      %2541 = vmatprep.subr.bf16.mxu0 0
      %2542 = vmatpush1.bf16.msra.mxu0 0
      %2543 = vmatprep.subr.bf16.mxu0 0
      %2544 = vmatpush1.bf16.msra.mxu0 0
      %2545 = vmatprep.subr.bf16.mxu0 0
      %2546 = vmatpush1.bf16.msra.mxu0 0
      %2547 = vmatprep.mubr.bf16.mxu0 0
      %2548 = vmatmul.mubr.bf16.gmra.mrb[0].mxu0 %v2426
      %v2549 = vpop.f32.mrb[0].mxu0
      %v2550 = vadd.f32 0.0, %v2549
      %v2551 = vpop.f32.mrb[0].mxu0
      %v2552 = vpop.f32.mrb[0].mxu0
      %v2553 = vadd.f32 0.0, %v2552
      %v2554 = vpop.f32.mrb[0].mxu0
      %2555 = vmatprep.mubr.bf16.mxu0 0
      %2556 = vmatmul.mubr.bf16.gmra.mrb[0].mxu0 %v2427
      %v2557 = vpop.f32.mrb[0].mxu0
      %v2558 = vadd.f32 0.0, %v2557
      %v2559 = vpop.f32.mrb[0].mxu0
      %v2560 = vpop.f32.mrb[0].mxu0
      %v2561 = vadd.f32 0.0, %v2560
      %v2562 = vpop.f32.mrb[0].mxu0
      %2563 = vmatprep.mubr.bf16.mxu0 0
      %2564 = vmatmul.mubr.bf16.gmra.mrb[0].mxu0 %v2428
      %v2565 = vpop.f32.mrb[0].mxu0
      %v2566 = vadd.f32 0.0, %v2565
      %v2567 = vpop.f32.mrb[0].mxu0
      %v2568 = vpop.f32.mrb[0].mxu0
      %v2569 = vadd.f32 0.0, %v2568
      %v2570 = vpop.f32.mrb[0].mxu0
      %2571 = vmatprep.mubr.bf16.mxu0 0
      %2572 = vmatmul.mubr.bf16.gmra.mrb[0].mxu0 %v2429
      %v2573 = vpop.f32.mrb[0].mxu0
      %v2574 = vadd.f32 0.0, %v2573
      %v2575 = vpop.f32.mrb[0].mxu0
      %v2576 = vpop.f32.mrb[0].mxu0
      %v2577 = vadd.f32 0.0, %v2576
      %v2578 = vpop.f32.mrb[0].mxu0
      %2579 = vmatprep.mubr.bf16.mxu0 0
      %2580 = vmatmul.mubr.bf16.gmra.mrb[0].mxu0 %v2430
      %v2581 = vpop.f32.mrb[0].mxu0
      %v2582 = vadd.f32 0.0, %v2581
      %v2583 = vpop.f32.mrb[0].mxu0
      %v2584 = vpop.f32.mrb[0].mxu0
      %v2585 = vadd.f32 0.0, %v2584
      %v2586 = vpop.f32.mrb[0].mxu0
      %2587 = vmatprep.mubr.bf16.mxu0 0
      %2588 = vmatmul.mubr.bf16.gmra.mrb[0].mxu0 %v2431
      %v2589 = vpop.f32.mrb[0].mxu0
      %v2590 = vadd.f32 0.0, %v2589
      %v2591 = vpop.f32.mrb[0].mxu0
      %v2592 = vpop.f32.mrb[0].mxu0
      %v2593 = vadd.f32 0.0, %v2592
      %v2594 = vpop.f32.mrb[0].mxu0
      %2595 = vmatprep.mubr.bf16.mxu0 0
      %2596 = vmatmul.mubr.bf16.gmra.mrb[0].mxu0 %v2432
      %v2597 = vpop.f32.mrb[0].mxu0
      %v2598 = vadd.f32 0.0, %v2597
      %v2599 = vpop.f32.mrb[0].mxu0
      %v2600 = vpop.f32.mrb[0].mxu0
      %v2601 = vadd.f32 0.0, %v2600
      %v2602 = vpop.f32.mrb[0].mxu0
      %2603 = vmatprep.mubr.bf16.mxu0 0
      %2604 = vmatmul.mubr.bf16.gmra.mrb[0].mxu0 %v2433
      %v2605 = vpop.f32.mrb[0].mxu0
      %v2606 = vadd.f32 0.0, %v2605
      %v2607 = vpop.f32.mrb[0].mxu0
      %v2608 = vpop.f32.mrb[0].mxu0
      %v2609 = vadd.f32 0.0, %v2608
      %v2610 = vpop.f32.mrb[0].mxu0
      %2611 = vdwg.mxu0
      %v2612 = vadd.f32 %v2434, %v2550
      %v2613 = vadd.f32 %v2435, %v2553
      %v2614 = vadd.f32 %v2436, %v2558
      %v2615 = vadd.f32 %v2437, %v2561
      %v2616 = vadd.f32 %v2438, %v2566
      %v2617 = vadd.f32 %v2439, %v2569
      %v2618 = vadd.f32 %v2440, %v2574
      %v2619 = vadd.f32 %v2441, %v2577
      %v2620 = vadd.f32 %v2442, %v2582
      %v2621 = vadd.f32 %v2443, %v2585
      %v2622 = vadd.f32 %v2444, %v2590
      %v2623 = vadd.f32 %v2445, %v2593
      %v2624 = vadd.f32 %v2446, %v2598
      %v2625 = vadd.f32 %v2447, %v2601
      %v2626 = vadd.f32 %v2448, %v2606
      %v2627 = vadd.f32 %v2449, %v2609
      %2628 = vst [vmem:[#allocation3] sm:$0xff] %v2612
      %2629 = vst [vmem:[#allocation3 + $0x8] sm:$0xff] %v2613
      %2630 = vst [vmem:[#allocation3 + $0x10] sm:$0xff] %v2614
      %2631 = vst [vmem:[#allocation3 + $0x18] sm:$0xff] %v2615
      %2632 = vst [vmem:[#allocation3 + $0x20] sm:$0xff] %v2616
      %2633 = vst [vmem:[#allocation3 + $0x28] sm:$0xff] %v2617
      %2634 = vst [vmem:[#allocation3 + $0x30] sm:$0xff] %v2618
      %2635 = vst [vmem:[#allocation3 + $0x38] sm:$0xff] %v2619
      %2636 = vst [vmem:[#allocation3 + $0x40] sm:$0xff] %v2620
      %2637 = vst [vmem:[#allocation3 + $0x48] sm:$0xff] %v2621
      %2638 = vst [vmem:[#allocation3 + $0x50] sm:$0xff] %v2622
      %2639 = vst [vmem:[#allocation3 + $0x58] sm:$0xff] %v2623
      %2640 = vst [vmem:[#allocation3 + $0x60] sm:$0xff] %v2624
      %2641 = vst [vmem:[#allocation3 + $0x68] sm:$0xff] %v2625
      %2642 = vst [vmem:[#allocation3 + $0x70] sm:$0xff] %v2626
      %2643 = vst [vmem:[#allocation3 + $0x78] sm:$0xff] %v2627
      %s2644 = sadd.s32 %s2202, 36
      %s2645 = smul.addr %s2644, 8
      %s2646 = scalar_lea.vmem [#allocation2], %s2645
      %v2647 = vld [vmem:[%s2646] sm:$0xff]
      %v2648 = vld [vmem:[%s2646 + $0x8] sm:$0xff]
      %v2649 = vld [vmem:[%s2646 + $0x10] sm:$0xff]
      %v2650 = vld [vmem:[%s2646 + $0x18] sm:$0xff]
      %v2651 = vld [vmem:[%s2646 + $0x20] sm:$0xff]
      %v2652 = vld [vmem:[%s2646 + $0x28] sm:$0xff]
      %v2653 = vld [vmem:[%s2646 + $0x30] sm:$0xff]
      %v2654 = vld [vmem:[%s2646 + $0x38] sm:$0xff]
      %v2655 = vld [vmem:[#allocation3] sm:$0xff]
      %v2656 = vld [vmem:[#allocation3 + $0x8] sm:$0xff]
      %v2657 = vld [vmem:[#allocation3 + $0x10] sm:$0xff]
      %v2658 = vld [vmem:[#allocation3 + $0x18] sm:$0xff]
      %v2659 = vld [vmem:[#allocation3 + $0x20] sm:$0xff]
      %v2660 = vld [vmem:[#allocation3 + $0x28] sm:$0xff]
      %v2661 = vld [vmem:[#allocation3 + $0x30] sm:$0xff]
      %v2662 = vld [vmem:[#allocation3 + $0x38] sm:$0xff]
      %v2663 = vld [vmem:[#allocation3 + $0x40] sm:$0xff]
      %v2664 = vld [vmem:[#allocation3 + $0x48] sm:$0xff]
      %v2665 = vld [vmem:[#allocation3 + $0x50] sm:$0xff]
      %v2666 = vld [vmem:[#allocation3 + $0x58] sm:$0xff]
      %v2667 = vld [vmem:[#allocation3 + $0x60] sm:$0xff]
      %v2668 = vld [vmem:[#allocation3 + $0x68] sm:$0xff]
      %v2669 = vld [vmem:[#allocation3 + $0x70] sm:$0xff]
      %v2670 = vld [vmem:[#allocation3 + $0x78] sm:$0xff]
      %s2671 = scalar_lea.vmem %s3, 512
      %v2672 = vld [vmem:[%s2671] sm:$0xf]
      %v2673 = vld [vmem:[%s2671 + $0x4] sm:$0xf]
      %v2674 = vld [vmem:[%s2671 + $0x8] sm:$0xf]
      %v2675 = vld [vmem:[%s2671 + $0xc] sm:$0xf]
      %v2676 = vld [vmem:[%s2671 + $0x10] sm:$0xf]
      %v2677 = vld [vmem:[%s2671 + $0x14] sm:$0xf]
      %v2678 = vld [vmem:[%s2671 + $0x18] sm:$0xf]
      %v2679 = vld [vmem:[%s2671 + $0x1c] sm:$0xf]
      %v2680 = vld [vmem:[%s2671 + $0x20] sm:$0xf]
      %v2681 = vld [vmem:[%s2671 + $0x24] sm:$0xf]
      %v2682 = vld [vmem:[%s2671 + $0x28] sm:$0xf]
      %v2683 = vld [vmem:[%s2671 + $0x2c] sm:$0xf]
      %v2684 = vld [vmem:[%s2671 + $0x30] sm:$0xf]
      %v2685 = vld [vmem:[%s2671 + $0x34] sm:$0xf]
      %v2686 = vld [vmem:[%s2671 + $0x38] sm:$0xf]
      %v2687 = vld [vmem:[%s2671 + $0x3c] sm:$0xf]
      %v2704 = vunpack.c.l.b16 %v2672
      %v2705 = vunpack.c.l.b16 %v2673
      %v2706 = vunpack.c.l.b16 %v2674
      %v2707 = vunpack.c.l.b16 %v2675
      %v2708 = vunpack.c.l.b16 %v2676
      %v2709 = vunpack.c.l.b16 %v2677
      %v2710 = vunpack.c.l.b16 %v2678
      %v2711 = vunpack.c.l.b16 %v2679
      %v2712 = vunpack.c.l.b16 %v2680
      %v2713 = vunpack.c.l.b16 %v2681
      %v2714 = vunpack.c.l.b16 %v2682
      %v2715 = vunpack.c.l.b16 %v2683
      %v2716 = vunpack.c.l.b16 %v2684
      %v2717 = vunpack.c.l.b16 %v2685
      %v2718 = vunpack.c.l.b16 %v2686
      %v2719 = vunpack.c.l.b16 %v2687
      %v2720 = vpack.c.b16 %v2705, %v2704
      %v2721 = vpack.c.b16 %v2707, %v2706
      %v2722 = vpack.c.b16 %v2709, %v2708
      %v2723 = vpack.c.b16 %v2711, %v2710
      %v2724 = vpack.c.b16 %v2713, %v2712
      %v2725 = vpack.c.b16 %v2715, %v2714
      %v2726 = vpack.c.b16 %v2717, %v2716
      %v2727 = vpack.c.b16 %v2719, %v2718
      %2736 = vmatprep.subr.bf16.mxu0 0
      %2737 = vmatpush1.bf16.msra.mxu0 %v2720
      %2738 = vmatprep.subr.bf16.mxu0 0
      %2739 = vmatpush1.bf16.msra.mxu0 %v2721
      %2740 = vmatprep.subr.bf16.mxu0 0
      %2741 = vmatpush1.bf16.msra.mxu0 %v2722
      %2742 = vmatprep.subr.bf16.mxu0 0
      %2743 = vmatpush1.bf16.msra.mxu0 %v2723
      %2744 = vmatprep.subr.bf16.mxu0 0
      %2745 = vmatpush1.bf16.msra.mxu0 %v2724
      %2746 = vmatprep.subr.bf16.mxu0 0
      %2747 = vmatpush1.bf16.msra.mxu0 %v2725
      %2748 = vmatprep.subr.bf16.mxu0 0
      %2749 = vmatpush1.bf16.msra.mxu0 %v2726
      %2750 = vmatprep.subr.bf16.mxu0 0
      %2751 = vmatpush1.bf16.msra.mxu0 %v2727
      %2752 = vmatprep.subr.bf16.mxu0 0
      %2753 = vmatpush1.bf16.msra.mxu0 0
      %2754 = vmatprep.subr.bf16.mxu0 0
      %2755 = vmatpush1.bf16.msra.mxu0 0
      %2756 = vmatprep.subr.bf16.mxu0 0
      %2757 = vmatpush1.bf16.msra.mxu0 0
      %2758 = vmatprep.subr.bf16.mxu0 0
      %2759 = vmatpush1.bf16.msra.mxu0 0
      %2760 = vmatprep.subr.bf16.mxu0 0
      %2761 = vmatpush1.bf16.msra.mxu0 0
      %2762 = vmatprep.subr.bf16.mxu0 0
      %2763 = vmatpush1.bf16.msra.mxu0 0
      %2764 = vmatprep.subr.bf16.mxu0 0
      %2765 = vmatpush1.bf16.msra.mxu0 0
      %2766 = vmatprep.subr.bf16.mxu0 0
      %2767 = vmatpush1.bf16.msra.mxu0 0
      %2768 = vmatprep.mubr.bf16.mxu0 0
      %2769 = vmatmul.mubr.bf16.gmra.mrb[0].mxu0 %v2647
      %v2770 = vpop.f32.mrb[0].mxu0
      %v2771 = vadd.f32 0.0, %v2770
      %v2772 = vpop.f32.mrb[0].mxu0
      %v2773 = vpop.f32.mrb[0].mxu0
      %v2774 = vadd.f32 0.0, %v2773
      %v2775 = vpop.f32.mrb[0].mxu0
      %2776 = vmatprep.mubr.bf16.mxu0 0
      %2777 = vmatmul.mubr.bf16.gmra.mrb[0].mxu0 %v2648
      %v2778 = vpop.f32.mrb[0].mxu0
      %v2779 = vadd.f32 0.0, %v2778
      %v2780 = vpop.f32.mrb[0].mxu0
      %v2781 = vpop.f32.mrb[0].mxu0
      %v2782 = vadd.f32 0.0, %v2781
      %v2783 = vpop.f32.mrb[0].mxu0
      %2784 = vmatprep.mubr.bf16.mxu0 0
      %2785 = vmatmul.mubr.bf16.gmra.mrb[0].mxu0 %v2649
      %v2786 = vpop.f32.mrb[0].mxu0
      %v2787 = vadd.f32 0.0, %v2786
      %v2788 = vpop.f32.mrb[0].mxu0
      %v2789 = vpop.f32.mrb[0].mxu0
      %v2790 = vadd.f32 0.0, %v2789
      %v2791 = vpop.f32.mrb[0].mxu0
      %2792 = vmatprep.mubr.bf16.mxu0 0
      %2793 = vmatmul.mubr.bf16.gmra.mrb[0].mxu0 %v2650
      %v2794 = vpop.f32.mrb[0].mxu0
      %v2795 = vadd.f32 0.0, %v2794
      %v2796 = vpop.f32.mrb[0].mxu0
      %v2797 = vpop.f32.mrb[0].mxu0
      %v2798 = vadd.f32 0.0, %v2797
      %v2799 = vpop.f32.mrb[0].mxu0
      %2800 = vmatprep.mubr.bf16.mxu0 0
      %2801 = vmatmul.mubr.bf16.gmra.mrb[0].mxu0 %v2651
      %v2802 = vpop.f32.mrb[0].mxu0
      %v2803 = vadd.f32 0.0, %v2802
      %v2804 = vpop.f32.mrb[0].mxu0
      %v2805 = vpop.f32.mrb[0].mxu0
      %v2806 = vadd.f32 0.0, %v2805
      %v2807 = vpop.f32.mrb[0].mxu0
      %2808 = vmatprep.mubr.bf16.mxu0 0
      %2809 = vmatmul.mubr.bf16.gmra.mrb[0].mxu0 %v2652
      %v2810 = vpop.f32.mrb[0].mxu0
      %v2811 = vadd.f32 0.0, %v2810
      %v2812 = vpop.f32.mrb[0].mxu0
      %v2813 = vpop.f32.mrb[0].mxu0
      %v2814 = vadd.f32 0.0, %v2813
      %v2815 = vpop.f32.mrb[0].mxu0
      %2816 = vmatprep.mubr.bf16.mxu0 0
      %2817 = vmatmul.mubr.bf16.gmra.mrb[0].mxu0 %v2653
      %v2818 = vpop.f32.mrb[0].mxu0
      %v2819 = vadd.f32 0.0, %v2818
      %v2820 = vpop.f32.mrb[0].mxu0
      %v2821 = vpop.f32.mrb[0].mxu0
      %v2822 = vadd.f32 0.0, %v2821
      %v2823 = vpop.f32.mrb[0].mxu0
      %2824 = vmatprep.mubr.bf16.mxu0 0
      %2825 = vmatmul.mubr.bf16.gmra.mrb[0].mxu0 %v2654
      %v2826 = vpop.f32.mrb[0].mxu0
      %v2827 = vadd.f32 0.0, %v2826
      %v2828 = vpop.f32.mrb[0].mxu0
      %v2829 = vpop.f32.mrb[0].mxu0
      %v2830 = vadd.f32 0.0, %v2829
      %v2831 = vpop.f32.mrb[0].mxu0
      %2832 = vdwg.mxu0
      %v2833 = vadd.f32 %v2655, %v2771
      %v2834 = vadd.f32 %v2656, %v2774
      %v2835 = vadd.f32 %v2657, %v2779
      %v2836 = vadd.f32 %v2658, %v2782
      %v2837 = vadd.f32 %v2659, %v2787
      %v2838 = vadd.f32 %v2660, %v2790
      %v2839 = vadd.f32 %v2661, %v2795
      %v2840 = vadd.f32 %v2662, %v2798
      %v2841 = vadd.f32 %v2663, %v2803
      %v2842 = vadd.f32 %v2664, %v2806
      %v2843 = vadd.f32 %v2665, %v2811
      %v2844 = vadd.f32 %v2666, %v2814
      %v2845 = vadd.f32 %v2667, %v2819
      %v2846 = vadd.f32 %v2668, %v2822
      %v2847 = vadd.f32 %v2669, %v2827
      %v2848 = vadd.f32 %v2670, %v2830
      %2849 = vst [vmem:[#allocation3] sm:$0xff] %v2833
      %2850 = vst [vmem:[#allocation3 + $0x8] sm:$0xff] %v2834
      %2851 = vst [vmem:[#allocation3 + $0x10] sm:$0xff] %v2835
      %2852 = vst [vmem:[#allocation3 + $0x18] sm:$0xff] %v2836
      %2853 = vst [vmem:[#allocation3 + $0x20] sm:$0xff] %v2837
      %2854 = vst [vmem:[#allocation3 + $0x28] sm:$0xff] %v2838
      %2855 = vst [vmem:[#allocation3 + $0x30] sm:$0xff] %v2839
      %2856 = vst [vmem:[#allocation3 + $0x38] sm:$0xff] %v2840
      %2857 = vst [vmem:[#allocation3 + $0x40] sm:$0xff] %v2841
      %2858 = vst [vmem:[#allocation3 + $0x48] sm:$0xff] %v2842
      %2859 = vst [vmem:[#allocation3 + $0x50] sm:$0xff] %v2843
      %2860 = vst [vmem:[#allocation3 + $0x58] sm:$0xff] %v2844
      %2861 = vst [vmem:[#allocation3 + $0x60] sm:$0xff] %v2845
      %2862 = vst [vmem:[#allocation3 + $0x68] sm:$0xff] %v2846
      %2863 = vst [vmem:[#allocation3 + $0x70] sm:$0xff] %v2847
      %2864 = vst [vmem:[#allocation3 + $0x78] sm:$0xff] %v2848
      %v2865 = vld [vmem:[#allocation3] sm:$0xff]
      %v2866 = vld [vmem:[#allocation3 + $0x8] sm:$0xff]
      %v2867 = vld [vmem:[#allocation3 + $0x10] sm:$0xff]
      %v2868 = vld [vmem:[#allocation3 + $0x18] sm:$0xff]
      %v2869 = vld [vmem:[#allocation3 + $0x20] sm:$0xff]
      %v2870 = vld [vmem:[#allocation3 + $0x28] sm:$0xff]
      %v2871 = vld [vmem:[#allocation3 + $0x30] sm:$0xff]
      %v2872 = vld [vmem:[#allocation3 + $0x38] sm:$0xff]
      %v2873 = vld [vmem:[#allocation3 + $0x40] sm:$0xff]
      %v2874 = vld [vmem:[#allocation3 + $0x48] sm:$0xff]
      %v2875 = vld [vmem:[#allocation3 + $0x50] sm:$0xff]
      %v2876 = vld [vmem:[#allocation3 + $0x58] sm:$0xff]
      %v2877 = vld [vmem:[#allocation3 + $0x60] sm:$0xff]
      %v2878 = vld [vmem:[#allocation3 + $0x68] sm:$0xff]
      %v2879 = vld [vmem:[#allocation3 + $0x70] sm:$0xff]
      %v2880 = vld [vmem:[#allocation3 + $0x78] sm:$0xff]
      %v2881 = vmax.f32 %v2865, 0.0
      %v2882 = vmax.f32 %v2866, 0.0
      %v2883 = vmax.f32 %v2867, 0.0
      %v2884 = vmax.f32 %v2868, 0.0
      %v2885 = vmax.f32 %v2869, 0.0
      %v2886 = vmax.f32 %v2870, 0.0
      %v2887 = vmax.f32 %v2871, 0.0
      %v2888 = vmax.f32 %v2872, 0.0
      %v2889 = vmax.f32 %v2873, 0.0
      %v2890 = vmax.f32 %v2874, 0.0
      %v2891 = vmax.f32 %v2875, 0.0
      %v2892 = vmax.f32 %v2876, 0.0
      %v2893 = vmax.f32 %v2877, 0.0
      %v2894 = vmax.f32 %v2878, 0.0
      %v2895 = vmax.f32 %v2879, 0.0
      %v2896 = vmax.f32 %v2880, 0.0
      %v2897 = vadd.f32 %v2881, %v2882
      %v2898 = vadd.f32 %v2897, %v2883
      %v2899 = vadd.f32 %v2898, %v2884
      %v2900 = vadd.f32 %v2899, %v2885
      %v2901 = vadd.f32 %v2900, %v2886
      %v2902 = vadd.f32 %v2901, %v2887
      %v2903 = vadd.f32 %v2902, %v2888
      %v2904 = vadd.f32 %v2903, %v2889
      %v2905 = vadd.f32 %v2904, %v2890
      %v2906 = vadd.f32 %v2905, %v2891
      %v2907 = vadd.f32 %v2906, %v2892
      %v2908 = vadd.f32 %v2907, %v2893
      %v2909 = vadd.f32 %v2908, %v2894
      %v2910 = vadd.f32 %v2909, %v2895
      %v2911 = vadd.f32 %v2910, %v2896
      %v2912 = vrot.slane %v2911, 4
      %v2913 = vadd.f32 %v2911, %v2912
      %v2914 = vrot.slane %v2913, 2
      %v2915 = vadd.f32 %v2913, %v2914
      %v2916 = vrot.slane %v2915, 1
      %v2917 = vadd.f32 %v2915, %v2916
      %2918 = vst [vmem:[%s333] sm:$0x1] %v2917
      %v2919 = vmul.f32 %v2881, %v2881
      %v2920 = vmul.f32 %v2882, %v2882
      %v2921 = vmul.f32 %v2883, %v2883
      %v2922 = vmul.f32 %v2884, %v2884
      %v2923 = vmul.f32 %v2885, %v2885
      %v2924 = vmul.f32 %v2886, %v2886
      %v2925 = vmul.f32 %v2887, %v2887
      %v2926 = vmul.f32 %v2888, %v2888
      %v2927 = vmul.f32 %v2889, %v2889
      %v2928 = vmul.f32 %v2890, %v2890
      %v2929 = vmul.f32 %v2891, %v2891
      %v2930 = vmul.f32 %v2892, %v2892
      %v2931 = vmul.f32 %v2893, %v2893
      %v2932 = vmul.f32 %v2894, %v2894
      %v2933 = vmul.f32 %v2895, %v2895
      %v2934 = vmul.f32 %v2896, %v2896
      %v2935 = vadd.f32 %v2919, %v2920
      %v2936 = vadd.f32 %v2935, %v2921
      %v2937 = vadd.f32 %v2936, %v2922
      %v2938 = vadd.f32 %v2937, %v2923
      %v2939 = vadd.f32 %v2938, %v2924
      %v2940 = vadd.f32 %v2939, %v2925
      %v2941 = vadd.f32 %v2940, %v2926
      %v2942 = vadd.f32 %v2941, %v2927
      %v2943 = vadd.f32 %v2942, %v2928
      %v2944 = vadd.f32 %v2943, %v2929
      %v2945 = vadd.f32 %v2944, %v2930
      %v2946 = vadd.f32 %v2945, %v2931
      %v2947 = vadd.f32 %v2946, %v2932
      %v2948 = vadd.f32 %v2947, %v2933
      %v2949 = vadd.f32 %v2948, %v2934
      %v2950 = vrot.slane %v2949, 4
      %v2951 = vadd.f32 %v2949, %v2950
      %v2952 = vrot.slane %v2951, 2
      %v2953 = vadd.f32 %v2951, %v2952
      %v2954 = vrot.slane %v2953, 1
      %v2955 = vadd.f32 %v2953, %v2954
      %2956 = vst [vmem:[%s340] sm:$0x1] %v2955
      %vm2957 = vcmask 64512
      %2958 = vst.msk [vmem:[%s325] sm:$0xff] %vm2957, %v2881
      %2959 = vst.msk [vmem:[%s325 + $0x8] sm:$0xff] %vm2957, %v2882
      %2960 = vst.msk [vmem:[%s325 + $0x10] sm:$0xff] %vm2957, %v2883
      %2961 = vst.msk [vmem:[%s325 + $0x18] sm:$0xff] %vm2957, %v2884
      %2962 = vst.msk [vmem:[%s325 + $0x20] sm:$0xff] %vm2957, %v2885
      %2963 = vst.msk [vmem:[%s325 + $0x28] sm:$0xff] %vm2957, %v2886
      %2964 = vst.msk [vmem:[%s325 + $0x30] sm:$0xff] %vm2957, %v2887
      %2965 = vst.msk [vmem:[%s325 + $0x38] sm:$0xff] %vm2957, %v2888
      %2966 = vst.msk [vmem:[%s325 + $0x40] sm:$0xff] %vm2957, %v2889
      %2967 = vst.msk [vmem:[%s325 + $0x48] sm:$0xff] %vm2957, %v2890
      %2968 = vst.msk [vmem:[%s325 + $0x50] sm:$0xff] %vm2957, %v2891
      %2969 = vst.msk [vmem:[%s325 + $0x58] sm:$0xff] %vm2957, %v2892
      %2970 = vst.msk [vmem:[%s325 + $0x60] sm:$0xff] %vm2957, %v2893
      %2971 = vst.msk [vmem:[%s325 + $0x68] sm:$0xff] %vm2957, %v2894
      %2972 = vst.msk [vmem:[%s325 + $0x70] sm:$0xff] %vm2957, %v2895
      %2973 = vst.msk [vmem:[%s325 + $0x78] sm:$0xff] %vm2957, %v2896
      %s2974 = smul.u32 8, %s24
      %p2975 = scmp.lt.s32.totalorder %s23, 1
      %s2976 = scalar_select %p2975, %s23, 1
      %p2977 = scmp.lt.s32.totalorder %s2974, 15
      %s2978 = scalar_select %p2977, %s2974, 15
      %s2979 = smul.addr %s2978, 2
      %s2980 = smul.addr %s2976, 32
      %s2981 = sadd.s32 %s2979, %s2980
      %s2982 = smul.addr %s2981, 8
      %s2983 = scalar_lea.vmem %s5, %s2982
      %p2984 = scmp.lt.s32.totalorder %s23, 1
      %s2985 = scalar_select %p2984, %s23, 1
      %p2986 = scmp.lt.s32.totalorder %s24, 1
      %s2987 = scalar_select %p2986, %s24, 1
      %s2988 = smul.addr %s2985, 2
      %s2989 = sadd.s32 %s2987, %s2988
      %s2990 = scalar_lea.vmem %s6, %s2989
      %p2991 = scmp.lt.s32.totalorder %s23, 1
      %s2992 = scalar_select %p2991, %s23, 1
      %p2993 = scmp.lt.s32.totalorder %s24, 1
      %s2994 = scalar_select %p2993, %s24, 1
      %s2995 = smul.addr %s2992, 2
      %s2996 = sadd.s32 %s2994, %s2995
      %s2997 = scalar_lea.vmem %s7, %s2996
      // Predicated region
      $region45: #{unet_conv_block.4} parent=39 // pred_check
        %p2998 = pneg %p161
      $region46: #{unet_conv_block.4} parent=39 // pred_check_branch
        %3000 = sbr.rel (%p2998) target = $region48
      $region47: #{unet_conv_block.4} parent=39 // pred_region
        %s3001 = smul.u32 8, %s24
      $region48: #{unet_conv_block.4} parent=39 // pred_fallthru
        _
      // Predicated region
      $region49: #{unet_conv_block.4} parent=39 // pred_check
        %p3002 = pneg %p189
      $region50: #{unet_conv_block.4} parent=39 // pred_check_branch
        %3004 = sbr.rel (%p3002) target = $region52
      $region51: #{unet_conv_block.4} parent=39 // pred_region
        _
      $region52: #{unet_conv_block.4} parent=39 // pred_fallthru
        _
      // Predicated region
      $region53: #{unet_conv_block.4} parent=39 // pred_check
        %p3005 = pneg %p217
      $region54: #{unet_conv_block.4} parent=39 // pred_check_branch
        %3007 = sbr.rel (%p3005) target = $region56
      $region55: #{unet_conv_block.4} parent=39 // pred_region
        _
      $region56: #{unet_conv_block.4} parent=39 // pred_fallthru
        _
    $region40: #{unet_conv_block.4} parent=5 // pred_fallthru
      _
    %p3008 = scmp.le.s32.totalorder 2, %s14
    // Predicated region
    $region57: #{unet_conv_block.4} parent=5 // pred_check
      %p3009 = pneg %p3008
    $region58: #{unet_conv_block.4} parent=5 // pred_check_branch
      %3011 = sbr.rel (%p3009) target = $region60
    $region59: #{unet_conv_block.4} parent=5 // pred_region
      %s3012 = ssub.s32 %s14, 2
      // Predicated region
      $region61: #{unet_conv_block.4} parent=59 // pred_check
        %p3013 = pneg %p167
      $region62: #{unet_conv_block.4} parent=59 // pred_check_branch
        %3015 = sbr.rel (%p3013) target = $region64
      $region63: #{unet_conv_block.4} parent=59 // pred_region
        %s3016 = smul.u32 8, %s26
        %p3017 = scmp.lt.s32.totalorder %s25, 1
        %s3018 = scalar_select %p3017, %s25, 1
        %p3019 = scmp.lt.s32.totalorder %s3016, 15
        %s3020 = scalar_select %p3019, %s3016, 15
        %s3021 = smul.addr %s3020, 2
        %s3022 = smul.addr %s3018, 32
        %s3023 = sadd.s32 %s3021, %s3022
        %s3024 = smul.addr %s3023, 8
        %s3025 = scalar_lea.vmem %s5, %s3024
      $region64: #{unet_conv_block.4} parent=59 // pred_fallthru
        _
      // Predicated region
      $region65: #{unet_conv_block.4} parent=59 // pred_check
        %p3026 = pneg %p195
      $region66: #{unet_conv_block.4} parent=59 // pred_check_branch
        %3028 = sbr.rel (%p3026) target = $region68
      $region67: #{unet_conv_block.4} parent=59 // pred_region
        %p3029 = scmp.lt.s32.totalorder %s25, 1
        %s3030 = scalar_select %p3029, %s25, 1
        %p3031 = scmp.lt.s32.totalorder %s26, 1
        %s3032 = scalar_select %p3031, %s26, 1
        %s3033 = smul.addr %s3030, 2
        %s3034 = sadd.s32 %s3032, %s3033
        %s3035 = scalar_lea.vmem %s6, %s3034
      $region68: #{unet_conv_block.4} parent=59 // pred_fallthru
        _
      // Predicated region
      $region69: #{unet_conv_block.4} parent=59 // pred_check
        %p3036 = pneg %p223
      $region70: #{unet_conv_block.4} parent=59 // pred_check_branch
        %3038 = sbr.rel (%p3036) target = $region72
      $region71: #{unet_conv_block.4} parent=59 // pred_region
        %p3039 = scmp.lt.s32.totalorder %s25, 1
        %s3040 = scalar_select %p3039, %s25, 1
        %p3041 = scmp.lt.s32.totalorder %s26, 1
        %s3042 = scalar_select %p3041, %s26, 1
        %s3043 = smul.addr %s3040, 2
        %s3044 = sadd.s32 %s3042, %s3043
        %s3045 = scalar_lea.vmem %s7, %s3044
      $region72: #{unet_conv_block.4} parent=59 // pred_fallthru
        _
    $region60: #{unet_conv_block.4} parent=5 // pred_fallthru
      _
  $region6: #{unet_conv_block.4} parent=0 // loop_footer
    %s18 = sadd.s32 1, %s14
  $region7: #{unet_conv_block.4} parent=0 // loop_footer_branch
    %13 = sbr.rel target = $region3
  $region8: #{unet_conv_block.4} parent=0 // loop_exit
    _

</llo_original>
